<compile_context>
chip_gen: v6e
topology: v6e:2x2x1
jax: 0.10.0
libtpu: 0.0.40
codegen_flags: <defaults>
</compile_context>

<pallas_src>
import numpy as np
import jax
import jax.numpy as jnp
from jax.experimental import pallas as pl
from jax.experimental.pallas import tpu as pltpu


# ----------------------------------------------------------------------------
# Bicubic interpolation weight matrix (PyTorch a = -0.75, align_corners=False)
# ----------------------------------------------------------------------------
def _cubic_kernel(t, a=-0.75):
    t = np.abs(t)
    t2 = t * t
    t3 = t2 * t
    return np.where(
        t <= 1.0,
        (a + 2.0) * t3 - (a + 3.0) * t2 + 1.0,
        np.where(t < 2.0, a * t3 - 5.0 * a * t2 + 8.0 * a * t - 4.0 * a, 0.0),
    )


def _bicubic_matrix(out_size, in_size):
    """Dense (out_size, in_size) bicubic interpolation matrix."""
    W = np.zeros((out_size, in_size), dtype=np.float32)
    scale = in_size / out_size
    for i in range(out_size):
        s = (i + 0.5) * scale - 0.5          # source coordinate (half-pixel centers)
        base = int(np.floor(s))
        frac = s - base
        for k in range(-1, 3):               # 4-tap support
            w = _cubic_kernel(frac - k)
            j = min(max(base + k, 0), in_size - 1)   # clamp (replicate border)
            W[i, j] += w
    return W


def _resize_output_size(h, w, size):
    """torchvision Resize(int): smaller edge -> size, long edge truncated."""
    if h <= w:
        return size, int(size * w / h)
    return int(size * h / w), size


def _choose_planes_per_step(planes, max_b=8):
    """Planes per grid step: divide evenly, keep >=2 grid steps when possible
    (v7x megacore), cap B<=8 for VMEM headroom (v7x 32 MiB scoped / v5e 16 MiB)."""
    for b in range(min(max_b, planes), 0, -1):
        if planes % b == 0 and planes // b >= 2:
            return b
    return planes if planes <= max_b else 1


# ----------------------------------------------------------------------------
# Pallas kernel: per step, B planes:  o[b] = Wh @ ((x[b]*2 - 1) @ Ww^T)
# ----------------------------------------------------------------------------
def _renorm_resize_kernel(wh_ref, x_ref, wwT_ref, o_ref):
    B = x_ref.shape[0]                       # static
    wh = wh_ref[...]                         # (H_out, H_in)
    wwT = wwT_ref[...]                       # (W_in, W_out)
    for b in range(B):                       # static unroll (B is small)
        xn = x_ref[b] * 2.0 - 1.0            # renormalize on the tiny input
        # width first -> lane-dense intermediate (H_in, W_out)
        t = jnp.dot(xn, wwT, preferred_element_type=jnp.float32)
        o_ref[b] = jnp.dot(wh, t, preferred_element_type=jnp.float32).astype(o_ref.dtype)


def imagenet_renormalize(x, size=384, out_dtype=jnp.float32):
    """x: (N, C, H, W) float32.  Returns (N, C, H_out, W_out) out_dtype."""
    N, C, H, W = x.shape
    H_out, W_out = _resize_output_size(H, W, size)

    wh = jnp.asarray(_bicubic_matrix(H_out, H))             # (H_out, H)
    wwT = jnp.asarray(_bicubic_matrix(W_out, W).T)          # (W, W_out)

    planes = N * C
    B = _choose_planes_per_step(planes)
    grid = planes // B

    x_flat = x.reshape(planes, H, W)

    out_flat = pl.pallas_call(
        _renorm_resize_kernel,
        out_shape=jax.ShapeDtypeStruct((planes, H_out, W_out), out_dtype),
        grid_spec=pltpu.PrefetchScalarGridSpec(
            num_scalar_prefetch=0,
            grid=(grid,),
            in_specs=[
                pl.BlockSpec((H_out, H), lambda i: (0, 0)),       # Wh (resident)
                pl.BlockSpec((B, H, W), lambda i: (i, 0, 0)),     # B planes per step
                pl.BlockSpec((W, W_out), lambda i: (0, 0)),       # Ww^T (resident)
            ],
            out_specs=pl.BlockSpec((B, H_out, W_out), lambda i: (i, 0, 0)),
        ),
        compiler_params=pltpu.CompilerParams(
            dimension_semantics=("parallel",),
        ),
    )(wh, x_flat, wwT)

    # TODO(synk): apply `wrap` here if it were a concrete module; identity for now.
    return out_flat.reshape(N, C, H_out, W_out)


if __name__ == "__main__":
    key = jax.random.PRNGKey(0)
    N, C, H, W = 2, 4, 16, 16
    x = jax.random.uniform(key, (N, C, H, W), dtype=jnp.float32)

    out = imagenet_renormalize(x, size=384)
    out = jax.block_until_ready(out)

    # Consistency check against the same math in plain JAX (glue reference).
    wh = jnp.asarray(_bicubic_matrix(384, H))
    ww = jnp.asarray(_bicubic_matrix(384, W))
    xn = (x - 0.5) / 0.5
    ref = jnp.einsum("oh,nchw,pw->ncop", wh, xn, ww)
    assert out.shape == (N, C, 384, 384)
    assert out.dtype == jnp.float32
    assert jnp.allclose(out, ref, atol=1e-4, rtol=1e-4)

    print("KERNEL_OK")
</pallas_src>

<mosaic_0001>
module attributes {stable_mosaic.version = 11 : i64} {
  func.func @_renorm_resize_kernel(%arg0: i32, %arg1: memref<384x16xf32, #tpu.memory_space<vmem>>, %arg2: memref<4x16x16xf32, #tpu.memory_space<vmem>>, %arg3: memref<16x384xf32, #tpu.memory_space<vmem>>, %arg4: memref<4x384x384xf32, #tpu.memory_space<vmem>>) attributes {dimension_semantics = [#tpu.dimension_semantics<parallel>], iteration_bounds = array<i64: 2>, scalar_prefetch = 0 : i64, scratch_operands = 0 : i64, tpu.core_type = #tpu.core_type<tc>, window_params = [{pipeline_mode = #tpu.pipeline_mode<synchronous>, transform_indices = @transform_0, window_bounds = array<i64: 384, 16>}, {transform_indices = @transform_1, window_bounds = array<i64: 4, 16, 16>}, {pipeline_mode = #tpu.pipeline_mode<synchronous>, transform_indices = @transform_2, window_bounds = array<i64: 16, 384>}, {transform_indices = @transform_3, window_bounds = array<i64: 4, 384, 384>}]} {
    %c0 = arith.constant 0 : index
    %c0_0 = arith.constant 0 : index
    %0 = vector.load %arg1[%c0, %c0_0] : memref<384x16xf32, #tpu.memory_space<vmem>>, vector<384x16xf32>
    %c0_1 = arith.constant 0 : index
    %c0_2 = arith.constant 0 : index
    %1 = vector.load %arg3[%c0_1, %c0_2] : memref<16x384xf32, #tpu.memory_space<vmem>>, vector<16x384xf32>
    %c0_3 = arith.constant 0 : index
    %c0_4 = arith.constant 0 : index
    %c0_5 = arith.constant 0 : index
    %2 = vector.load %arg2[%c0_3, %c0_4, %c0_5] : memref<4x16x16xf32, #tpu.memory_space<vmem>>, vector<1x16x16xf32>
    %3 = vector.shape_cast %2 : vector<1x16x16xf32> to vector<16x16xf32>
    %cst = arith.constant 2.000000e+00 : f32
    %4 = vector.broadcast %cst : f32 to vector<16x16xf32>
    %5 = arith.mulf %3, %4 : vector<16x16xf32>
    %cst_6 = arith.constant 1.000000e+00 : f32
    %6 = vector.broadcast %cst_6 : f32 to vector<16x16xf32>
    %7 = arith.subf %5, %6 : vector<16x16xf32>
    %cst_7 = arith.constant dense<0.000000e+00> : vector<16x384xf32>
    %8 = tpu.matmul %7, %1, %cst_7 {dimension_numbers = #tpu.dot_dimension_numbers<[1], [0], [0], [1], [0, 0, 1, 1], [], []>} : vector<16x16xf32>, vector<16x384xf32>, vector<16x384xf32> -> vector<16x384xf32>
    %cst_8 = arith.constant dense<0.000000e+00> : vector<384x384xf32>
    %9 = tpu.matmul %0, %8, %cst_8 {dimension_numbers = #tpu.dot_dimension_numbers<[1], [0], [0], [1], [0, 0, 1, 1], [], []>} : vector<384x16xf32>, vector<16x384xf32>, vector<384x384xf32> -> vector<384x384xf32>
    %c0_9 = arith.constant 0 : index
    %c0_10 = arith.constant 0 : index
    %c0_11 = arith.constant 0 : index
    %10 = vector.load %arg4[%c0_9, %c0_10, %c0_11] : memref<4x384x384xf32, #tpu.memory_space<vmem>>, vector<1x384x384xf32>
    %11 = vector.shape_cast %10 : vector<1x384x384xf32> to vector<384x384xf32>
    %12 = vector.shape_cast %9 : vector<384x384xf32> to vector<1x384x384xf32>
    tpu.vector_store %arg4[%c0_9, %c0_10, %c0_11], %12 {strides = array<i32>} : memref<4x384x384xf32, #tpu.memory_space<vmem>>, vector<1x384x384xf32>,
    %c1 = arith.constant 1 : index
    %c0_12 = arith.constant 0 : index
    %c0_13 = arith.constant 0 : index
    %13 = vector.load %arg2[%c1, %c0_12, %c0_13] : memref<4x16x16xf32, #tpu.memory_space<vmem>>, vector<1x16x16xf32>
    %14 = vector.shape_cast %13 : vector<1x16x16xf32> to vector<16x16xf32>
    %cst_14 = arith.constant 2.000000e+00 : f32
    %15 = vector.broadcast %cst_14 : f32 to vector<16x16xf32>
    %16 = arith.mulf %14, %15 : vector<16x16xf32>
    %cst_15 = arith.constant 1.000000e+00 : f32
    %17 = vector.broadcast %cst_15 : f32 to vector<16x16xf32>
    %18 = arith.subf %16, %17 : vector<16x16xf32>
    %cst_16 = arith.constant dense<0.000000e+00> : vector<16x384xf32>
    %19 = tpu.matmul %18, %1, %cst_16 {dimension_numbers = #tpu.dot_dimension_numbers<[1], [0], [0], [1], [0, 0, 1, 1], [], []>} : vector<16x16xf32>, vector<16x384xf32>, vector<16x384xf32> -> vector<16x384xf32>
    %cst_17 = arith.constant dense<0.000000e+00> : vector<384x384xf32>
    %20 = tpu.matmul %0, %19, %cst_17 {dimension_numbers = #tpu.dot_dimension_numbers<[1], [0], [0], [1], [0, 0, 1, 1], [], []>} : vector<384x16xf32>, vector<16x384xf32>, vector<384x384xf32> -> vector<384x384xf32>
    %c1_18 = arith.constant 1 : index
    %c0_19 = arith.constant 0 : index
    %c0_20 = arith.constant 0 : index
    %21 = vector.load %arg4[%c1_18, %c0_19, %c0_20] : memref<4x384x384xf32, #tpu.memory_space<vmem>>, vector<1x384x384xf32>
    %22 = vector.shape_cast %21 : vector<1x384x384xf32> to vector<384x384xf32>
    %23 = vector.shape_cast %20 : vector<384x384xf32> to vector<1x384x384xf32>
    tpu.vector_store %arg4[%c1_18, %c0_19, %c0_20], %23 {strides = array<i32>} : memref<4x384x384xf32, #tpu.memory_space<vmem>>, vector<1x384x384xf32>,
    %c2 = arith.constant 2 : index
    %c0_21 = arith.constant 0 : index
    %c0_22 = arith.constant 0 : index
    %24 = vector.load %arg2[%c2, %c0_21, %c0_22] : memref<4x16x16xf32, #tpu.memory_space<vmem>>, vector<1x16x16xf32>
    %25 = vector.shape_cast %24 : vector<1x16x16xf32> to vector<16x16xf32>
    %cst_23 = arith.constant 2.000000e+00 : f32
    %26 = vector.broadcast %cst_23 : f32 to vector<16x16xf32>
    %27 = arith.mulf %25, %26 : vector<16x16xf32>
    %cst_24 = arith.constant 1.000000e+00 : f32
    %28 = vector.broadcast %cst_24 : f32 to vector<16x16xf32>
    %29 = arith.subf %27, %28 : vector<16x16xf32>
    %cst_25 = arith.constant dense<0.000000e+00> : vector<16x384xf32>
    %30 = tpu.matmul %29, %1, %cst_25 {dimension_numbers = #tpu.dot_dimension_numbers<[1], [0], [0], [1], [0, 0, 1, 1], [], []>} : vector<16x16xf32>, vector<16x384xf32>, vector<16x384xf32> -> vector<16x384xf32>
    %cst_26 = arith.constant dense<0.000000e+00> : vector<384x384xf32>
    %31 = tpu.matmul %0, %30, %cst_26 {dimension_numbers = #tpu.dot_dimension_numbers<[1], [0], [0], [1], [0, 0, 1, 1], [], []>} : vector<384x16xf32>, vector<16x384xf32>, vector<384x384xf32> -> vector<384x384xf32>
    %c2_27 = arith.constant 2 : index
    %c0_28 = arith.constant 0 : index
    %c0_29 = arith.constant 0 : index
    %32 = vector.load %arg4[%c2_27, %c0_28, %c0_29] : memref<4x384x384xf32, #tpu.memory_space<vmem>>, vector<1x384x384xf32>
    %33 = vector.shape_cast %32 : vector<1x384x384xf32> to vector<384x384xf32>
    %34 = vector.shape_cast %31 : vector<384x384xf32> to vector<1x384x384xf32>
    tpu.vector_store %arg4[%c2_27, %c0_28, %c0_29], %34 {strides = array<i32>} : memref<4x384x384xf32, #tpu.memory_space<vmem>>, vector<1x384x384xf32>,
    %c3 = arith.constant 3 : index
    %c0_30 = arith.constant 0 : index
    %c0_31 = arith.constant 0 : index
    %35 = vector.load %arg2[%c3, %c0_30, %c0_31] : memref<4x16x16xf32, #tpu.memory_space<vmem>>, vector<1x16x16xf32>
    %36 = vector.shape_cast %35 : vector<1x16x16xf32> to vector<16x16xf32>
    %cst_32 = arith.constant 2.000000e+00 : f32
    %37 = vector.broadcast %cst_32 : f32 to vector<16x16xf32>
    %38 = arith.mulf %36, %37 : vector<16x16xf32>
    %cst_33 = arith.constant 1.000000e+00 : f32
    %39 = vector.broadcast %cst_33 : f32 to vector<16x16xf32>
    %40 = arith.subf %38, %39 : vector<16x16xf32>
    %cst_34 = arith.constant dense<0.000000e+00> : vector<16x384xf32>
    %41 = tpu.matmul %40, %1, %cst_34 {dimension_numbers = #tpu.dot_dimension_numbers<[1], [0], [0], [1], [0, 0, 1, 1], [], []>} : vector<16x16xf32>, vector<16x384xf32>, vector<16x384xf32> -> vector<16x384xf32>
    %cst_35 = arith.constant dense<0.000000e+00> : vector<384x384xf32>
    %42 = tpu.matmul %0, %41, %cst_35 {dimension_numbers = #tpu.dot_dimension_numbers<[1], [0], [0], [1], [0, 0, 1, 1], [], []>} : vector<384x16xf32>, vector<16x384xf32>, vector<384x384xf32> -> vector<384x384xf32>
    %c3_36 = arith.constant 3 : index
    %c0_37 = arith.constant 0 : index
    %c0_38 = arith.constant 0 : index
    %43 = vector.load %arg4[%c3_36, %c0_37, %c0_38] : memref<4x384x384xf32, #tpu.memory_space<vmem>>, vector<1x384x384xf32>
    %44 = vector.shape_cast %43 : vector<1x384x384xf32> to vector<384x384xf32>
    %45 = vector.shape_cast %42 : vector<384x384xf32> to vector<1x384x384xf32>
    tpu.vector_store %arg4[%c3_36, %c0_37, %c0_38], %45 {strides = array<i32>} : memref<4x384x384xf32, #tpu.memory_space<vmem>>, vector<1x384x384xf32>,
    return
  }
  func.func @transform_0(%arg0: i32) -> (i32, i32) {
    %c0_i32 = arith.constant 0 : i32
    %c0_i32_0 = arith.constant 0 : i32
    %c0_i32_1 = arith.constant 0 : i32
    return %c0_i32, %c0_i32_0 : i32, i32
  }
  func.func @transform_1(%arg0: i32) -> (i32, i32, i32) {
    %c0_i32 = arith.constant 0 : i32
    %c0_i32_0 = arith.constant 0 : i32
    %c0_i32_1 = arith.constant 0 : i32
    return %arg0, %c0_i32, %c0_i32_0 : i32, i32, i32
  }
  func.func @transform_2(%arg0: i32) -> (i32, i32) {
    %c0_i32 = arith.constant 0 : i32
    %c0_i32_0 = arith.constant 0 : i32
    %c0_i32_1 = arith.constant 0 : i32
    return %c0_i32, %c0_i32_0 : i32, i32
  }
  func.func @transform_3(%arg0: i32) -> (i32, i32, i32) {
    %c0_i32 = arith.constant 0 : i32
    %c0_i32_0 = arith.constant 0 : i32
    %c0_i32_1 = arith.constant 0 : i32
    return %arg0, %c0_i32, %c0_i32_0 : i32, i32, i32
  }
}

</mosaic_0001>

<llo_original>
// kernel: tpu_custom_call.1
$region0: #{tpu_custom_call.1}
  #allocation0 [shape = 'u32[]', space=smem, size = 0x4, offset = 0x4, fixed_abs, tag = 'smem constant byte address 0x4 - core index']
  #allocation1 [shape = 'u32[144,128]{1,0:T(1,128)}', space=vmem, size = 0x12000, scoped, tag = 'internal scratch']
  %s0 = inlined_call_operand.vmem [shape: f32[384,16], index: 0, kind: input, shape index: {}]
  %s1 = inlined_call_operand.hbm [shape: f32[8,16,16], index: 1, kind: input, shape index: {}]
  %s2 = inlined_call_operand.hbm [shape: f32[16,384], index: 2, kind: input, shape index: {}]
  %s3 = inlined_call_operand.hbm [shape: f32[8,384,384], index: 3, kind: output, shape index: {}]
  %s4 = sld [smem:[#allocation0]]
  $region53: #{tpu_custom_call.1} parent=0
    _
  %s6 = ssub.s32 1, %s4
  %s7 = scalar_select 0, %s6, %s4
  $region1: #{tpu_custom_call.1} parent=0
    #allocation2 [shape = 'u8[65536]{0}', space=vmem, size = 0x10000, scoped, tag = 'input window, operand 1']
    #allocation3 [shape = 's32[2]{0}', space=sflag, size = 0x8, scoped, tag = 'scoped memory for tpu_custom_call.1']
    #allocation4 [shape = 's32[2]{0}', space=sflag, size = 0x8, scoped, tag = 'scoped memory for tpu_custom_call.1']
    #allocation5 [shape = 'u8[24576]{0}', space=vmem, size = 0x6000, scoped, tag = 'input window, operand 2, single buffered']
    #allocation6 [shape = 's32[1]{0}', space=sflag, size = 0x4, scoped, tag = 'scoped memory for tpu_custom_call.1']
    #allocation7 [shape = 'u8[4718592]{0}', space=vmem, size = 0x480000, scoped, tag = 'output window, operand 0']
    %8 = vsyncpa [#allocation3], 0
    %s9 = scalar_lea.sflag [#allocation3], 1
    %10 = vsyncpa %s9, 0
    %11 = vsyncpa [#allocation6], 0
    %12 = vsyncpa [#allocation4], 0
    %s13 = scalar_lea.sflag [#allocation4], 1
    %14 = vsyncpa %s13, 0
    loop: start=0, step=1, limit=4
    $region2: #{tpu_custom_call.1} parent=1 // loop_pre_header
      _
    $region3: #{tpu_custom_call.1} parent=1 // loop_header
      %s16 = sphi 0, %s20
      %p17 = scmp.ge.s32.totalorder %s16, 4
      %s24 = sphi 0, %s24
      %s26 = sphi 0, %s24
      %s27 = sphi 0, %s26
      %s41 = sphi 0, %s27
      %s47 = sphi 0, %s49
      %s50 = sphi 0, %s47
      %s51 = sphi 0, %s50
      %s67 = sphi 0, %s51
      %s71 = sphi 0, %s71
      %s73 = sphi 0, %s71
      %s74 = sphi 0, %s73
      %s88 = sphi 0, %s74
      %s94 = sphi 0, %s96
      %s97 = sphi 0, %s94
      %s98 = sphi 0, %s97
      %s114 = sphi 0, %s98
    $region4: #{tpu_custom_call.1} parent=1 // loop_header_branch
      %19 = sbr.rel (%p17) target = $region8
    $region5: #{tpu_custom_call.1} parent=1 // loop_body
      %s21 = ssub.s32 %s16, 1
      %s22 = ssub.s32 %s16, 2
      %s23 = sadd.s32 %s16, 1
      %s25 = sadd.s32 %s24, 1
      %p28 = scmp.eq.s32.totalorder %s16, 1
      %p29 = scmp.ne.s32.totalorder %s24, %s26
      %p30 = scmp.eq.s32.totalorder %s16, 0
      %p31 = por %p29, %p30
      %p32 = scmp.ne.s32.totalorder %s24, %s26
      %p33 = scmp.eq.s32.totalorder %s21, 1
      %p34 = por %p32, %p33
      %p35 = scmp.ne.s32.totalorder %s26, %s27
      %p36 = scmp.eq.s32.totalorder %s21, 0
      %p37 = por %p35, %p36
      %p38 = scmp.ne.s32.totalorder %s26, %s27
      %p39 = scmp.eq.s32.totalorder %s22, 1
      %p40 = por %p38, %p39
      %p42 = scmp.ne.s32.totalorder %s27, %s41
      %p43 = scmp.eq.s32.totalorder %s22, 0
      %p44 = por %p42, %p43
      %s45 = ssub.s32 %s16, %s23
      %p46 = scmp.eq.s32.totalorder %s45, 0
      %s48 = sadd.s32 %s47, 1
      %s49 = scalar_select %p46, %s47, %s48
      %p52 = pneg %p46
      %p53 = scmp.eq.s32.totalorder %s16, 1
      %p54 = por %p52, %p53
      %p55 = scmp.ne.s32.totalorder %s47, %s50
      %p56 = scmp.eq.s32.totalorder %s16, 0
      %p57 = por %p55, %p56
      %p58 = scmp.ne.s32.totalorder %s47, %s50
      %p59 = scmp.eq.s32.totalorder %s21, 1
      %p60 = por %p58, %p59
      %p61 = scmp.ne.s32.totalorder %s50, %s51
      %p62 = scmp.eq.s32.totalorder %s21, 0
      %p63 = por %p61, %p62
      %p64 = scmp.ne.s32.totalorder %s50, %s51
      %p65 = scmp.eq.s32.totalorder %s22, 1
      %p66 = por %p64, %p65
      %p68 = scmp.ne.s32.totalorder %s51, %s67
      %p69 = scmp.eq.s32.totalorder %s22, 0
      %p70 = por %p68, %p69
      %s72 = sadd.s32 %s71, 1
      %p75 = scmp.eq.s32.totalorder %s16, 1
      %p76 = scmp.ne.s32.totalorder %s71, %s73
      %p77 = scmp.eq.s32.totalorder %s16, 0
      %p78 = por %p76, %p77
      %p79 = scmp.ne.s32.totalorder %s71, %s73
      %p80 = scmp.eq.s32.totalorder %s21, 1
      %p81 = por %p79, %p80
      %p82 = scmp.ne.s32.totalorder %s73, %s74
      %p83 = scmp.eq.s32.totalorder %s21, 0
      %p84 = por %p82, %p83
      %p85 = scmp.ne.s32.totalorder %s73, %s74
      %p86 = scmp.eq.s32.totalorder %s22, 1
      %p87 = por %p85, %p86
      %p89 = scmp.ne.s32.totalorder %s74, %s88
      %p90 = scmp.eq.s32.totalorder %s22, 0
      %p91 = por %p89, %p90
      %s92 = ssub.s32 %s16, %s23
      %p93 = scmp.eq.s32.totalorder %s92, 0
      %s95 = sadd.s32 %s94, 1
      %s96 = scalar_select %p93, %s94, %s95
      %p99 = pneg %p93
      %p100 = scmp.eq.s32.totalorder %s16, 1
      %p101 = por %p99, %p100
      %p102 = scmp.ne.s32.totalorder %s94, %s97
      %p103 = scmp.eq.s32.totalorder %s16, 0
      %p104 = por %p102, %p103
      %p105 = scmp.ne.s32.totalorder %s94, %s97
      %p106 = scmp.eq.s32.totalorder %s21, 1
      %p107 = por %p105, %p106
      %p108 = scmp.ne.s32.totalorder %s97, %s98
      %p109 = scmp.eq.s32.totalorder %s21, 0
      %p110 = por %p108, %p109
      %p111 = scmp.ne.s32.totalorder %s97, %s98
      %p112 = scmp.eq.s32.totalorder %s22, 1
      %p113 = por %p111, %p112
      %p115 = scmp.ne.s32.totalorder %s98, %s114
      %p116 = scmp.eq.s32.totalorder %s22, 0
      %p117 = por %p115, %p116
      %p118 = scmp.le.s32.totalorder 1, %s16
      %p119 = scmp.lt.s32.totalorder %s16, 3
      %p120 = pnand %p118, %p119
      %p121 = pneg %p120
      // Predicated region
      $region9: #{tpu_custom_call.1} parent=5 // pred_check
        _
      $region10: #{tpu_custom_call.1} parent=5 // pred_check_branch
        %123 = sbr.rel (%p120) target = $region12
      $region11: #{tpu_custom_call.1} parent=5 // pred_region
        %s124 = ssub.s32 %s16, 1
        // Predicated region
        $region13: #{tpu_custom_call.1} parent=11 // pred_check
          %p125 = pneg %p37
        $region14: #{tpu_custom_call.1} parent=11 // pred_check_branch
          %127 = sbr.rel (%p125) target = $region16
        $region15: #{tpu_custom_call.1} parent=11 // pred_region
          _
        $region16: #{tpu_custom_call.1} parent=11 // pred_fallthru
          _
        // Predicated region
        $region17: #{tpu_custom_call.1} parent=11 // pred_check
          %p128 = pneg %p84
        $region18: #{tpu_custom_call.1} parent=11 // pred_check_branch
          %130 = sbr.rel (%p128) target = $region20
        $region19: #{tpu_custom_call.1} parent=11 // pred_region
          %s132 = ssub.s32 768, 768
          %133 = vsyncadd [#allocation6], %s132
          %s134 = sshll.u32 [#allocation5], 4
          %s135 = int_to_ptr.vmem [resolvable:$true] %s134
          %140 = dma.hbm_to_vmem [thread:$0]  %s2, 768, %s135, [#allocation6], 384, 384, 24
        $region20: #{tpu_custom_call.1} parent=11 // pred_fallthru
          _
      $region12: #{tpu_custom_call.1} parent=5 // pred_fallthru
        _
      %p141 = scmp.lt.s32.totalorder %s16, 2
      // Predicated region
      $region21: #{tpu_custom_call.1} parent=5 // pred_check
        %p142 = pneg %p141
      $region22: #{tpu_custom_call.1} parent=5 // pred_check_branch
        %144 = sbr.rel (%p142) target = $region24
      $region23: #{tpu_custom_call.1} parent=5 // pred_region
        // Predicated region
        $region25: #{tpu_custom_call.1} parent=23 // pred_check
          %p145 = pneg %p57
        $region26: #{tpu_custom_call.1} parent=23 // pred_check_branch
          %147 = sbr.rel (%p145) target = $region28
        $region27: #{tpu_custom_call.1} parent=23 // pred_region
          %s148 = sand.u32 %s47, 1
          %s149 = scalar_lea.sflag [#allocation3], %s148
          %s150 = sand.u32 %s47, 1
          %s151 = smul.addr %s150, 64
          %s152 = scalar_lea.vmem [#allocation2], %s151
          %s153 = smul.u32 4, %s16
          %s155 = ssub.s32 1024, 1024
          %156 = vsyncadd %s149, %s155
          %s157 = smul.addr %s153, 2
          %s158 = smul.addr %s157, 128
          %s159 = scalar_lea.hbm %s1, %s158
          %s160 = sshll.u32 %s152, 4
          %s161 = int_to_ptr.vmem [resolvable:$true] %s160
          %166 = dma.hbm_to_vmem [thread:$0]  %s159, 1024, %s161, %s149, 128, 128, 8
        $region28: #{tpu_custom_call.1} parent=23 // pred_fallthru
          _
      $region24: #{tpu_custom_call.1} parent=5 // pred_fallthru
        _
      %p167 = scmp.le.s32.totalorder 1, %s16
      %p168 = scmp.lt.s32.totalorder %s16, 3
      %p169 = pnand %p167, %p168
      %p170 = pneg %p169
      // Predicated region
      $region29: #{tpu_custom_call.1} parent=5 // pred_check
        _
      $region30: #{tpu_custom_call.1} parent=5 // pred_check_branch
        %172 = sbr.rel (%p169) target = $region32
      $region31: #{tpu_custom_call.1} parent=5 // pred_region
        %s173 = ssub.s32 %s16, 1
        %s174 = sand.u32 %s50, 1
        %s175 = scalar_lea.sflag [#allocation3], %s174
        %s176 = sand.u32 %s50, 1
        %s177 = smul.addr %s176, 64
        %s178 = scalar_lea.vmem [#allocation2], %s177
        // Predicated region
        $region33: #{tpu_custom_call.1} parent=31 // pred_check
          %p179 = pneg %p63
        $region34: #{tpu_custom_call.1} parent=31 // pred_check_branch
          %181 = sbr.rel (%p179) target = $region36
        $region35: #{tpu_custom_call.1} parent=31 // pred_region
          %182 = dma.done %s175, 1024
        $region36: #{tpu_custom_call.1} parent=31 // pred_fallthru
          _
        // Predicated region
        $region37: #{tpu_custom_call.1} parent=31 // pred_check
          %p183 = pneg %p84
        $region38: #{tpu_custom_call.1} parent=31 // pred_check_branch
          %185 = sbr.rel (%p183) target = $region40
        $region39: #{tpu_custom_call.1} parent=31 // pred_region
          %186 = dma.done [#allocation6], 768
        $region40: #{tpu_custom_call.1} parent=31 // pred_fallthru
          _
        %p187 = pneg %p37
        %p188 = pneg %p34
        %s189 = sand.u32 %s50, 1
        %s190 = scalar_lea.sflag [#allocation3], %s189
        %s191 = sand.u32 %s50, 1
        %s192 = smul.addr %s191, 64
        %s193 = scalar_lea.vmem [#allocation2], %s192
        %p194 = pneg %p63
        %p195 = pneg %p60
        %p196 = pneg %p84
        %p197 = pneg %p81
        %p198 = pneg %p110
        %p199 = pneg %p107
        %s200 = sand.u32 %s97, 1
        %s201 = scalar_lea.sflag [#allocation4], %s200
        %s202 = sand.u32 %s97, 1
        %s203 = smul.addr %s202, 4608
        %s204 = scalar_lea.vmem [#allocation7], %s203
        %s205 = smul.u32 4, %s21
        %s206 = smul.u32 4, %s21
        %v207 = vld [vmem:[%s0] sm:$0xff]
        %v208 = vld [vmem:[%s0 + $0x8] sm:$0xff]
        %v209 = vld [vmem:[%s0 + $0x10] sm:$0xff]
        %v210 = vld [vmem:[%s0 + $0x18] sm:$0xff]
        %v211 = vld [vmem:[%s0 + $0x20] sm:$0xff]
        %v212 = vld [vmem:[%s0 + $0x28] sm:$0xff]
        %v213 = vld [vmem:[%s0 + $0x30] sm:$0xff]
        %v214 = vld [vmem:[%s0 + $0x38] sm:$0xff]
        %v215 = vld [vmem:[%s0 + $0x40] sm:$0xff]
        %v216 = vld [vmem:[%s0 + $0x48] sm:$0xff]
        %v217 = vld [vmem:[%s0 + $0x50] sm:$0xff]
        %v218 = vld [vmem:[%s0 + $0x58] sm:$0xff]
        %v219 = vld [vmem:[%s0 + $0x60] sm:$0xff]
        %v220 = vld [vmem:[%s0 + $0x68] sm:$0xff]
        %v221 = vld [vmem:[%s0 + $0x70] sm:$0xff]
        %v222 = vld [vmem:[%s0 + $0x78] sm:$0xff]
        %v223 = vld [vmem:[%s0 + $0x80] sm:$0xff]
        %v224 = vld [vmem:[%s0 + $0x88] sm:$0xff]
        %v225 = vld [vmem:[%s0 + $0x90] sm:$0xff]
        %v226 = vld [vmem:[%s0 + $0x98] sm:$0xff]
        %v227 = vld [vmem:[%s0 + $0xa0] sm:$0xff]
        %v228 = vld [vmem:[%s0 + $0xa8] sm:$0xff]
        %v229 = vld [vmem:[%s0 + $0xb0] sm:$0xff]
        %v230 = vld [vmem:[%s0 + $0xb8] sm:$0xff]
        %v231 = vld [vmem:[%s0 + $0xc0] sm:$0xff]
        %v232 = vld [vmem:[%s0 + $0xc8] sm:$0xff]
        %v233 = vld [vmem:[%s0 + $0xd0] sm:$0xff]
        %v234 = vld [vmem:[%s0 + $0xd8] sm:$0xff]
        %v235 = vld [vmem:[%s0 + $0xe0] sm:$0xff]
        %v236 = vld [vmem:[%s0 + $0xe8] sm:$0xff]
        %v237 = vld [vmem:[%s0 + $0xf0] sm:$0xff]
        %v238 = vld [vmem:[%s0 + $0xf8] sm:$0xff]
        %v239 = vld [vmem:[%s0 + $0x100] sm:$0xff]
        %v240 = vld [vmem:[%s0 + $0x108] sm:$0xff]
        %v241 = vld [vmem:[%s0 + $0x110] sm:$0xff]
        %v242 = vld [vmem:[%s0 + $0x118] sm:$0xff]
        %v243 = vld [vmem:[%s0 + $0x120] sm:$0xff]
        %v244 = vld [vmem:[%s0 + $0x128] sm:$0xff]
        %v245 = vld [vmem:[%s0 + $0x130] sm:$0xff]
        %v246 = vld [vmem:[%s0 + $0x138] sm:$0xff]
        %v247 = vld [vmem:[%s0 + $0x140] sm:$0xff]
        %v248 = vld [vmem:[%s0 + $0x148] sm:$0xff]
        %v249 = vld [vmem:[%s0 + $0x150] sm:$0xff]
        %v250 = vld [vmem:[%s0 + $0x158] sm:$0xff]
        %v251 = vld [vmem:[%s0 + $0x160] sm:$0xff]
        %v252 = vld [vmem:[%s0 + $0x168] sm:$0xff]
        %v253 = vld [vmem:[%s0 + $0x170] sm:$0xff]
        %v254 = vld [vmem:[%s0 + $0x178] sm:$0xff]
        %v255 = vld [vmem:[#allocation5] sm:$0xff]
        %v256 = vld [vmem:[#allocation5 + $0x8] sm:$0xff]
        %v257 = vld [vmem:[#allocation5 + $0x10] sm:$0xff]
        %v258 = vld [vmem:[#allocation5 + $0x18] sm:$0xff]
        %v259 = vld [vmem:[#allocation5 + $0x20] sm:$0xff]
        %v260 = vld [vmem:[#allocation5 + $0x28] sm:$0xff]
        %v261 = vld [vmem:[%s178] sm:$0xff]
        %v262 = vld [vmem:[%s178 + $0x8] sm:$0xff]
        %v263 = vmul.f32 %v261, 2.0
        %v264 = vmul.f32 %v262, 2.0
        %v265 = vsub.f32 %v263, 1.0
        %v266 = vsub.f32 %v264, 1.0
        %vm267 = vcmask 130048
        %v269 = vsel %vm267, %v265, 0
        %v272 = vsel %vm267, %v266, 0
        %274 = vmatprep.subr.mxu0 0.0
        %275 = vmatpush1.msra.mxu0 0.0
        %276 = vmatprep.subr.mxu0 0.0
        %277 = vmatpush1.msra.mxu0 0.0
        %278 = vmatprep.subr.mxu0 0.0
        %279 = vmatpush1.msra.mxu0 0.0
        %280 = vmatprep.subr.mxu0 0.0
        %281 = vmatpush1.msra.mxu0 0.0
        %282 = vmatprep.subr.mxu0 0.0
        %283 = vmatpush1.msra.mxu0 0.0
        %284 = vmatprep.subr.mxu0 0.0
        %285 = vmatpush1.msra.mxu0 0.0
        %286 = vmatprep.subr.mxu0 0.0
        %287 = vmatpush1.msra.mxu0 0.0
        %288 = vmatprep.subr.mxu0 0.0
        %289 = vmatpush1.msra.mxu0 0.0
        %290 = vmatprep.subr.mxu0 0.0
        %291 = vmatpush1.msra.mxu0 0.0
        %292 = vmatprep.subr.mxu0 0.0
        %293 = vmatpush1.msra.mxu0 0.0
        %294 = vmatprep.subr.mxu0 0.0
        %295 = vmatpush1.msra.mxu0 0.0
        %296 = vmatprep.subr.mxu0 0.0
        %297 = vmatpush1.msra.mxu0 0.0
        %298 = vmatprep.subr.mxu0 0.0
        %299 = vmatpush1.msra.mxu0 0.0
        %300 = vmatprep.subr.mxu0 0.0
        %301 = vmatpush1.msra.mxu0 0.0
        %302 = vmatprep.subr.mxu0 %v259
        %303 = vmatpush1.msra.mxu0 %v258
        %304 = vmatprep.subr.mxu0 %v256
        %305 = vmatpush1.msra.mxu0 %v255
        %306 = vmatprep.subr.mxu0 0.0
        %307 = vmatpush2.msra.mxu0 0.0
        %308 = vmatprep.subr.mxu0 0.0
        %309 = vmatpush2.msra.mxu0 0.0
        %310 = vmatprep.subr.mxu0 0.0
        %311 = vmatpush2.msra.mxu0 0.0
        %312 = vmatprep.subr.mxu0 0.0
        %313 = vmatpush2.msra.mxu0 0.0
        %314 = vmatprep.subr.mxu0 0.0
        %315 = vmatpush2.msra.mxu0 0.0
        %316 = vmatprep.subr.mxu0 0.0
        %317 = vmatpush2.msra.mxu0 0.0
        %318 = vmatprep.subr.mxu0 0.0
        %319 = vmatpush2.msra.mxu0 0.0
        %320 = vmatprep.subr.mxu0 0.0
        %321 = vmatpush2.msra.mxu0 0.0
        %322 = vmatprep.subr.mxu0 0.0
        %323 = vmatpush2.msra.mxu0 0.0
        %324 = vmatprep.subr.mxu0 0.0
        %325 = vmatpush2.msra.mxu0 0.0
        %326 = vmatprep.subr.mxu0 0.0
        %327 = vmatpush2.msra.mxu0 0.0
        %328 = vmatprep.subr.mxu0 0.0
        %329 = vmatpush2.msra.mxu0 0.0
        %330 = vmatprep.subr.mxu0 0.0
        %331 = vmatpush2.msra.mxu0 0.0
        %332 = vmatprep.subr.mxu0 0.0
        %333 = vmatpush2.msra.mxu0 0.0
        %334 = vmatprep.subr.mxu0 0.0
        %335 = vmatpush2.msra.mxu0 0.0
        %336 = vmatprep.subr.mxu0 0.0
        %337 = vmatpush2.msra.mxu0 0.0
        %338 = vmatprep.mubr.f32.mxu0 0.0
        %339 = vmatmul.mubr.f32.gmra.mxu0 %v269
        %v340 = vpop.f32.mrf.mxu0
        %v341 = vadd.f32 0.0, %v340
        %v342 = vpop.f32.mrf.mxu0
        %v343 = vadd.f32 0.0, %v342
        %344 = vmatprep.mubr.f32.mxu0 0.0
        %345 = vmatmul.mubr.f32.gmra.mxu0 %v272
        %v346 = vpop.f32.mrf.mxu0
        %v347 = vadd.f32 0.0, %v346
        %v348 = vpop.f32.mrf.mxu0
        %v349 = vadd.f32 0.0, %v348
        %350 = vdwg.mxu0
        %351 = vmatprep.subr.mxu0 0.0
        %352 = vmatpush1.msra.mxu0 0.0
        %353 = vmatprep.subr.mxu0 0.0
        %354 = vmatpush1.msra.mxu0 0.0
        %355 = vmatprep.subr.mxu0 0.0
        %356 = vmatpush1.msra.mxu0 0.0
        %357 = vmatprep.subr.mxu0 0.0
        %358 = vmatpush1.msra.mxu0 0.0
        %359 = vmatprep.subr.mxu0 0.0
        %360 = vmatpush1.msra.mxu0 0.0
        %361 = vmatprep.subr.mxu0 0.0
        %362 = vmatpush1.msra.mxu0 0.0
        %363 = vmatprep.subr.mxu0 0.0
        %364 = vmatpush1.msra.mxu0 0.0
        %365 = vmatprep.subr.mxu0 0.0
        %366 = vmatpush1.msra.mxu0 0.0
        %367 = vmatprep.subr.mxu0 0.0
        %368 = vmatpush1.msra.mxu0 0.0
        %369 = vmatprep.subr.mxu0 0.0
        %370 = vmatpush1.msra.mxu0 0.0
        %371 = vmatprep.subr.mxu0 0.0
        %372 = vmatpush1.msra.mxu0 0.0
        %373 = vmatprep.subr.mxu0 0.0
        %374 = vmatpush1.msra.mxu0 0.0
        %375 = vmatprep.subr.mxu0 0.0
        %376 = vmatpush1.msra.mxu0 0.0
        %377 = vmatprep.subr.mxu0 0.0
        %378 = vmatpush1.msra.mxu0 0.0
        %379 = vmatprep.subr.mxu0 0.0
        %380 = vmatpush1.msra.mxu0 %v260
        %381 = vmatprep.subr.mxu0 0.0
        %382 = vmatpush1.msra.mxu0 %v257
        %383 = vmatprep.subr.mxu0 0.0
        %384 = vmatpush2.msra.mxu0 0.0
        %385 = vmatprep.subr.mxu0 0.0
        %386 = vmatpush2.msra.mxu0 0.0
        %387 = vmatprep.subr.mxu0 0.0
        %388 = vmatpush2.msra.mxu0 0.0
        %389 = vmatprep.subr.mxu0 0.0
        %390 = vmatpush2.msra.mxu0 0.0
        %391 = vmatprep.subr.mxu0 0.0
        %392 = vmatpush2.msra.mxu0 0.0
        %393 = vmatprep.subr.mxu0 0.0
        %394 = vmatpush2.msra.mxu0 0.0
        %395 = vmatprep.subr.mxu0 0.0
        %396 = vmatpush2.msra.mxu0 0.0
        %397 = vmatprep.subr.mxu0 0.0
        %398 = vmatpush2.msra.mxu0 0.0
        %399 = vmatprep.subr.mxu0 0.0
        %400 = vmatpush2.msra.mxu0 0.0
        %401 = vmatprep.subr.mxu0 0.0
        %402 = vmatpush2.msra.mxu0 0.0
        %403 = vmatprep.subr.mxu0 0.0
        %404 = vmatpush2.msra.mxu0 0.0
        %405 = vmatprep.subr.mxu0 0.0
        %406 = vmatpush2.msra.mxu0 0.0
        %407 = vmatprep.subr.mxu0 0.0
        %408 = vmatpush2.msra.mxu0 0.0
        %409 = vmatprep.subr.mxu0 0.0
        %410 = vmatpush2.msra.mxu0 0.0
        %411 = vmatprep.subr.mxu0 0.0
        %412 = vmatpush2.msra.mxu0 0.0
        %413 = vmatprep.subr.mxu0 0.0
        %414 = vmatpush2.msra.mxu0 0.0
        %415 = vmatprep.mubr.f32.mxu0 0.0
        %416 = vmatmul.mubr.f32.gmra.mxu0 %v269
        %v417 = vpop.f32.mrf.mxu0
        %v418 = vadd.f32 0.0, %v417
        %v419 = vpop.f32.mrf.mxu0
        %420 = vmatprep.mubr.f32.mxu0 0.0
        %421 = vmatmul.mubr.f32.gmra.mxu0 %v272
        %v422 = vpop.f32.mrf.mxu0
        %v423 = vadd.f32 0.0, %v422
        %v424 = vpop.f32.mrf.mxu0
        %425 = vdwg.mxu0
        %v427 = vsel %vm267, %v207, 0
        %v430 = vsel %vm267, %v208, 0
        %v433 = vsel %vm267, %v209, 0
        %v436 = vsel %vm267, %v210, 0
        %v439 = vsel %vm267, %v211, 0
        %v442 = vsel %vm267, %v212, 0
        %v445 = vsel %vm267, %v213, 0
        %v448 = vsel %vm267, %v214, 0
        %v451 = vsel %vm267, %v215, 0
        %v454 = vsel %vm267, %v216, 0
        %v457 = vsel %vm267, %v217, 0
        %v460 = vsel %vm267, %v218, 0
        %v463 = vsel %vm267, %v219, 0
        %v466 = vsel %vm267, %v220, 0
        %v469 = vsel %vm267, %v221, 0
        %v472 = vsel %vm267, %v222, 0
        %v475 = vsel %vm267, %v223, 0
        %v478 = vsel %vm267, %v224, 0
        %v481 = vsel %vm267, %v225, 0
        %v484 = vsel %vm267, %v226, 0
        %v487 = vsel %vm267, %v227, 0
        %v490 = vsel %vm267, %v228, 0
        %v493 = vsel %vm267, %v229, 0
        %v496 = vsel %vm267, %v230, 0
        %v499 = vsel %vm267, %v231, 0
        %v502 = vsel %vm267, %v232, 0
        %v505 = vsel %vm267, %v233, 0
        %v508 = vsel %vm267, %v234, 0
        %v511 = vsel %vm267, %v235, 0
        %v514 = vsel %vm267, %v236, 0
        %v517 = vsel %vm267, %v237, 0
        %v520 = vsel %vm267, %v238, 0
        %v523 = vsel %vm267, %v239, 0
        %v526 = vsel %vm267, %v240, 0
        %v529 = vsel %vm267, %v241, 0
        %v532 = vsel %vm267, %v242, 0
        %v535 = vsel %vm267, %v243, 0
        %v538 = vsel %vm267, %v244, 0
        %v541 = vsel %vm267, %v245, 0
        %v544 = vsel %vm267, %v246, 0
        %v547 = vsel %vm267, %v247, 0
        %v550 = vsel %vm267, %v248, 0
        %v553 = vsel %vm267, %v249, 0
        %v556 = vsel %vm267, %v250, 0
        %v559 = vsel %vm267, %v251, 0
        %v562 = vsel %vm267, %v252, 0
        %v565 = vsel %vm267, %v253, 0
        %v568 = vsel %vm267, %v254, 0
        %570 = vmatprep.subr.mxu0 0.0
        %571 = vmatpush1.msra.mxu0 0.0
        %572 = vmatprep.subr.mxu0 0.0
        %573 = vmatpush1.msra.mxu0 0.0
        %574 = vmatprep.subr.mxu0 0.0
        %575 = vmatpush1.msra.mxu0 0.0
        %576 = vmatprep.subr.mxu0 0.0
        %577 = vmatpush1.msra.mxu0 0.0
        %578 = vmatprep.subr.mxu0 0.0
        %579 = vmatpush1.msra.mxu0 0.0
        %580 = vmatprep.subr.mxu0 0.0
        %581 = vmatpush1.msra.mxu0 0.0
        %582 = vmatprep.subr.mxu0 0.0
        %583 = vmatpush1.msra.mxu0 0.0
        %584 = vmatprep.subr.mxu0 0.0
        %585 = vmatpush1.msra.mxu0 0.0
        %586 = vmatprep.subr.mxu0 0.0
        %587 = vmatpush1.msra.mxu0 0.0
        %588 = vmatprep.subr.mxu0 0.0
        %589 = vmatpush1.msra.mxu0 0.0
        %590 = vmatprep.subr.mxu0 0.0
        %591 = vmatpush1.msra.mxu0 0.0
        %592 = vmatprep.subr.mxu0 0.0
        %593 = vmatpush1.msra.mxu0 0.0
        %594 = vmatprep.subr.mxu0 0.0
        %595 = vmatpush1.msra.mxu0 0.0
        %596 = vmatprep.subr.mxu0 0.0
        %597 = vmatpush1.msra.mxu0 0.0
        %598 = vmatprep.subr.mxu0 %v349
        %599 = vmatpush1.msra.mxu0 %v347
        %600 = vmatprep.subr.mxu0 %v343
        %601 = vmatpush1.msra.mxu0 %v341
        %602 = vmatprep.subr.mxu0 0.0
        %603 = vmatpush2.msra.mxu0 0.0
        %604 = vmatprep.subr.mxu0 0.0
        %605 = vmatpush2.msra.mxu0 0.0
        %606 = vmatprep.subr.mxu0 0.0
        %607 = vmatpush2.msra.mxu0 0.0
        %608 = vmatprep.subr.mxu0 0.0
        %609 = vmatpush2.msra.mxu0 0.0
        %610 = vmatprep.subr.mxu0 0.0
        %611 = vmatpush2.msra.mxu0 0.0
        %612 = vmatprep.subr.mxu0 0.0
        %613 = vmatpush2.msra.mxu0 0.0
        %614 = vmatprep.subr.mxu0 0.0
        %615 = vmatpush2.msra.mxu0 0.0
        %616 = vmatprep.subr.mxu0 0.0
        %617 = vmatpush2.msra.mxu0 0.0
        %618 = vmatprep.subr.mxu0 0.0
        %619 = vmatpush2.msra.mxu0 0.0
        %620 = vmatprep.subr.mxu0 0.0
        %621 = vmatpush2.msra.mxu0 0.0
        %622 = vmatprep.subr.mxu0 0.0
        %623 = vmatpush2.msra.mxu0 0.0
        %624 = vmatprep.subr.mxu0 0.0
        %625 = vmatpush2.msra.mxu0 0.0
        %626 = vmatprep.subr.mxu0 0.0
        %627 = vmatpush2.msra.mxu0 0.0
        %628 = vmatprep.subr.mxu0 0.0
        %629 = vmatpush2.msra.mxu0 0.0
        %630 = vmatprep.subr.mxu0 0.0
        %631 = vmatpush2.msra.mxu0 0.0
        %632 = vmatprep.subr.mxu0 0.0
        %633 = vmatpush2.msra.mxu0 0.0
        %634 = vmatprep.mubr.f32.mxu0 0.0
        %635 = vmatmul.mubr.f32.gmra.mxu0 %v427
        %v636 = vpop.f32.mrf.mxu0
        %v637 = vadd.f32 0.0, %v636
        %v638 = vpop.f32.mrf.mxu0
        %v639 = vadd.f32 0.0, %v638
        %640 = vmatprep.mubr.f32.mxu0 0.0
        %641 = vmatmul.mubr.f32.gmra.mxu0 %v430
        %v642 = vpop.f32.mrf.mxu0
        %v643 = vadd.f32 0.0, %v642
        %v644 = vpop.f32.mrf.mxu0
        %v645 = vadd.f32 0.0, %v644
        %646 = vmatprep.mubr.f32.mxu0 0.0
        %647 = vmatmul.mubr.f32.gmra.mxu0 %v433
        %v648 = vpop.f32.mrf.mxu0
        %v649 = vadd.f32 0.0, %v648
        %v650 = vpop.f32.mrf.mxu0
        %v651 = vadd.f32 0.0, %v650
        %652 = vmatprep.mubr.f32.mxu0 0.0
        %653 = vmatmul.mubr.f32.gmra.mxu0 %v436
        %v654 = vpop.f32.mrf.mxu0
        %v655 = vadd.f32 0.0, %v654
        %v656 = vpop.f32.mrf.mxu0
        %v657 = vadd.f32 0.0, %v656
        %658 = vmatprep.mubr.f32.mxu0 0.0
        %659 = vmatmul.mubr.f32.gmra.mxu0 %v439
        %v660 = vpop.f32.mrf.mxu0
        %v661 = vadd.f32 0.0, %v660
        %v662 = vpop.f32.mrf.mxu0
        %v663 = vadd.f32 0.0, %v662
        %664 = vmatprep.mubr.f32.mxu0 0.0
        %665 = vmatmul.mubr.f32.gmra.mxu0 %v442
        %v666 = vpop.f32.mrf.mxu0
        %v667 = vadd.f32 0.0, %v666
        %v668 = vpop.f32.mrf.mxu0
        %v669 = vadd.f32 0.0, %v668
        %670 = vmatprep.mubr.f32.mxu0 0.0
        %671 = vmatmul.mubr.f32.gmra.mxu0 %v445
        %v672 = vpop.f32.mrf.mxu0
        %v673 = vadd.f32 0.0, %v672
        %v674 = vpop.f32.mrf.mxu0
        %v675 = vadd.f32 0.0, %v674
        %676 = vmatprep.mubr.f32.mxu0 0.0
        %677 = vmatmul.mubr.f32.gmra.mxu0 %v448
        %v678 = vpop.f32.mrf.mxu0
        %v679 = vadd.f32 0.0, %v678
        %v680 = vpop.f32.mrf.mxu0
        %v681 = vadd.f32 0.0, %v680
        %682 = vmatprep.mubr.f32.mxu0 0.0
        %683 = vmatmul.mubr.f32.gmra.mxu0 %v451
        %v684 = vpop.f32.mrf.mxu0
        %v685 = vadd.f32 0.0, %v684
        %v686 = vpop.f32.mrf.mxu0
        %v687 = vadd.f32 0.0, %v686
        %688 = vmatprep.mubr.f32.mxu0 0.0
        %689 = vmatmul.mubr.f32.gmra.mxu0 %v454
        %v690 = vpop.f32.mrf.mxu0
        %v691 = vadd.f32 0.0, %v690
        %v692 = vpop.f32.mrf.mxu0
        %v693 = vadd.f32 0.0, %v692
        %694 = vmatprep.mubr.f32.mxu0 0.0
        %695 = vmatmul.mubr.f32.gmra.mxu0 %v457
        %v696 = vpop.f32.mrf.mxu0
        %v697 = vadd.f32 0.0, %v696
        %v698 = vpop.f32.mrf.mxu0
        %v699 = vadd.f32 0.0, %v698
        %700 = vmatprep.mubr.f32.mxu0 0.0
        %701 = vmatmul.mubr.f32.gmra.mxu0 %v460
        %v702 = vpop.f32.mrf.mxu0
        %v703 = vadd.f32 0.0, %v702
        %v704 = vpop.f32.mrf.mxu0
        %v705 = vadd.f32 0.0, %v704
        %706 = vmatprep.mubr.f32.mxu0 0.0
        %707 = vmatmul.mubr.f32.gmra.mxu0 %v463
        %v708 = vpop.f32.mrf.mxu0
        %v709 = vadd.f32 0.0, %v708
        %v710 = vpop.f32.mrf.mxu0
        %v711 = vadd.f32 0.0, %v710
        %712 = vmatprep.mubr.f32.mxu0 0.0
        %713 = vmatmul.mubr.f32.gmra.mxu0 %v466
        %v714 = vpop.f32.mrf.mxu0
        %v715 = vadd.f32 0.0, %v714
        %v716 = vpop.f32.mrf.mxu0
        %v717 = vadd.f32 0.0, %v716
        %718 = vmatprep.mubr.f32.mxu0 0.0
        %719 = vmatmul.mubr.f32.gmra.mxu0 %v469
        %v720 = vpop.f32.mrf.mxu0
        %v721 = vadd.f32 0.0, %v720
        %v722 = vpop.f32.mrf.mxu0
        %v723 = vadd.f32 0.0, %v722
        %724 = vmatprep.mubr.f32.mxu0 0.0
        %725 = vmatmul.mubr.f32.gmra.mxu0 %v472
        %v726 = vpop.f32.mrf.mxu0
        %v727 = vadd.f32 0.0, %v726
        %v728 = vpop.f32.mrf.mxu0
        %v729 = vadd.f32 0.0, %v728
        %730 = vmatprep.mubr.f32.mxu0 0.0
        %731 = vmatmul.mubr.f32.gmra.mxu0 %v475
        %v732 = vpop.f32.mrf.mxu0
        %v733 = vadd.f32 0.0, %v732
        %v734 = vpop.f32.mrf.mxu0
        %v735 = vadd.f32 0.0, %v734
        %736 = vmatprep.mubr.f32.mxu0 0.0
        %737 = vmatmul.mubr.f32.gmra.mxu0 %v478
        %v738 = vpop.f32.mrf.mxu0
        %v739 = vadd.f32 0.0, %v738
        %v740 = vpop.f32.mrf.mxu0
        %v741 = vadd.f32 0.0, %v740
        %742 = vmatprep.mubr.f32.mxu0 0.0
        %743 = vmatmul.mubr.f32.gmra.mxu0 %v481
        %v744 = vpop.f32.mrf.mxu0
        %v745 = vadd.f32 0.0, %v744
        %v746 = vpop.f32.mrf.mxu0
        %v747 = vadd.f32 0.0, %v746
        %748 = vmatprep.mubr.f32.mxu0 0.0
        %749 = vmatmul.mubr.f32.gmra.mxu0 %v484
        %v750 = vpop.f32.mrf.mxu0
        %v751 = vadd.f32 0.0, %v750
        %v752 = vpop.f32.mrf.mxu0
        %v753 = vadd.f32 0.0, %v752
        %754 = vmatprep.mubr.f32.mxu0 0.0
        %755 = vmatmul.mubr.f32.gmra.mxu0 %v487
        %v756 = vpop.f32.mrf.mxu0
        %v757 = vadd.f32 0.0, %v756
        %v758 = vpop.f32.mrf.mxu0
        %v759 = vadd.f32 0.0, %v758
        %760 = vmatprep.mubr.f32.mxu0 0.0
        %761 = vmatmul.mubr.f32.gmra.mxu0 %v490
        %v762 = vpop.f32.mrf.mxu0
        %v763 = vadd.f32 0.0, %v762
        %v764 = vpop.f32.mrf.mxu0
        %v765 = vadd.f32 0.0, %v764
        %766 = vmatprep.mubr.f32.mxu0 0.0
        %767 = vmatmul.mubr.f32.gmra.mxu0 %v493
        %v768 = vpop.f32.mrf.mxu0
        %v769 = vadd.f32 0.0, %v768
        %v770 = vpop.f32.mrf.mxu0
        %v771 = vadd.f32 0.0, %v770
        %772 = vmatprep.mubr.f32.mxu0 0.0
        %773 = vmatmul.mubr.f32.gmra.mxu0 %v496
        %v774 = vpop.f32.mrf.mxu0
        %v775 = vadd.f32 0.0, %v774
        %v776 = vpop.f32.mrf.mxu0
        %v777 = vadd.f32 0.0, %v776
        %778 = vmatprep.mubr.f32.mxu0 0.0
        %779 = vmatmul.mubr.f32.gmra.mxu0 %v499
        %v780 = vpop.f32.mrf.mxu0
        %v781 = vadd.f32 0.0, %v780
        %v782 = vpop.f32.mrf.mxu0
        %v783 = vadd.f32 0.0, %v782
        %784 = vmatprep.mubr.f32.mxu0 0.0
        %785 = vmatmul.mubr.f32.gmra.mxu0 %v502
        %v786 = vpop.f32.mrf.mxu0
        %v787 = vadd.f32 0.0, %v786
        %v788 = vpop.f32.mrf.mxu0
        %v789 = vadd.f32 0.0, %v788
        %790 = vmatprep.mubr.f32.mxu0 0.0
        %791 = vmatmul.mubr.f32.gmra.mxu0 %v505
        %v792 = vpop.f32.mrf.mxu0
        %v793 = vadd.f32 0.0, %v792
        %v794 = vpop.f32.mrf.mxu0
        %v795 = vadd.f32 0.0, %v794
        %796 = vmatprep.mubr.f32.mxu0 0.0
        %797 = vmatmul.mubr.f32.gmra.mxu0 %v508
        %v798 = vpop.f32.mrf.mxu0
        %v799 = vadd.f32 0.0, %v798
        %v800 = vpop.f32.mrf.mxu0
        %v801 = vadd.f32 0.0, %v800
        %802 = vmatprep.mubr.f32.mxu0 0.0
        %803 = vmatmul.mubr.f32.gmra.mxu0 %v511
        %v804 = vpop.f32.mrf.mxu0
        %v805 = vadd.f32 0.0, %v804
        %v806 = vpop.f32.mrf.mxu0
        %v807 = vadd.f32 0.0, %v806
        %808 = vmatprep.mubr.f32.mxu0 0.0
        %809 = vmatmul.mubr.f32.gmra.mxu0 %v514
        %v810 = vpop.f32.mrf.mxu0
        %v811 = vadd.f32 0.0, %v810
        %v812 = vpop.f32.mrf.mxu0
        %v813 = vadd.f32 0.0, %v812
        %814 = vmatprep.mubr.f32.mxu0 0.0
        %815 = vmatmul.mubr.f32.gmra.mxu0 %v517
        %v816 = vpop.f32.mrf.mxu0
        %v817 = vadd.f32 0.0, %v816
        %v818 = vpop.f32.mrf.mxu0
        %v819 = vadd.f32 0.0, %v818
        %820 = vmatprep.mubr.f32.mxu0 0.0
        %821 = vmatmul.mubr.f32.gmra.mxu0 %v520
        %v822 = vpop.f32.mrf.mxu0
        %v823 = vadd.f32 0.0, %v822
        %v824 = vpop.f32.mrf.mxu0
        %v825 = vadd.f32 0.0, %v824
        %826 = vmatprep.mubr.f32.mxu0 0.0
        %827 = vmatmul.mubr.f32.gmra.mxu0 %v523
        %v828 = vpop.f32.mrf.mxu0
        %v829 = vadd.f32 0.0, %v828
        %v830 = vpop.f32.mrf.mxu0
        %v831 = vadd.f32 0.0, %v830
        %832 = vmatprep.mubr.f32.mxu0 0.0
        %833 = vmatmul.mubr.f32.gmra.mxu0 %v526
        %v834 = vpop.f32.mrf.mxu0
        %v835 = vadd.f32 0.0, %v834
        %v836 = vpop.f32.mrf.mxu0
        %v837 = vadd.f32 0.0, %v836
        %838 = vmatprep.mubr.f32.mxu0 0.0
        %839 = vmatmul.mubr.f32.gmra.mxu0 %v529
        %v840 = vpop.f32.mrf.mxu0
        %v841 = vadd.f32 0.0, %v840
        %v842 = vpop.f32.mrf.mxu0
        %v843 = vadd.f32 0.0, %v842
        %844 = vmatprep.mubr.f32.mxu0 0.0
        %845 = vmatmul.mubr.f32.gmra.mxu0 %v532
        %v846 = vpop.f32.mrf.mxu0
        %v847 = vadd.f32 0.0, %v846
        %v848 = vpop.f32.mrf.mxu0
        %v849 = vadd.f32 0.0, %v848
        %850 = vmatprep.mubr.f32.mxu0 0.0
        %851 = vmatmul.mubr.f32.gmra.mxu0 %v535
        %v852 = vpop.f32.mrf.mxu0
        %v853 = vadd.f32 0.0, %v852
        %v854 = vpop.f32.mrf.mxu0
        %v855 = vadd.f32 0.0, %v854
        %856 = vmatprep.mubr.f32.mxu0 0.0
        %857 = vmatmul.mubr.f32.gmra.mxu0 %v538
        %v858 = vpop.f32.mrf.mxu0
        %v859 = vadd.f32 0.0, %v858
        %v860 = vpop.f32.mrf.mxu0
        %v861 = vadd.f32 0.0, %v860
        %862 = vmatprep.mubr.f32.mxu0 0.0
        %863 = vmatmul.mubr.f32.gmra.mxu0 %v541
        %v864 = vpop.f32.mrf.mxu0
        %v865 = vadd.f32 0.0, %v864
        %v866 = vpop.f32.mrf.mxu0
        %v867 = vadd.f32 0.0, %v866
        %868 = vmatprep.mubr.f32.mxu0 0.0
        %869 = vmatmul.mubr.f32.gmra.mxu0 %v544
        %v870 = vpop.f32.mrf.mxu0
        %v871 = vadd.f32 0.0, %v870
        %v872 = vpop.f32.mrf.mxu0
        %v873 = vadd.f32 0.0, %v872
        %874 = vmatprep.mubr.f32.mxu0 0.0
        %875 = vmatmul.mubr.f32.gmra.mxu0 %v547
        %v876 = vpop.f32.mrf.mxu0
        %v877 = vadd.f32 0.0, %v876
        %v878 = vpop.f32.mrf.mxu0
        %v879 = vadd.f32 0.0, %v878
        %880 = vmatprep.mubr.f32.mxu0 0.0
        %881 = vmatmul.mubr.f32.gmra.mxu0 %v550
        %v882 = vpop.f32.mrf.mxu0
        %v883 = vadd.f32 0.0, %v882
        %v884 = vpop.f32.mrf.mxu0
        %v885 = vadd.f32 0.0, %v884
        %886 = vmatprep.mubr.f32.mxu0 0.0
        %887 = vmatmul.mubr.f32.gmra.mxu0 %v553
        %v888 = vpop.f32.mrf.mxu0
        %v889 = vadd.f32 0.0, %v888
        %v890 = vpop.f32.mrf.mxu0
        %v891 = vadd.f32 0.0, %v890
        %892 = vmatprep.mubr.f32.mxu0 0.0
        %893 = vmatmul.mubr.f32.gmra.mxu0 %v556
        %v894 = vpop.f32.mrf.mxu0
        %v895 = vadd.f32 0.0, %v894
        %v896 = vpop.f32.mrf.mxu0
        %v897 = vadd.f32 0.0, %v896
        %898 = vmatprep.mubr.f32.mxu0 0.0
        %899 = vmatmul.mubr.f32.gmra.mxu0 %v559
        %v900 = vpop.f32.mrf.mxu0
        %v901 = vadd.f32 0.0, %v900
        %v902 = vpop.f32.mrf.mxu0
        %v903 = vadd.f32 0.0, %v902
        %904 = vmatprep.mubr.f32.mxu0 0.0
        %905 = vmatmul.mubr.f32.gmra.mxu0 %v562
        %v906 = vpop.f32.mrf.mxu0
        %v907 = vadd.f32 0.0, %v906
        %v908 = vpop.f32.mrf.mxu0
        %v909 = vadd.f32 0.0, %v908
        %910 = vmatprep.mubr.f32.mxu0 0.0
        %911 = vmatmul.mubr.f32.gmra.mxu0 %v565
        %v912 = vpop.f32.mrf.mxu0
        %v913 = vadd.f32 0.0, %v912
        %v914 = vpop.f32.mrf.mxu0
        %v915 = vadd.f32 0.0, %v914
        %916 = vmatprep.mubr.f32.mxu0 0.0
        %917 = vmatmul.mubr.f32.gmra.mxu0 %v568
        %v918 = vpop.f32.mrf.mxu0
        %v919 = vadd.f32 0.0, %v918
        %v920 = vpop.f32.mrf.mxu0
        %v921 = vadd.f32 0.0, %v920
        %922 = vdwg.mxu0
        %923 = vmatprep.subr.mxu0 0.0
        %924 = vmatpush1.msra.mxu0 0.0
        %925 = vmatprep.subr.mxu0 0.0
        %926 = vmatpush1.msra.mxu0 0.0
        %927 = vmatprep.subr.mxu0 0.0
        %928 = vmatpush1.msra.mxu0 0.0
        %929 = vmatprep.subr.mxu0 0.0
        %930 = vmatpush1.msra.mxu0 0.0
        %931 = vmatprep.subr.mxu0 0.0
        %932 = vmatpush1.msra.mxu0 0.0
        %933 = vmatprep.subr.mxu0 0.0
        %934 = vmatpush1.msra.mxu0 0.0
        %935 = vmatprep.subr.mxu0 0.0
        %936 = vmatpush1.msra.mxu0 0.0
        %937 = vmatprep.subr.mxu0 0.0
        %938 = vmatpush1.msra.mxu0 0.0
        %939 = vmatprep.subr.mxu0 0.0
        %940 = vmatpush1.msra.mxu0 0.0
        %941 = vmatprep.subr.mxu0 0.0
        %942 = vmatpush1.msra.mxu0 0.0
        %943 = vmatprep.subr.mxu0 0.0
        %944 = vmatpush1.msra.mxu0 0.0
        %945 = vmatprep.subr.mxu0 0.0
        %946 = vmatpush1.msra.mxu0 0.0
        %947 = vmatprep.subr.mxu0 0.0
        %948 = vmatpush1.msra.mxu0 0.0
        %949 = vmatprep.subr.mxu0 0.0
        %950 = vmatpush1.msra.mxu0 0.0
        %951 = vmatprep.subr.mxu0 0.0
        %952 = vmatpush1.msra.mxu0 %v423
        %953 = vmatprep.subr.mxu0 0.0
        %954 = vmatpush1.msra.mxu0 %v418
        %955 = vmatprep.subr.mxu0 0.0
        %956 = vmatpush2.msra.mxu0 0.0
        %957 = vmatprep.subr.mxu0 0.0
        %958 = vmatpush2.msra.mxu0 0.0
        %959 = vmatprep.subr.mxu0 0.0
        %960 = vmatpush2.msra.mxu0 0.0
        %961 = vmatprep.subr.mxu0 0.0
        %962 = vmatpush2.msra.mxu0 0.0
        %963 = vmatprep.subr.mxu0 0.0
        %964 = vmatpush2.msra.mxu0 0.0
        %965 = vmatprep.subr.mxu0 0.0
        %966 = vmatpush2.msra.mxu0 0.0
        %967 = vmatprep.subr.mxu0 0.0
        %968 = vmatpush2.msra.mxu0 0.0
        %969 = vmatprep.subr.mxu0 0.0
        %970 = vmatpush2.msra.mxu0 0.0
        %971 = vmatprep.subr.mxu0 0.0
        %972 = vmatpush2.msra.mxu0 0.0
        %973 = vmatprep.subr.mxu0 0.0
        %974 = vmatpush2.msra.mxu0 0.0
        %975 = vmatprep.subr.mxu0 0.0
        %976 = vmatpush2.msra.mxu0 0.0
        %977 = vmatprep.subr.mxu0 0.0
        %978 = vmatpush2.msra.mxu0 0.0
        %979 = vmatprep.subr.mxu0 0.0
        %980 = vmatpush2.msra.mxu0 0.0
        %981 = vmatprep.subr.mxu0 0.0
        %982 = vmatpush2.msra.mxu0 0.0
        %983 = vmatprep.subr.mxu0 0.0
        %984 = vmatpush2.msra.mxu0 0.0
        %985 = vmatprep.subr.mxu0 0.0
        %986 = vmatpush2.msra.mxu0 0.0
        %987 = vmatprep.mubr.f32.mxu0 0.0
        %988 = vmatmul.mubr.f32.gmra.mxu0 %v427
        %v989 = vpop.f32.mrf.mxu0
        %v990 = vadd.f32 0.0, %v989
        %v991 = vpop.f32.mrf.mxu0
        %992 = vmatprep.mubr.f32.mxu0 0.0
        %993 = vmatmul.mubr.f32.gmra.mxu0 %v430
        %v994 = vpop.f32.mrf.mxu0
        %v995 = vadd.f32 0.0, %v994
        %v996 = vpop.f32.mrf.mxu0
        %997 = vmatprep.mubr.f32.mxu0 0.0
        %998 = vmatmul.mubr.f32.gmra.mxu0 %v433
        %v999 = vpop.f32.mrf.mxu0
        %v1000 = vadd.f32 0.0, %v999
        %v1001 = vpop.f32.mrf.mxu0
        %1002 = vmatprep.mubr.f32.mxu0 0.0
        %1003 = vmatmul.mubr.f32.gmra.mxu0 %v436
        %v1004 = vpop.f32.mrf.mxu0
        %v1005 = vadd.f32 0.0, %v1004
        %v1006 = vpop.f32.mrf.mxu0
        %1007 = vmatprep.mubr.f32.mxu0 0.0
        %1008 = vmatmul.mubr.f32.gmra.mxu0 %v439
        %v1009 = vpop.f32.mrf.mxu0
        %v1010 = vadd.f32 0.0, %v1009
        %v1011 = vpop.f32.mrf.mxu0
        %1012 = vmatprep.mubr.f32.mxu0 0.0
        %1013 = vmatmul.mubr.f32.gmra.mxu0 %v442
        %v1014 = vpop.f32.mrf.mxu0
        %v1015 = vadd.f32 0.0, %v1014
        %v1016 = vpop.f32.mrf.mxu0
        %1017 = vmatprep.mubr.f32.mxu0 0.0
        %1018 = vmatmul.mubr.f32.gmra.mxu0 %v445
        %v1019 = vpop.f32.mrf.mxu0
        %v1020 = vadd.f32 0.0, %v1019
        %v1021 = vpop.f32.mrf.mxu0
        %1022 = vmatprep.mubr.f32.mxu0 0.0
        %1023 = vmatmul.mubr.f32.gmra.mxu0 %v448
        %v1024 = vpop.f32.mrf.mxu0
        %v1025 = vadd.f32 0.0, %v1024
        %v1026 = vpop.f32.mrf.mxu0
        %1027 = vmatprep.mubr.f32.mxu0 0.0
        %1028 = vmatmul.mubr.f32.gmra.mxu0 %v451
        %v1029 = vpop.f32.mrf.mxu0
        %v1030 = vadd.f32 0.0, %v1029
        %v1031 = vpop.f32.mrf.mxu0
        %1032 = vmatprep.mubr.f32.mxu0 0.0
        %1033 = vmatmul.mubr.f32.gmra.mxu0 %v454
        %v1034 = vpop.f32.mrf.mxu0
        %v1035 = vadd.f32 0.0, %v1034
        %v1036 = vpop.f32.mrf.mxu0
        %1037 = vmatprep.mubr.f32.mxu0 0.0
        %1038 = vmatmul.mubr.f32.gmra.mxu0 %v457
        %v1039 = vpop.f32.mrf.mxu0
        %v1040 = vadd.f32 0.0, %v1039
        %v1041 = vpop.f32.mrf.mxu0
        %1042 = vmatprep.mubr.f32.mxu0 0.0
        %1043 = vmatmul.mubr.f32.gmra.mxu0 %v460
        %v1044 = vpop.f32.mrf.mxu0
        %v1045 = vadd.f32 0.0, %v1044
        %v1046 = vpop.f32.mrf.mxu0
        %1047 = vmatprep.mubr.f32.mxu0 0.0
        %1048 = vmatmul.mubr.f32.gmra.mxu0 %v463
        %v1049 = vpop.f32.mrf.mxu0
        %v1050 = vadd.f32 0.0, %v1049
        %v1051 = vpop.f32.mrf.mxu0
        %1052 = vmatprep.mubr.f32.mxu0 0.0
        %1053 = vmatmul.mubr.f32.gmra.mxu0 %v466
        %v1054 = vpop.f32.mrf.mxu0
        %v1055 = vadd.f32 0.0, %v1054
        %v1056 = vpop.f32.mrf.mxu0
        %1057 = vmatprep.mubr.f32.mxu0 0.0
        %1058 = vmatmul.mubr.f32.gmra.mxu0 %v469
        %v1059 = vpop.f32.mrf.mxu0
        %v1060 = vadd.f32 0.0, %v1059
        %v1061 = vpop.f32.mrf.mxu0
        %1062 = vmatprep.mubr.f32.mxu0 0.0
        %1063 = vmatmul.mubr.f32.gmra.mxu0 %v472
        %v1064 = vpop.f32.mrf.mxu0
        %v1065 = vadd.f32 0.0, %v1064
        %v1066 = vpop.f32.mrf.mxu0
        %1067 = vmatprep.mubr.f32.mxu0 0.0
        %1068 = vmatmul.mubr.f32.gmra.mxu0 %v475
        %v1069 = vpop.f32.mrf.mxu0
        %v1070 = vadd.f32 0.0, %v1069
        %v1071 = vpop.f32.mrf.mxu0
        %1072 = vmatprep.mubr.f32.mxu0 0.0
        %1073 = vmatmul.mubr.f32.gmra.mxu0 %v478
        %v1074 = vpop.f32.mrf.mxu0
        %v1075 = vadd.f32 0.0, %v1074
        %v1076 = vpop.f32.mrf.mxu0
        %1077 = vmatprep.mubr.f32.mxu0 0.0
        %1078 = vmatmul.mubr.f32.gmra.mxu0 %v481
        %v1079 = vpop.f32.mrf.mxu0
        %v1080 = vadd.f32 0.0, %v1079
        %v1081 = vpop.f32.mrf.mxu0
        %1082 = vmatprep.mubr.f32.mxu0 0.0
        %1083 = vmatmul.mubr.f32.gmra.mxu0 %v484
        %v1084 = vpop.f32.mrf.mxu0
        %v1085 = vadd.f32 0.0, %v1084
        %v1086 = vpop.f32.mrf.mxu0
        %1087 = vmatprep.mubr.f32.mxu0 0.0
        %1088 = vmatmul.mubr.f32.gmra.mxu0 %v487
        %v1089 = vpop.f32.mrf.mxu0
        %v1090 = vadd.f32 0.0, %v1089
        %v1091 = vpop.f32.mrf.mxu0
        %1092 = vmatprep.mubr.f32.mxu0 0.0
        %1093 = vmatmul.mubr.f32.gmra.mxu0 %v490
        %v1094 = vpop.f32.mrf.mxu0
        %v1095 = vadd.f32 0.0, %v1094
        %v1096 = vpop.f32.mrf.mxu0
        %1097 = vmatprep.mubr.f32.mxu0 0.0
        %1098 = vmatmul.mubr.f32.gmra.mxu0 %v493
        %v1099 = vpop.f32.mrf.mxu0
        %v1100 = vadd.f32 0.0, %v1099
        %v1101 = vpop.f32.mrf.mxu0
        %1102 = vmatprep.mubr.f32.mxu0 0.0
        %1103 = vmatmul.mubr.f32.gmra.mxu0 %v496
        %v1104 = vpop.f32.mrf.mxu0
        %v1105 = vadd.f32 0.0, %v1104
        %v1106 = vpop.f32.mrf.mxu0
        %1107 = vmatprep.mubr.f32.mxu0 0.0
        %1108 = vmatmul.mubr.f32.gmra.mxu0 %v499
        %v1109 = vpop.f32.mrf.mxu0
        %v1110 = vadd.f32 0.0, %v1109
        %v1111 = vpop.f32.mrf.mxu0
        %1112 = vmatprep.mubr.f32.mxu0 0.0
        %1113 = vmatmul.mubr.f32.gmra.mxu0 %v502
        %v1114 = vpop.f32.mrf.mxu0
        %v1115 = vadd.f32 0.0, %v1114
        %v1116 = vpop.f32.mrf.mxu0
        %1117 = vmatprep.mubr.f32.mxu0 0.0
        %1118 = vmatmul.mubr.f32.gmra.mxu0 %v505
        %v1119 = vpop.f32.mrf.mxu0
        %v1120 = vadd.f32 0.0, %v1119
        %v1121 = vpop.f32.mrf.mxu0
        %1122 = vmatprep.mubr.f32.mxu0 0.0
        %1123 = vmatmul.mubr.f32.gmra.mxu0 %v508
        %v1124 = vpop.f32.mrf.mxu0
        %v1125 = vadd.f32 0.0, %v1124
        %v1126 = vpop.f32.mrf.mxu0
        %1127 = vmatprep.mubr.f32.mxu0 0.0
        %1128 = vmatmul.mubr.f32.gmra.mxu0 %v511
        %v1129 = vpop.f32.mrf.mxu0
        %v1130 = vadd.f32 0.0, %v1129
        %v1131 = vpop.f32.mrf.mxu0
        %1132 = vmatprep.mubr.f32.mxu0 0.0
        %1133 = vmatmul.mubr.f32.gmra.mxu0 %v514
        %v1134 = vpop.f32.mrf.mxu0
        %v1135 = vadd.f32 0.0, %v1134
        %v1136 = vpop.f32.mrf.mxu0
        %1137 = vmatprep.mubr.f32.mxu0 0.0
        %1138 = vmatmul.mubr.f32.gmra.mxu0 %v517
        %v1139 = vpop.f32.mrf.mxu0
        %v1140 = vadd.f32 0.0, %v1139
        %v1141 = vpop.f32.mrf.mxu0
        %1142 = vmatprep.mubr.f32.mxu0 0.0
        %1143 = vmatmul.mubr.f32.gmra.mxu0 %v520
        %v1144 = vpop.f32.mrf.mxu0
        %v1145 = vadd.f32 0.0, %v1144
        %v1146 = vpop.f32.mrf.mxu0
        %1147 = vmatprep.mubr.f32.mxu0 0.0
        %1148 = vmatmul.mubr.f32.gmra.mxu0 %v523
        %v1149 = vpop.f32.mrf.mxu0
        %v1150 = vadd.f32 0.0, %v1149
        %v1151 = vpop.f32.mrf.mxu0
        %1152 = vmatprep.mubr.f32.mxu0 0.0
        %1153 = vmatmul.mubr.f32.gmra.mxu0 %v526
        %v1154 = vpop.f32.mrf.mxu0
        %v1155 = vadd.f32 0.0, %v1154
        %v1156 = vpop.f32.mrf.mxu0
        %1157 = vmatprep.mubr.f32.mxu0 0.0
        %1158 = vmatmul.mubr.f32.gmra.mxu0 %v529
        %v1159 = vpop.f32.mrf.mxu0
        %v1160 = vadd.f32 0.0, %v1159
        %v1161 = vpop.f32.mrf.mxu0
        %1162 = vmatprep.mubr.f32.mxu0 0.0
        %1163 = vmatmul.mubr.f32.gmra.mxu0 %v532
        %v1164 = vpop.f32.mrf.mxu0
        %v1165 = vadd.f32 0.0, %v1164
        %v1166 = vpop.f32.mrf.mxu0
        %1167 = vmatprep.mubr.f32.mxu0 0.0
        %1168 = vmatmul.mubr.f32.gmra.mxu0 %v535
        %v1169 = vpop.f32.mrf.mxu0
        %v1170 = vadd.f32 0.0, %v1169
        %v1171 = vpop.f32.mrf.mxu0
        %1172 = vmatprep.mubr.f32.mxu0 0.0
        %1173 = vmatmul.mubr.f32.gmra.mxu0 %v538
        %v1174 = vpop.f32.mrf.mxu0
        %v1175 = vadd.f32 0.0, %v1174
        %v1176 = vpop.f32.mrf.mxu0
        %1177 = vmatprep.mubr.f32.mxu0 0.0
        %1178 = vmatmul.mubr.f32.gmra.mxu0 %v541
        %v1179 = vpop.f32.mrf.mxu0
        %v1180 = vadd.f32 0.0, %v1179
        %v1181 = vpop.f32.mrf.mxu0
        %1182 = vmatprep.mubr.f32.mxu0 0.0
        %1183 = vmatmul.mubr.f32.gmra.mxu0 %v544
        %v1184 = vpop.f32.mrf.mxu0
        %v1185 = vadd.f32 0.0, %v1184
        %v1186 = vpop.f32.mrf.mxu0
        %1187 = vmatprep.mubr.f32.mxu0 0.0
        %1188 = vmatmul.mubr.f32.gmra.mxu0 %v547
        %v1189 = vpop.f32.mrf.mxu0
        %v1190 = vadd.f32 0.0, %v1189
        %v1191 = vpop.f32.mrf.mxu0
        %1192 = vmatprep.mubr.f32.mxu0 0.0
        %1193 = vmatmul.mubr.f32.gmra.mxu0 %v550
        %v1194 = vpop.f32.mrf.mxu0
        %v1195 = vadd.f32 0.0, %v1194
        %v1196 = vpop.f32.mrf.mxu0
        %1197 = vmatprep.mubr.f32.mxu0 0.0
        %1198 = vmatmul.mubr.f32.gmra.mxu0 %v553
        %v1199 = vpop.f32.mrf.mxu0
        %v1200 = vadd.f32 0.0, %v1199
        %v1201 = vpop.f32.mrf.mxu0
        %1202 = vmatprep.mubr.f32.mxu0 0.0
        %1203 = vmatmul.mubr.f32.gmra.mxu0 %v556
        %v1204 = vpop.f32.mrf.mxu0
        %v1205 = vadd.f32 0.0, %v1204
        %v1206 = vpop.f32.mrf.mxu0
        %1207 = vmatprep.mubr.f32.mxu0 0.0
        %1208 = vmatmul.mubr.f32.gmra.mxu0 %v559
        %v1209 = vpop.f32.mrf.mxu0
        %v1210 = vadd.f32 0.0, %v1209
        %v1211 = vpop.f32.mrf.mxu0
        %1212 = vmatprep.mubr.f32.mxu0 0.0
        %1213 = vmatmul.mubr.f32.gmra.mxu0 %v562
        %v1214 = vpop.f32.mrf.mxu0
        %v1215 = vadd.f32 0.0, %v1214
        %v1216 = vpop.f32.mrf.mxu0
        %1217 = vmatprep.mubr.f32.mxu0 0.0
        %1218 = vmatmul.mubr.f32.gmra.mxu0 %v565
        %v1219 = vpop.f32.mrf.mxu0
        %v1220 = vadd.f32 0.0, %v1219
        %v1221 = vpop.f32.mrf.mxu0
        %1222 = vmatprep.mubr.f32.mxu0 0.0
        %1223 = vmatmul.mubr.f32.gmra.mxu0 %v568
        %v1224 = vpop.f32.mrf.mxu0
        %v1225 = vadd.f32 0.0, %v1224
        %v1226 = vpop.f32.mrf.mxu0
        %1227 = vdwg.mxu0
        %1228 = vst [vmem:[%s204] sm:$0xff] %v637
        %1229 = vst [vmem:[%s204 + $0x8] sm:$0xff] %v639
        %1230 = vst [vmem:[%s204 + $0x10] sm:$0xff] %v990
        %1231 = vst [vmem:[%s204 + $0x18] sm:$0xff] %v643
        %1232 = vst [vmem:[%s204 + $0x20] sm:$0xff] %v645
        %1233 = vst [vmem:[%s204 + $0x28] sm:$0xff] %v995
        %1234 = vst [vmem:[%s204 + $0x30] sm:$0xff] %v649
        %1235 = vst [vmem:[%s204 + $0x38] sm:$0xff] %v651
        %1236 = vst [vmem:[%s204 + $0x40] sm:$0xff] %v1000
        %1237 = vst [vmem:[%s204 + $0x48] sm:$0xff] %v655
        %1238 = vst [vmem:[%s204 + $0x50] sm:$0xff] %v657
        %1239 = vst [vmem:[%s204 + $0x58] sm:$0xff] %v1005
        %1240 = vst [vmem:[%s204 + $0x60] sm:$0xff] %v661
        %1241 = vst [vmem:[%s204 + $0x68] sm:$0xff] %v663
        %1242 = vst [vmem:[%s204 + $0x70] sm:$0xff] %v1010
        %1243 = vst [vmem:[%s204 + $0x78] sm:$0xff] %v667
        %1244 = vst [vmem:[%s204 + $0x80] sm:$0xff] %v669
        %1245 = vst [vmem:[%s204 + $0x88] sm:$0xff] %v1015
        %1246 = vst [vmem:[%s204 + $0x90] sm:$0xff] %v673
        %1247 = vst [vmem:[%s204 + $0x98] sm:$0xff] %v675
        %1248 = vst [vmem:[%s204 + $0xa0] sm:$0xff] %v1020
        %1249 = vst [vmem:[%s204 + $0xa8] sm:$0xff] %v679
        %1250 = vst [vmem:[%s204 + $0xb0] sm:$0xff] %v681
        %1251 = vst [vmem:[%s204 + $0xb8] sm:$0xff] %v1025
        %1252 = vst [vmem:[%s204 + $0xc0] sm:$0xff] %v685
        %1253 = vst [vmem:[%s204 + $0xc8] sm:$0xff] %v687
        %1254 = vst [vmem:[%s204 + $0xd0] sm:$0xff] %v1030
        %1255 = vst [vmem:[%s204 + $0xd8] sm:$0xff] %v691
        %1256 = vst [vmem:[%s204 + $0xe0] sm:$0xff] %v693
        %1257 = vst [vmem:[%s204 + $0xe8] sm:$0xff] %v1035
        %1258 = vst [vmem:[%s204 + $0xf0] sm:$0xff] %v697
        %1259 = vst [vmem:[%s204 + $0xf8] sm:$0xff] %v699
        %1260 = vst [vmem:[%s204 + $0x100] sm:$0xff] %v1040
        %1261 = vst [vmem:[%s204 + $0x108] sm:$0xff] %v703
        %1262 = vst [vmem:[%s204 + $0x110] sm:$0xff] %v705
        %1263 = vst [vmem:[%s204 + $0x118] sm:$0xff] %v1045
        %1264 = vst [vmem:[%s204 + $0x120] sm:$0xff] %v709
        %1265 = vst [vmem:[%s204 + $0x128] sm:$0xff] %v711
        %1266 = vst [vmem:[%s204 + $0x130] sm:$0xff] %v1050
        %1267 = vst [vmem:[%s204 + $0x138] sm:$0xff] %v715
        %1268 = vst [vmem:[%s204 + $0x140] sm:$0xff] %v717
        %1269 = vst [vmem:[%s204 + $0x148] sm:$0xff] %v1055
        %1270 = vst [vmem:[%s204 + $0x150] sm:$0xff] %v721
        %1271 = vst [vmem:[%s204 + $0x158] sm:$0xff] %v723
        %1272 = vst [vmem:[%s204 + $0x160] sm:$0xff] %v1060
        %1273 = vst [vmem:[%s204 + $0x168] sm:$0xff] %v727
        %1274 = vst [vmem:[%s204 + $0x170] sm:$0xff] %v729
        %1275 = vst [vmem:[%s204 + $0x178] sm:$0xff] %v1065
        %1276 = vst [vmem:[%s204 + $0x180] sm:$0xff] %v733
        %1277 = vst [vmem:[%s204 + $0x188] sm:$0xff] %v735
        %1278 = vst [vmem:[%s204 + $0x190] sm:$0xff] %v1070
        %1279 = vst [vmem:[%s204 + $0x198] sm:$0xff] %v739
        %1280 = vst [vmem:[%s204 + $0x1a0] sm:$0xff] %v741
        %1281 = vst [vmem:[%s204 + $0x1a8] sm:$0xff] %v1075
        %1282 = vst [vmem:[%s204 + $0x1b0] sm:$0xff] %v745
        %1283 = vst [vmem:[%s204 + $0x1b8] sm:$0xff] %v747
        %1284 = vst [vmem:[%s204 + $0x1c0] sm:$0xff] %v1080
        %1285 = vst [vmem:[%s204 + $0x1c8] sm:$0xff] %v751
        %1286 = vst [vmem:[%s204 + $0x1d0] sm:$0xff] %v753
        %1287 = vst [vmem:[%s204 + $0x1d8] sm:$0xff] %v1085
        %1288 = vst [vmem:[%s204 + $0x1e0] sm:$0xff] %v757
        %1289 = vst [vmem:[%s204 + $0x1e8] sm:$0xff] %v759
        %1290 = vst [vmem:[%s204 + $0x1f0] sm:$0xff] %v1090
        %1291 = vst [vmem:[%s204 + $0x1f8] sm:$0xff] %v763
        %1292 = vst [vmem:[%s204 + $0x200] sm:$0xff] %v765
        %1293 = vst [vmem:[%s204 + $0x208] sm:$0xff] %v1095
        %1294 = vst [vmem:[%s204 + $0x210] sm:$0xff] %v769
        %1295 = vst [vmem:[%s204 + $0x218] sm:$0xff] %v771
        %1296 = vst [vmem:[%s204 + $0x220] sm:$0xff] %v1100
        %1297 = vst [vmem:[%s204 + $0x228] sm:$0xff] %v775
        %1298 = vst [vmem:[%s204 + $0x230] sm:$0xff] %v777
        %1299 = vst [vmem:[%s204 + $0x238] sm:$0xff] %v1105
        %1300 = vst [vmem:[%s204 + $0x240] sm:$0xff] %v781
        %1301 = vst [vmem:[%s204 + $0x248] sm:$0xff] %v783
        %1302 = vst [vmem:[%s204 + $0x250] sm:$0xff] %v1110
        %1303 = vst [vmem:[%s204 + $0x258] sm:$0xff] %v787
        %1304 = vst [vmem:[%s204 + $0x260] sm:$0xff] %v789
        %1305 = vst [vmem:[%s204 + $0x268] sm:$0xff] %v1115
        %1306 = vst [vmem:[%s204 + $0x270] sm:$0xff] %v793
        %1307 = vst [vmem:[%s204 + $0x278] sm:$0xff] %v795
        %1308 = vst [vmem:[%s204 + $0x280] sm:$0xff] %v1120
        %1309 = vst [vmem:[%s204 + $0x288] sm:$0xff] %v799
        %1310 = vst [vmem:[%s204 + $0x290] sm:$0xff] %v801
        %1311 = vst [vmem:[%s204 + $0x298] sm:$0xff] %v1125
        %1312 = vst [vmem:[%s204 + $0x2a0] sm:$0xff] %v805
        %1313 = vst [vmem:[%s204 + $0x2a8] sm:$0xff] %v807
        %1314 = vst [vmem:[%s204 + $0x2b0] sm:$0xff] %v1130
        %1315 = vst [vmem:[%s204 + $0x2b8] sm:$0xff] %v811
        %1316 = vst [vmem:[%s204 + $0x2c0] sm:$0xff] %v813
        %1317 = vst [vmem:[%s204 + $0x2c8] sm:$0xff] %v1135
        %1318 = vst [vmem:[%s204 + $0x2d0] sm:$0xff] %v817
        %1319 = vst [vmem:[%s204 + $0x2d8] sm:$0xff] %v819
        %1320 = vst [vmem:[%s204 + $0x2e0] sm:$0xff] %v1140
        %1321 = vst [vmem:[%s204 + $0x2e8] sm:$0xff] %v823
        %1322 = vst [vmem:[%s204 + $0x2f0] sm:$0xff] %v825
        %1323 = vst [vmem:[%s204 + $0x2f8] sm:$0xff] %v1145
        %1324 = vst [vmem:[%s204 + $0x300] sm:$0xff] %v829
        %1325 = vst [vmem:[%s204 + $0x308] sm:$0xff] %v831
        %1326 = vst [vmem:[%s204 + $0x310] sm:$0xff] %v1150
        %1327 = vst [vmem:[%s204 + $0x318] sm:$0xff] %v835
        %1328 = vst [vmem:[%s204 + $0x320] sm:$0xff] %v837
        %1329 = vst [vmem:[%s204 + $0x328] sm:$0xff] %v1155
        %1330 = vst [vmem:[%s204 + $0x330] sm:$0xff] %v841
        %1331 = vst [vmem:[%s204 + $0x338] sm:$0xff] %v843
        %1332 = vst [vmem:[%s204 + $0x340] sm:$0xff] %v1160
        %1333 = vst [vmem:[%s204 + $0x348] sm:$0xff] %v847
        %1334 = vst [vmem:[%s204 + $0x350] sm:$0xff] %v849
        %1335 = vst [vmem:[%s204 + $0x358] sm:$0xff] %v1165
        %1336 = vst [vmem:[%s204 + $0x360] sm:$0xff] %v853
        %1337 = vst [vmem:[%s204 + $0x368] sm:$0xff] %v855
        %1338 = vst [vmem:[%s204 + $0x370] sm:$0xff] %v1170
        %1339 = vst [vmem:[%s204 + $0x378] sm:$0xff] %v859
        %1340 = vst [vmem:[%s204 + $0x380] sm:$0xff] %v861
        %1341 = vst [vmem:[%s204 + $0x388] sm:$0xff] %v1175
        %1342 = vst [vmem:[%s204 + $0x390] sm:$0xff] %v865
        %1343 = vst [vmem:[%s204 + $0x398] sm:$0xff] %v867
        %1344 = vst [vmem:[%s204 + $0x3a0] sm:$0xff] %v1180
        %1345 = vst [vmem:[%s204 + $0x3a8] sm:$0xff] %v871
        %1346 = vst [vmem:[%s204 + $0x3b0] sm:$0xff] %v873
        %1347 = vst [vmem:[%s204 + $0x3b8] sm:$0xff] %v1185
        %1348 = vst [vmem:[%s204 + $0x3c0] sm:$0xff] %v877
        %1349 = vst [vmem:[%s204 + $0x3c8] sm:$0xff] %v879
        %1350 = vst [vmem:[%s204 + $0x3d0] sm:$0xff] %v1190
        %1351 = vst [vmem:[%s204 + $0x3d8] sm:$0xff] %v883
        %1352 = vst [vmem:[%s204 + $0x3e0] sm:$0xff] %v885
        %1353 = vst [vmem:[%s204 + $0x3e8] sm:$0xff] %v1195
        %1354 = vst [vmem:[%s204 + $0x3f0] sm:$0xff] %v889
        %1355 = vst [vmem:[%s204 + $0x3f8] sm:$0xff] %v891
        %1356 = vst [vmem:[%s204 + $0x400] sm:$0xff] %v1200
        %1357 = vst [vmem:[%s204 + $0x408] sm:$0xff] %v895
        %1358 = vst [vmem:[%s204 + $0x410] sm:$0xff] %v897
        %1359 = vst [vmem:[%s204 + $0x418] sm:$0xff] %v1205
        %1360 = vst [vmem:[%s204 + $0x420] sm:$0xff] %v901
        %1361 = vst [vmem:[%s204 + $0x428] sm:$0xff] %v903
        %1362 = vst [vmem:[%s204 + $0x430] sm:$0xff] %v1210
        %1363 = vst [vmem:[%s204 + $0x438] sm:$0xff] %v907
        %1364 = vst [vmem:[%s204 + $0x440] sm:$0xff] %v909
        %1365 = vst [vmem:[%s204 + $0x448] sm:$0xff] %v1215
        %1366 = vst [vmem:[%s204 + $0x450] sm:$0xff] %v913
        %1367 = vst [vmem:[%s204 + $0x458] sm:$0xff] %v915
        %1368 = vst [vmem:[%s204 + $0x460] sm:$0xff] %v1220
        %1369 = vst [vmem:[%s204 + $0x468] sm:$0xff] %v919
        %1370 = vst [vmem:[%s204 + $0x470] sm:$0xff] %v921
        %1371 = vst [vmem:[%s204 + $0x478] sm:$0xff] %v1225
        %s1372 = scalar_lea.vmem %s178, 16 [#allocation2]
        %v1373 = vld [vmem:[%s1372] sm:$0xff]
        %v1374 = vld [vmem:[%s1372 + $0x8] sm:$0xff]
        %v1375 = vmul.f32 %v1373, 2.0
        %v1376 = vmul.f32 %v1374, 2.0
        %v1377 = vsub.f32 %v1375, 1.0
        %v1378 = vsub.f32 %v1376, 1.0
        %v1380 = vsel %vm267, %v1377, 0
        %v1383 = vsel %vm267, %v1378, 0
        %1385 = vmatprep.subr.mxu0 0.0
        %1386 = vmatpush1.msra.mxu0 0.0
        %1387 = vmatprep.subr.mxu0 0.0
        %1388 = vmatpush1.msra.mxu0 0.0
        %1389 = vmatprep.subr.mxu0 0.0
        %1390 = vmatpush1.msra.mxu0 0.0
        %1391 = vmatprep.subr.mxu0 0.0
        %1392 = vmatpush1.msra.mxu0 0.0
        %1393 = vmatprep.subr.mxu0 0.0
        %1394 = vmatpush1.msra.mxu0 0.0
        %1395 = vmatprep.subr.mxu0 0.0
        %1396 = vmatpush1.msra.mxu0 0.0
        %1397 = vmatprep.subr.mxu0 0.0
        %1398 = vmatpush1.msra.mxu0 0.0
        %1399 = vmatprep.subr.mxu0 0.0
        %1400 = vmatpush1.msra.mxu0 0.0
        %1401 = vmatprep.subr.mxu0 0.0
        %1402 = vmatpush1.msra.mxu0 0.0
        %1403 = vmatprep.subr.mxu0 0.0
        %1404 = vmatpush1.msra.mxu0 0.0
        %1405 = vmatprep.subr.mxu0 0.0
        %1406 = vmatpush1.msra.mxu0 0.0
        %1407 = vmatprep.subr.mxu0 0.0
        %1408 = vmatpush1.msra.mxu0 0.0
        %1409 = vmatprep.subr.mxu0 0.0
        %1410 = vmatpush1.msra.mxu0 0.0
        %1411 = vmatprep.subr.mxu0 0.0
        %1412 = vmatpush1.msra.mxu0 0.0
        %1413 = vmatprep.subr.mxu0 %v259
        %1414 = vmatpush1.msra.mxu0 %v258
        %1415 = vmatprep.subr.mxu0 %v256
        %1416 = vmatpush1.msra.mxu0 %v255
        %1417 = vmatprep.subr.mxu0 0.0
        %1418 = vmatpush2.msra.mxu0 0.0
        %1419 = vmatprep.subr.mxu0 0.0
        %1420 = vmatpush2.msra.mxu0 0.0
        %1421 = vmatprep.subr.mxu0 0.0
        %1422 = vmatpush2.msra.mxu0 0.0
        %1423 = vmatprep.subr.mxu0 0.0
        %1424 = vmatpush2.msra.mxu0 0.0
        %1425 = vmatprep.subr.mxu0 0.0
        %1426 = vmatpush2.msra.mxu0 0.0
        %1427 = vmatprep.subr.mxu0 0.0
        %1428 = vmatpush2.msra.mxu0 0.0
        %1429 = vmatprep.subr.mxu0 0.0
        %1430 = vmatpush2.msra.mxu0 0.0
        %1431 = vmatprep.subr.mxu0 0.0
        %1432 = vmatpush2.msra.mxu0 0.0
        %1433 = vmatprep.subr.mxu0 0.0
        %1434 = vmatpush2.msra.mxu0 0.0
        %1435 = vmatprep.subr.mxu0 0.0
        %1436 = vmatpush2.msra.mxu0 0.0
        %1437 = vmatprep.subr.mxu0 0.0
        %1438 = vmatpush2.msra.mxu0 0.0
        %1439 = vmatprep.subr.mxu0 0.0
        %1440 = vmatpush2.msra.mxu0 0.0
        %1441 = vmatprep.subr.mxu0 0.0
        %1442 = vmatpush2.msra.mxu0 0.0
        %1443 = vmatprep.subr.mxu0 0.0
        %1444 = vmatpush2.msra.mxu0 0.0
        %1445 = vmatprep.subr.mxu0 0.0
        %1446 = vmatpush2.msra.mxu0 0.0
        %1447 = vmatprep.subr.mxu0 0.0
        %1448 = vmatpush2.msra.mxu0 0.0
        %1449 = vmatprep.mubr.f32.mxu0 0.0
        %1450 = vmatmul.mubr.f32.gmra.mxu0 %v1380
        %v1451 = vpop.f32.mrf.mxu0
        %v1452 = vadd.f32 0.0, %v1451
        %v1453 = vpop.f32.mrf.mxu0
        %v1454 = vadd.f32 0.0, %v1453
        %1455 = vmatprep.mubr.f32.mxu0 0.0
        %1456 = vmatmul.mubr.f32.gmra.mxu0 %v1383
        %v1457 = vpop.f32.mrf.mxu0
        %v1458 = vadd.f32 0.0, %v1457
        %v1459 = vpop.f32.mrf.mxu0
        %v1460 = vadd.f32 0.0, %v1459
        %1461 = vdwg.mxu0
        %1462 = vmatprep.subr.mxu0 0.0
        %1463 = vmatpush1.msra.mxu0 0.0
        %1464 = vmatprep.subr.mxu0 0.0
        %1465 = vmatpush1.msra.mxu0 0.0
        %1466 = vmatprep.subr.mxu0 0.0
        %1467 = vmatpush1.msra.mxu0 0.0
        %1468 = vmatprep.subr.mxu0 0.0
        %1469 = vmatpush1.msra.mxu0 0.0
        %1470 = vmatprep.subr.mxu0 0.0
        %1471 = vmatpush1.msra.mxu0 0.0
        %1472 = vmatprep.subr.mxu0 0.0
        %1473 = vmatpush1.msra.mxu0 0.0
        %1474 = vmatprep.subr.mxu0 0.0
        %1475 = vmatpush1.msra.mxu0 0.0
        %1476 = vmatprep.subr.mxu0 0.0
        %1477 = vmatpush1.msra.mxu0 0.0
        %1478 = vmatprep.subr.mxu0 0.0
        %1479 = vmatpush1.msra.mxu0 0.0
        %1480 = vmatprep.subr.mxu0 0.0
        %1481 = vmatpush1.msra.mxu0 0.0
        %1482 = vmatprep.subr.mxu0 0.0
        %1483 = vmatpush1.msra.mxu0 0.0
        %1484 = vmatprep.subr.mxu0 0.0
        %1485 = vmatpush1.msra.mxu0 0.0
        %1486 = vmatprep.subr.mxu0 0.0
        %1487 = vmatpush1.msra.mxu0 0.0
        %1488 = vmatprep.subr.mxu0 0.0
        %1489 = vmatpush1.msra.mxu0 0.0
        %1490 = vmatprep.subr.mxu0 0.0
        %1491 = vmatpush1.msra.mxu0 %v260
        %1492 = vmatprep.subr.mxu0 0.0
        %1493 = vmatpush1.msra.mxu0 %v257
        %1494 = vmatprep.subr.mxu0 0.0
        %1495 = vmatpush2.msra.mxu0 0.0
        %1496 = vmatprep.subr.mxu0 0.0
        %1497 = vmatpush2.msra.mxu0 0.0
        %1498 = vmatprep.subr.mxu0 0.0
        %1499 = vmatpush2.msra.mxu0 0.0
        %1500 = vmatprep.subr.mxu0 0.0
        %1501 = vmatpush2.msra.mxu0 0.0
        %1502 = vmatprep.subr.mxu0 0.0
        %1503 = vmatpush2.msra.mxu0 0.0
        %1504 = vmatprep.subr.mxu0 0.0
        %1505 = vmatpush2.msra.mxu0 0.0
        %1506 = vmatprep.subr.mxu0 0.0
        %1507 = vmatpush2.msra.mxu0 0.0
        %1508 = vmatprep.subr.mxu0 0.0
        %1509 = vmatpush2.msra.mxu0 0.0
        %1510 = vmatprep.subr.mxu0 0.0
        %1511 = vmatpush2.msra.mxu0 0.0
        %1512 = vmatprep.subr.mxu0 0.0
        %1513 = vmatpush2.msra.mxu0 0.0
        %1514 = vmatprep.subr.mxu0 0.0
        %1515 = vmatpush2.msra.mxu0 0.0
        %1516 = vmatprep.subr.mxu0 0.0
        %1517 = vmatpush2.msra.mxu0 0.0
        %1518 = vmatprep.subr.mxu0 0.0
        %1519 = vmatpush2.msra.mxu0 0.0
        %1520 = vmatprep.subr.mxu0 0.0
        %1521 = vmatpush2.msra.mxu0 0.0
        %1522 = vmatprep.subr.mxu0 0.0
        %1523 = vmatpush2.msra.mxu0 0.0
        %1524 = vmatprep.subr.mxu0 0.0
        %1525 = vmatpush2.msra.mxu0 0.0
        %1526 = vmatprep.mubr.f32.mxu0 0.0
        %1527 = vmatmul.mubr.f32.gmra.mxu0 %v1380
        %v1528 = vpop.f32.mrf.mxu0
        %v1529 = vadd.f32 0.0, %v1528
        %v1530 = vpop.f32.mrf.mxu0
        %1531 = vmatprep.mubr.f32.mxu0 0.0
        %1532 = vmatmul.mubr.f32.gmra.mxu0 %v1383
        %v1533 = vpop.f32.mrf.mxu0
        %v1534 = vadd.f32 0.0, %v1533
        %v1535 = vpop.f32.mrf.mxu0
        %1536 = vdwg.mxu0
        %1537 = vmatprep.subr.mxu0 0.0
        %1538 = vmatpush1.msra.mxu0 0.0
        %1539 = vmatprep.subr.mxu0 0.0
        %1540 = vmatpush1.msra.mxu0 0.0
        %1541 = vmatprep.subr.mxu0 0.0
        %1542 = vmatpush1.msra.mxu0 0.0
        %1543 = vmatprep.subr.mxu0 0.0
        %1544 = vmatpush1.msra.mxu0 0.0
        %1545 = vmatprep.subr.mxu0 0.0
        %1546 = vmatpush1.msra.mxu0 0.0
        %1547 = vmatprep.subr.mxu0 0.0
        %1548 = vmatpush1.msra.mxu0 0.0
        %1549 = vmatprep.subr.mxu0 0.0
        %1550 = vmatpush1.msra.mxu0 0.0
        %1551 = vmatprep.subr.mxu0 0.0
        %1552 = vmatpush1.msra.mxu0 0.0
        %1553 = vmatprep.subr.mxu0 0.0
        %1554 = vmatpush1.msra.mxu0 0.0
        %1555 = vmatprep.subr.mxu0 0.0
        %1556 = vmatpush1.msra.mxu0 0.0
        %1557 = vmatprep.subr.mxu0 0.0
        %1558 = vmatpush1.msra.mxu0 0.0
        %1559 = vmatprep.subr.mxu0 0.0
        %1560 = vmatpush1.msra.mxu0 0.0
        %1561 = vmatprep.subr.mxu0 0.0
        %1562 = vmatpush1.msra.mxu0 0.0
        %1563 = vmatprep.subr.mxu0 0.0
        %1564 = vmatpush1.msra.mxu0 0.0
        %1565 = vmatprep.subr.mxu0 %v1460
        %1566 = vmatpush1.msra.mxu0 %v1458
        %1567 = vmatprep.subr.mxu0 %v1454
        %1568 = vmatpush1.msra.mxu0 %v1452
        %1569 = vmatprep.subr.mxu0 0.0
        %1570 = vmatpush2.msra.mxu0 0.0
        %1571 = vmatprep.subr.mxu0 0.0
        %1572 = vmatpush2.msra.mxu0 0.0
        %1573 = vmatprep.subr.mxu0 0.0
        %1574 = vmatpush2.msra.mxu0 0.0
        %1575 = vmatprep.subr.mxu0 0.0
        %1576 = vmatpush2.msra.mxu0 0.0
        %1577 = vmatprep.subr.mxu0 0.0
        %1578 = vmatpush2.msra.mxu0 0.0
        %1579 = vmatprep.subr.mxu0 0.0
        %1580 = vmatpush2.msra.mxu0 0.0
        %1581 = vmatprep.subr.mxu0 0.0
        %1582 = vmatpush2.msra.mxu0 0.0
        %1583 = vmatprep.subr.mxu0 0.0
        %1584 = vmatpush2.msra.mxu0 0.0
        %1585 = vmatprep.subr.mxu0 0.0
        %1586 = vmatpush2.msra.mxu0 0.0
        %1587 = vmatprep.subr.mxu0 0.0
        %1588 = vmatpush2.msra.mxu0 0.0
        %1589 = vmatprep.subr.mxu0 0.0
        %1590 = vmatpush2.msra.mxu0 0.0
        %1591 = vmatprep.subr.mxu0 0.0
        %1592 = vmatpush2.msra.mxu0 0.0
        %1593 = vmatprep.subr.mxu0 0.0
        %1594 = vmatpush2.msra.mxu0 0.0
        %1595 = vmatprep.subr.mxu0 0.0
        %1596 = vmatpush2.msra.mxu0 0.0
        %1597 = vmatprep.subr.mxu0 0.0
        %1598 = vmatpush2.msra.mxu0 0.0
        %1599 = vmatprep.subr.mxu0 0.0
        %1600 = vmatpush2.msra.mxu0 0.0
        %1601 = vmatprep.mubr.f32.mxu0 0.0
        %1602 = vmatmul.mubr.f32.gmra.mxu0 %v427
        %v1603 = vpop.f32.mrf.mxu0
        %v1604 = vadd.f32 0.0, %v1603
        %v1605 = vpop.f32.mrf.mxu0
        %v1606 = vadd.f32 0.0, %v1605
        %1607 = vmatprep.mubr.f32.mxu0 0.0
        %1608 = vmatmul.mubr.f32.gmra.mxu0 %v430
        %v1609 = vpop.f32.mrf.mxu0
        %v1610 = vadd.f32 0.0, %v1609
        %v1611 = vpop.f32.mrf.mxu0
        %v1612 = vadd.f32 0.0, %v1611
        %1613 = vmatprep.mubr.f32.mxu0 0.0
        %1614 = vmatmul.mubr.f32.gmra.mxu0 %v433
        %v1615 = vpop.f32.mrf.mxu0
        %v1616 = vadd.f32 0.0, %v1615
        %v1617 = vpop.f32.mrf.mxu0
        %v1618 = vadd.f32 0.0, %v1617
        %1619 = vmatprep.mubr.f32.mxu0 0.0
        %1620 = vmatmul.mubr.f32.gmra.mxu0 %v436
        %v1621 = vpop.f32.mrf.mxu0
        %v1622 = vadd.f32 0.0, %v1621
        %v1623 = vpop.f32.mrf.mxu0
        %v1624 = vadd.f32 0.0, %v1623
        %1625 = vmatprep.mubr.f32.mxu0 0.0
        %1626 = vmatmul.mubr.f32.gmra.mxu0 %v439
        %v1627 = vpop.f32.mrf.mxu0
        %v1628 = vadd.f32 0.0, %v1627
        %v1629 = vpop.f32.mrf.mxu0
        %v1630 = vadd.f32 0.0, %v1629
        %1631 = vmatprep.mubr.f32.mxu0 0.0
        %1632 = vmatmul.mubr.f32.gmra.mxu0 %v442
        %v1633 = vpop.f32.mrf.mxu0
        %v1634 = vadd.f32 0.0, %v1633
        %v1635 = vpop.f32.mrf.mxu0
        %v1636 = vadd.f32 0.0, %v1635
        %1637 = vmatprep.mubr.f32.mxu0 0.0
        %1638 = vmatmul.mubr.f32.gmra.mxu0 %v445
        %v1639 = vpop.f32.mrf.mxu0
        %v1640 = vadd.f32 0.0, %v1639
        %v1641 = vpop.f32.mrf.mxu0
        %v1642 = vadd.f32 0.0, %v1641
        %1643 = vmatprep.mubr.f32.mxu0 0.0
        %1644 = vmatmul.mubr.f32.gmra.mxu0 %v448
        %v1645 = vpop.f32.mrf.mxu0
        %v1646 = vadd.f32 0.0, %v1645
        %v1647 = vpop.f32.mrf.mxu0
        %v1648 = vadd.f32 0.0, %v1647
        %1649 = vmatprep.mubr.f32.mxu0 0.0
        %1650 = vmatmul.mubr.f32.gmra.mxu0 %v451
        %v1651 = vpop.f32.mrf.mxu0
        %v1652 = vadd.f32 0.0, %v1651
        %v1653 = vpop.f32.mrf.mxu0
        %v1654 = vadd.f32 0.0, %v1653
        %1655 = vmatprep.mubr.f32.mxu0 0.0
        %1656 = vmatmul.mubr.f32.gmra.mxu0 %v454
        %v1657 = vpop.f32.mrf.mxu0
        %v1658 = vadd.f32 0.0, %v1657
        %v1659 = vpop.f32.mrf.mxu0
        %v1660 = vadd.f32 0.0, %v1659
        %1661 = vmatprep.mubr.f32.mxu0 0.0
        %1662 = vmatmul.mubr.f32.gmra.mxu0 %v457
        %v1663 = vpop.f32.mrf.mxu0
        %v1664 = vadd.f32 0.0, %v1663
        %v1665 = vpop.f32.mrf.mxu0
        %v1666 = vadd.f32 0.0, %v1665
        %1667 = vmatprep.mubr.f32.mxu0 0.0
        %1668 = vmatmul.mubr.f32.gmra.mxu0 %v460
        %v1669 = vpop.f32.mrf.mxu0
        %v1670 = vadd.f32 0.0, %v1669
        %v1671 = vpop.f32.mrf.mxu0
        %v1672 = vadd.f32 0.0, %v1671
        %1673 = vmatprep.mubr.f32.mxu0 0.0
        %1674 = vmatmul.mubr.f32.gmra.mxu0 %v463
        %v1675 = vpop.f32.mrf.mxu0
        %v1676 = vadd.f32 0.0, %v1675
        %v1677 = vpop.f32.mrf.mxu0
        %v1678 = vadd.f32 0.0, %v1677
        %1679 = vmatprep.mubr.f32.mxu0 0.0
        %1680 = vmatmul.mubr.f32.gmra.mxu0 %v466
        %v1681 = vpop.f32.mrf.mxu0
        %v1682 = vadd.f32 0.0, %v1681
        %v1683 = vpop.f32.mrf.mxu0
        %v1684 = vadd.f32 0.0, %v1683
        %1685 = vmatprep.mubr.f32.mxu0 0.0
        %1686 = vmatmul.mubr.f32.gmra.mxu0 %v469
        %v1687 = vpop.f32.mrf.mxu0
        %v1688 = vadd.f32 0.0, %v1687
        %v1689 = vpop.f32.mrf.mxu0
        %v1690 = vadd.f32 0.0, %v1689
        %1691 = vmatprep.mubr.f32.mxu0 0.0
        %1692 = vmatmul.mubr.f32.gmra.mxu0 %v472
        %v1693 = vpop.f32.mrf.mxu0
        %v1694 = vadd.f32 0.0, %v1693
        %v1695 = vpop.f32.mrf.mxu0
        %v1696 = vadd.f32 0.0, %v1695
        %1697 = vmatprep.mubr.f32.mxu0 0.0
        %1698 = vmatmul.mubr.f32.gmra.mxu0 %v475
        %v1699 = vpop.f32.mrf.mxu0
        %v1700 = vadd.f32 0.0, %v1699
        %v1701 = vpop.f32.mrf.mxu0
        %v1702 = vadd.f32 0.0, %v1701
        %1703 = vmatprep.mubr.f32.mxu0 0.0
        %1704 = vmatmul.mubr.f32.gmra.mxu0 %v478
        %v1705 = vpop.f32.mrf.mxu0
        %v1706 = vadd.f32 0.0, %v1705
        %v1707 = vpop.f32.mrf.mxu0
        %v1708 = vadd.f32 0.0, %v1707
        %1709 = vmatprep.mubr.f32.mxu0 0.0
        %1710 = vmatmul.mubr.f32.gmra.mxu0 %v481
        %v1711 = vpop.f32.mrf.mxu0
        %v1712 = vadd.f32 0.0, %v1711
        %v1713 = vpop.f32.mrf.mxu0
        %v1714 = vadd.f32 0.0, %v1713
        %1715 = vmatprep.mubr.f32.mxu0 0.0
        %1716 = vmatmul.mubr.f32.gmra.mxu0 %v484
        %v1717 = vpop.f32.mrf.mxu0
        %v1718 = vadd.f32 0.0, %v1717
        %v1719 = vpop.f32.mrf.mxu0
        %v1720 = vadd.f32 0.0, %v1719
        %1721 = vmatprep.mubr.f32.mxu0 0.0
        %1722 = vmatmul.mubr.f32.gmra.mxu0 %v487
        %v1723 = vpop.f32.mrf.mxu0
        %v1724 = vadd.f32 0.0, %v1723
        %v1725 = vpop.f32.mrf.mxu0
        %v1726 = vadd.f32 0.0, %v1725
        %1727 = vmatprep.mubr.f32.mxu0 0.0
        %1728 = vmatmul.mubr.f32.gmra.mxu0 %v490
        %v1729 = vpop.f32.mrf.mxu0
        %v1730 = vadd.f32 0.0, %v1729
        %v1731 = vpop.f32.mrf.mxu0
        %v1732 = vadd.f32 0.0, %v1731
        %1733 = vmatprep.mubr.f32.mxu0 0.0
        %1734 = vmatmul.mubr.f32.gmra.mxu0 %v493
        %v1735 = vpop.f32.mrf.mxu0
        %v1736 = vadd.f32 0.0, %v1735
        %v1737 = vpop.f32.mrf.mxu0
        %v1738 = vadd.f32 0.0, %v1737
        %1739 = vmatprep.mubr.f32.mxu0 0.0
        %1740 = vmatmul.mubr.f32.gmra.mxu0 %v496
        %v1741 = vpop.f32.mrf.mxu0
        %v1742 = vadd.f32 0.0, %v1741
        %v1743 = vpop.f32.mrf.mxu0
        %v1744 = vadd.f32 0.0, %v1743
        %1745 = vmatprep.mubr.f32.mxu0 0.0
        %1746 = vmatmul.mubr.f32.gmra.mxu0 %v499
        %v1747 = vpop.f32.mrf.mxu0
        %v1748 = vadd.f32 0.0, %v1747
        %v1749 = vpop.f32.mrf.mxu0
        %v1750 = vadd.f32 0.0, %v1749
        %1751 = vmatprep.mubr.f32.mxu0 0.0
        %1752 = vmatmul.mubr.f32.gmra.mxu0 %v502
        %v1753 = vpop.f32.mrf.mxu0
        %v1754 = vadd.f32 0.0, %v1753
        %v1755 = vpop.f32.mrf.mxu0
        %v1756 = vadd.f32 0.0, %v1755
        %1757 = vmatprep.mubr.f32.mxu0 0.0
        %1758 = vmatmul.mubr.f32.gmra.mxu0 %v505
        %v1759 = vpop.f32.mrf.mxu0
        %v1760 = vadd.f32 0.0, %v1759
        %v1761 = vpop.f32.mrf.mxu0
        %v1762 = vadd.f32 0.0, %v1761
        %1763 = vmatprep.mubr.f32.mxu0 0.0
        %1764 = vmatmul.mubr.f32.gmra.mxu0 %v508
        %v1765 = vpop.f32.mrf.mxu0
        %v1766 = vadd.f32 0.0, %v1765
        %v1767 = vpop.f32.mrf.mxu0
        %v1768 = vadd.f32 0.0, %v1767
        %1769 = vmatprep.mubr.f32.mxu0 0.0
        %1770 = vmatmul.mubr.f32.gmra.mxu0 %v511
        %v1771 = vpop.f32.mrf.mxu0
        %v1772 = vadd.f32 0.0, %v1771
        %v1773 = vpop.f32.mrf.mxu0
        %v1774 = vadd.f32 0.0, %v1773
        %1775 = vmatprep.mubr.f32.mxu0 0.0
        %1776 = vmatmul.mubr.f32.gmra.mxu0 %v514
        %v1777 = vpop.f32.mrf.mxu0
        %v1778 = vadd.f32 0.0, %v1777
        %v1779 = vpop.f32.mrf.mxu0
        %v1780 = vadd.f32 0.0, %v1779
        %1781 = vmatprep.mubr.f32.mxu0 0.0
        %1782 = vmatmul.mubr.f32.gmra.mxu0 %v517
        %v1783 = vpop.f32.mrf.mxu0
        %v1784 = vadd.f32 0.0, %v1783
        %v1785 = vpop.f32.mrf.mxu0
        %v1786 = vadd.f32 0.0, %v1785
        %1787 = vmatprep.mubr.f32.mxu0 0.0
        %1788 = vmatmul.mubr.f32.gmra.mxu0 %v520
        %v1789 = vpop.f32.mrf.mxu0
        %v1790 = vadd.f32 0.0, %v1789
        %v1791 = vpop.f32.mrf.mxu0
        %v1792 = vadd.f32 0.0, %v1791
        %1793 = vmatprep.mubr.f32.mxu0 0.0
        %1794 = vmatmul.mubr.f32.gmra.mxu0 %v523
        %v1795 = vpop.f32.mrf.mxu0
        %v1796 = vadd.f32 0.0, %v1795
        %v1797 = vpop.f32.mrf.mxu0
        %v1798 = vadd.f32 0.0, %v1797
        %1799 = vmatprep.mubr.f32.mxu0 0.0
        %1800 = vmatmul.mubr.f32.gmra.mxu0 %v526
        %v1801 = vpop.f32.mrf.mxu0
        %v1802 = vadd.f32 0.0, %v1801
        %v1803 = vpop.f32.mrf.mxu0
        %v1804 = vadd.f32 0.0, %v1803
        %1805 = vmatprep.mubr.f32.mxu0 0.0
        %1806 = vmatmul.mubr.f32.gmra.mxu0 %v529
        %v1807 = vpop.f32.mrf.mxu0
        %v1808 = vadd.f32 0.0, %v1807
        %v1809 = vpop.f32.mrf.mxu0
        %v1810 = vadd.f32 0.0, %v1809
        %1811 = vmatprep.mubr.f32.mxu0 0.0
        %1812 = vmatmul.mubr.f32.gmra.mxu0 %v532
        %v1813 = vpop.f32.mrf.mxu0
        %v1814 = vadd.f32 0.0, %v1813
        %v1815 = vpop.f32.mrf.mxu0
        %v1816 = vadd.f32 0.0, %v1815
        %1817 = vmatprep.mubr.f32.mxu0 0.0
        %1818 = vmatmul.mubr.f32.gmra.mxu0 %v535
        %v1819 = vpop.f32.mrf.mxu0
        %v1820 = vadd.f32 0.0, %v1819
        %v1821 = vpop.f32.mrf.mxu0
        %v1822 = vadd.f32 0.0, %v1821
        %1823 = vmatprep.mubr.f32.mxu0 0.0
        %1824 = vmatmul.mubr.f32.gmra.mxu0 %v538
        %v1825 = vpop.f32.mrf.mxu0
        %v1826 = vadd.f32 0.0, %v1825
        %v1827 = vpop.f32.mrf.mxu0
        %v1828 = vadd.f32 0.0, %v1827
        %1829 = vmatprep.mubr.f32.mxu0 0.0
        %1830 = vmatmul.mubr.f32.gmra.mxu0 %v541
        %v1831 = vpop.f32.mrf.mxu0
        %v1832 = vadd.f32 0.0, %v1831
        %v1833 = vpop.f32.mrf.mxu0
        %v1834 = vadd.f32 0.0, %v1833
        %1835 = vmatprep.mubr.f32.mxu0 0.0
        %1836 = vmatmul.mubr.f32.gmra.mxu0 %v544
        %v1837 = vpop.f32.mrf.mxu0
        %v1838 = vadd.f32 0.0, %v1837
        %v1839 = vpop.f32.mrf.mxu0
        %v1840 = vadd.f32 0.0, %v1839
        %1841 = vmatprep.mubr.f32.mxu0 0.0
        %1842 = vmatmul.mubr.f32.gmra.mxu0 %v547
        %v1843 = vpop.f32.mrf.mxu0
        %v1844 = vadd.f32 0.0, %v1843
        %v1845 = vpop.f32.mrf.mxu0
        %v1846 = vadd.f32 0.0, %v1845
        %1847 = vmatprep.mubr.f32.mxu0 0.0
        %1848 = vmatmul.mubr.f32.gmra.mxu0 %v550
        %v1849 = vpop.f32.mrf.mxu0
        %v1850 = vadd.f32 0.0, %v1849
        %v1851 = vpop.f32.mrf.mxu0
        %v1852 = vadd.f32 0.0, %v1851
        %1853 = vmatprep.mubr.f32.mxu0 0.0
        %1854 = vmatmul.mubr.f32.gmra.mxu0 %v553
        %v1855 = vpop.f32.mrf.mxu0
        %v1856 = vadd.f32 0.0, %v1855
        %v1857 = vpop.f32.mrf.mxu0
        %v1858 = vadd.f32 0.0, %v1857
        %1859 = vmatprep.mubr.f32.mxu0 0.0
        %1860 = vmatmul.mubr.f32.gmra.mxu0 %v556
        %v1861 = vpop.f32.mrf.mxu0
        %v1862 = vadd.f32 0.0, %v1861
        %v1863 = vpop.f32.mrf.mxu0
        %v1864 = vadd.f32 0.0, %v1863
        %1865 = vmatprep.mubr.f32.mxu0 0.0
        %1866 = vmatmul.mubr.f32.gmra.mxu0 %v559
        %v1867 = vpop.f32.mrf.mxu0
        %v1868 = vadd.f32 0.0, %v1867
        %v1869 = vpop.f32.mrf.mxu0
        %v1870 = vadd.f32 0.0, %v1869
        %1871 = vmatprep.mubr.f32.mxu0 0.0
        %1872 = vmatmul.mubr.f32.gmra.mxu0 %v562
        %v1873 = vpop.f32.mrf.mxu0
        %v1874 = vadd.f32 0.0, %v1873
        %v1875 = vpop.f32.mrf.mxu0
        %v1876 = vadd.f32 0.0, %v1875
        %1877 = vmatprep.mubr.f32.mxu0 0.0
        %1878 = vmatmul.mubr.f32.gmra.mxu0 %v565
        %v1879 = vpop.f32.mrf.mxu0
        %v1880 = vadd.f32 0.0, %v1879
        %v1881 = vpop.f32.mrf.mxu0
        %v1882 = vadd.f32 0.0, %v1881
        %1883 = vmatprep.mubr.f32.mxu0 0.0
        %1884 = vmatmul.mubr.f32.gmra.mxu0 %v568
        %v1885 = vpop.f32.mrf.mxu0
        %v1886 = vadd.f32 0.0, %v1885
        %v1887 = vpop.f32.mrf.mxu0
        %v1888 = vadd.f32 0.0, %v1887
        %1889 = vdwg.mxu0
        %1890 = vmatprep.subr.mxu0 0.0
        %1891 = vmatpush1.msra.mxu0 0.0
        %1892 = vmatprep.subr.mxu0 0.0
        %1893 = vmatpush1.msra.mxu0 0.0
        %1894 = vmatprep.subr.mxu0 0.0
        %1895 = vmatpush1.msra.mxu0 0.0
        %1896 = vmatprep.subr.mxu0 0.0
        %1897 = vmatpush1.msra.mxu0 0.0
        %1898 = vmatprep.subr.mxu0 0.0
        %1899 = vmatpush1.msra.mxu0 0.0
        %1900 = vmatprep.subr.mxu0 0.0
        %1901 = vmatpush1.msra.mxu0 0.0
        %1902 = vmatprep.subr.mxu0 0.0
        %1903 = vmatpush1.msra.mxu0 0.0
        %1904 = vmatprep.subr.mxu0 0.0
        %1905 = vmatpush1.msra.mxu0 0.0
        %1906 = vmatprep.subr.mxu0 0.0
        %1907 = vmatpush1.msra.mxu0 0.0
        %1908 = vmatprep.subr.mxu0 0.0
        %1909 = vmatpush1.msra.mxu0 0.0
        %1910 = vmatprep.subr.mxu0 0.0
        %1911 = vmatpush1.msra.mxu0 0.0
        %1912 = vmatprep.subr.mxu0 0.0
        %1913 = vmatpush1.msra.mxu0 0.0
        %1914 = vmatprep.subr.mxu0 0.0
        %1915 = vmatpush1.msra.mxu0 0.0
        %1916 = vmatprep.subr.mxu0 0.0
        %1917 = vmatpush1.msra.mxu0 0.0
        %1918 = vmatprep.subr.mxu0 0.0
        %1919 = vmatpush1.msra.mxu0 %v1534
        %1920 = vmatprep.subr.mxu0 0.0
        %1921 = vmatpush1.msra.mxu0 %v1529
        %1922 = vmatprep.subr.mxu0 0.0
        %1923 = vmatpush2.msra.mxu0 0.0
        %1924 = vmatprep.subr.mxu0 0.0
        %1925 = vmatpush2.msra.mxu0 0.0
        %1926 = vmatprep.subr.mxu0 0.0
        %1927 = vmatpush2.msra.mxu0 0.0
        %1928 = vmatprep.subr.mxu0 0.0
        %1929 = vmatpush2.msra.mxu0 0.0
        %1930 = vmatprep.subr.mxu0 0.0
        %1931 = vmatpush2.msra.mxu0 0.0
        %1932 = vmatprep.subr.mxu0 0.0
        %1933 = vmatpush2.msra.mxu0 0.0
        %1934 = vmatprep.subr.mxu0 0.0
        %1935 = vmatpush2.msra.mxu0 0.0
        %1936 = vmatprep.subr.mxu0 0.0
        %1937 = vmatpush2.msra.mxu0 0.0
        %1938 = vmatprep.subr.mxu0 0.0
        %1939 = vmatpush2.msra.mxu0 0.0
        %1940 = vmatprep.subr.mxu0 0.0
        %1941 = vmatpush2.msra.mxu0 0.0
        %1942 = vmatprep.subr.mxu0 0.0
        %1943 = vmatpush2.msra.mxu0 0.0
        %1944 = vmatprep.subr.mxu0 0.0
        %1945 = vmatpush2.msra.mxu0 0.0
        %1946 = vmatprep.subr.mxu0 0.0
        %1947 = vmatpush2.msra.mxu0 0.0
        %1948 = vmatprep.subr.mxu0 0.0
        %1949 = vmatpush2.msra.mxu0 0.0
        %1950 = vmatprep.subr.mxu0 0.0
        %1951 = vmatpush2.msra.mxu0 0.0
        %1952 = vmatprep.subr.mxu0 0.0
        %1953 = vmatpush2.msra.mxu0 0.0
        %1954 = vmatprep.mubr.f32.mxu0 0.0
        %1955 = vmatmul.mubr.f32.gmra.mxu0 %v427
        %v1956 = vpop.f32.mrf.mxu0
        %v1957 = vadd.f32 0.0, %v1956
        %v1958 = vpop.f32.mrf.mxu0
        %1959 = vmatprep.mubr.f32.mxu0 0.0
        %1960 = vmatmul.mubr.f32.gmra.mxu0 %v430
        %v1961 = vpop.f32.mrf.mxu0
        %v1962 = vadd.f32 0.0, %v1961
        %v1963 = vpop.f32.mrf.mxu0
        %1964 = vmatprep.mubr.f32.mxu0 0.0
        %1965 = vmatmul.mubr.f32.gmra.mxu0 %v433
        %v1966 = vpop.f32.mrf.mxu0
        %v1967 = vadd.f32 0.0, %v1966
        %v1968 = vpop.f32.mrf.mxu0
        %1969 = vmatprep.mubr.f32.mxu0 0.0
        %1970 = vmatmul.mubr.f32.gmra.mxu0 %v436
        %v1971 = vpop.f32.mrf.mxu0
        %v1972 = vadd.f32 0.0, %v1971
        %v1973 = vpop.f32.mrf.mxu0
        %1974 = vmatprep.mubr.f32.mxu0 0.0
        %1975 = vmatmul.mubr.f32.gmra.mxu0 %v439
        %v1976 = vpop.f32.mrf.mxu0
        %v1977 = vadd.f32 0.0, %v1976
        %v1978 = vpop.f32.mrf.mxu0
        %1979 = vmatprep.mubr.f32.mxu0 0.0
        %1980 = vmatmul.mubr.f32.gmra.mxu0 %v442
        %v1981 = vpop.f32.mrf.mxu0
        %v1982 = vadd.f32 0.0, %v1981
        %v1983 = vpop.f32.mrf.mxu0
        %1984 = vmatprep.mubr.f32.mxu0 0.0
        %1985 = vmatmul.mubr.f32.gmra.mxu0 %v445
        %v1986 = vpop.f32.mrf.mxu0
        %v1987 = vadd.f32 0.0, %v1986
        %v1988 = vpop.f32.mrf.mxu0
        %1989 = vmatprep.mubr.f32.mxu0 0.0
        %1990 = vmatmul.mubr.f32.gmra.mxu0 %v448
        %v1991 = vpop.f32.mrf.mxu0
        %v1992 = vadd.f32 0.0, %v1991
        %v1993 = vpop.f32.mrf.mxu0
        %1994 = vmatprep.mubr.f32.mxu0 0.0
        %1995 = vmatmul.mubr.f32.gmra.mxu0 %v451
        %v1996 = vpop.f32.mrf.mxu0
        %v1997 = vadd.f32 0.0, %v1996
        %v1998 = vpop.f32.mrf.mxu0
        %1999 = vmatprep.mubr.f32.mxu0 0.0
        %2000 = vmatmul.mubr.f32.gmra.mxu0 %v454
        %v2001 = vpop.f32.mrf.mxu0
        %v2002 = vadd.f32 0.0, %v2001
        %v2003 = vpop.f32.mrf.mxu0
        %2004 = vmatprep.mubr.f32.mxu0 0.0
        %2005 = vmatmul.mubr.f32.gmra.mxu0 %v457
        %v2006 = vpop.f32.mrf.mxu0
        %v2007 = vadd.f32 0.0, %v2006
        %v2008 = vpop.f32.mrf.mxu0
        %2009 = vmatprep.mubr.f32.mxu0 0.0
        %2010 = vmatmul.mubr.f32.gmra.mxu0 %v460
        %v2011 = vpop.f32.mrf.mxu0
        %v2012 = vadd.f32 0.0, %v2011
        %v2013 = vpop.f32.mrf.mxu0
        %2014 = vmatprep.mubr.f32.mxu0 0.0
        %2015 = vmatmul.mubr.f32.gmra.mxu0 %v463
        %v2016 = vpop.f32.mrf.mxu0
        %v2017 = vadd.f32 0.0, %v2016
        %v2018 = vpop.f32.mrf.mxu0
        %2019 = vmatprep.mubr.f32.mxu0 0.0
        %2020 = vmatmul.mubr.f32.gmra.mxu0 %v466
        %v2021 = vpop.f32.mrf.mxu0
        %v2022 = vadd.f32 0.0, %v2021
        %v2023 = vpop.f32.mrf.mxu0
        %2024 = vmatprep.mubr.f32.mxu0 0.0
        %2025 = vmatmul.mubr.f32.gmra.mxu0 %v469
        %v2026 = vpop.f32.mrf.mxu0
        %v2027 = vadd.f32 0.0, %v2026
        %v2028 = vpop.f32.mrf.mxu0
        %2029 = vmatprep.mubr.f32.mxu0 0.0
        %2030 = vmatmul.mubr.f32.gmra.mxu0 %v472
        %v2031 = vpop.f32.mrf.mxu0
        %v2032 = vadd.f32 0.0, %v2031
        %v2033 = vpop.f32.mrf.mxu0
        %2034 = vmatprep.mubr.f32.mxu0 0.0
        %2035 = vmatmul.mubr.f32.gmra.mxu0 %v475
        %v2036 = vpop.f32.mrf.mxu0
        %v2037 = vadd.f32 0.0, %v2036
        %v2038 = vpop.f32.mrf.mxu0
        %2039 = vmatprep.mubr.f32.mxu0 0.0
        %2040 = vmatmul.mubr.f32.gmra.mxu0 %v478
        %v2041 = vpop.f32.mrf.mxu0
        %v2042 = vadd.f32 0.0, %v2041
        %v2043 = vpop.f32.mrf.mxu0
        %2044 = vmatprep.mubr.f32.mxu0 0.0
        %2045 = vmatmul.mubr.f32.gmra.mxu0 %v481
        %v2046 = vpop.f32.mrf.mxu0
        %v2047 = vadd.f32 0.0, %v2046
        %v2048 = vpop.f32.mrf.mxu0
        %2049 = vmatprep.mubr.f32.mxu0 0.0
        %2050 = vmatmul.mubr.f32.gmra.mxu0 %v484
        %v2051 = vpop.f32.mrf.mxu0
        %v2052 = vadd.f32 0.0, %v2051
        %v2053 = vpop.f32.mrf.mxu0
        %2054 = vmatprep.mubr.f32.mxu0 0.0
        %2055 = vmatmul.mubr.f32.gmra.mxu0 %v487
        %v2056 = vpop.f32.mrf.mxu0
        %v2057 = vadd.f32 0.0, %v2056
        %v2058 = vpop.f32.mrf.mxu0
        %2059 = vmatprep.mubr.f32.mxu0 0.0
        %2060 = vmatmul.mubr.f32.gmra.mxu0 %v490
        %v2061 = vpop.f32.mrf.mxu0
        %v2062 = vadd.f32 0.0, %v2061
        %v2063 = vpop.f32.mrf.mxu0
        %2064 = vmatprep.mubr.f32.mxu0 0.0
        %2065 = vmatmul.mubr.f32.gmra.mxu0 %v493
        %v2066 = vpop.f32.mrf.mxu0
        %v2067 = vadd.f32 0.0, %v2066
        %v2068 = vpop.f32.mrf.mxu0
        %2069 = vmatprep.mubr.f32.mxu0 0.0
        %2070 = vmatmul.mubr.f32.gmra.mxu0 %v496
        %v2071 = vpop.f32.mrf.mxu0
        %v2072 = vadd.f32 0.0, %v2071
        %v2073 = vpop.f32.mrf.mxu0
        %2074 = vmatprep.mubr.f32.mxu0 0.0
        %2075 = vmatmul.mubr.f32.gmra.mxu0 %v499
        %v2076 = vpop.f32.mrf.mxu0
        %v2077 = vadd.f32 0.0, %v2076
        %v2078 = vpop.f32.mrf.mxu0
        %2079 = vmatprep.mubr.f32.mxu0 0.0
        %2080 = vmatmul.mubr.f32.gmra.mxu0 %v502
        %v2081 = vpop.f32.mrf.mxu0
        %v2082 = vadd.f32 0.0, %v2081
        %v2083 = vpop.f32.mrf.mxu0
        %2084 = vmatprep.mubr.f32.mxu0 0.0
        %2085 = vmatmul.mubr.f32.gmra.mxu0 %v505
        %v2086 = vpop.f32.mrf.mxu0
        %v2087 = vadd.f32 0.0, %v2086
        %v2088 = vpop.f32.mrf.mxu0
        %2089 = vmatprep.mubr.f32.mxu0 0.0
        %2090 = vmatmul.mubr.f32.gmra.mxu0 %v508
        %v2091 = vpop.f32.mrf.mxu0
        %v2092 = vadd.f32 0.0, %v2091
        %v2093 = vpop.f32.mrf.mxu0
        %2094 = vmatprep.mubr.f32.mxu0 0.0
        %2095 = vmatmul.mubr.f32.gmra.mxu0 %v511
        %v2096 = vpop.f32.mrf.mxu0
        %v2097 = vadd.f32 0.0, %v2096
        %v2098 = vpop.f32.mrf.mxu0
        %2099 = vmatprep.mubr.f32.mxu0 0.0
        %2100 = vmatmul.mubr.f32.gmra.mxu0 %v514
        %v2101 = vpop.f32.mrf.mxu0
        %v2102 = vadd.f32 0.0, %v2101
        %v2103 = vpop.f32.mrf.mxu0
        %2104 = vmatprep.mubr.f32.mxu0 0.0
        %2105 = vmatmul.mubr.f32.gmra.mxu0 %v517
        %v2106 = vpop.f32.mrf.mxu0
        %v2107 = vadd.f32 0.0, %v2106
        %v2108 = vpop.f32.mrf.mxu0
        %2109 = vmatprep.mubr.f32.mxu0 0.0
        %2110 = vmatmul.mubr.f32.gmra.mxu0 %v520
        %v2111 = vpop.f32.mrf.mxu0
        %v2112 = vadd.f32 0.0, %v2111
        %v2113 = vpop.f32.mrf.mxu0
        %2114 = vmatprep.mubr.f32.mxu0 0.0
        %2115 = vmatmul.mubr.f32.gmra.mxu0 %v523
        %v2116 = vpop.f32.mrf.mxu0
        %v2117 = vadd.f32 0.0, %v2116
        %v2118 = vpop.f32.mrf.mxu0
        %2119 = vmatprep.mubr.f32.mxu0 0.0
        %2120 = vmatmul.mubr.f32.gmra.mxu0 %v526
        %v2121 = vpop.f32.mrf.mxu0
        %v2122 = vadd.f32 0.0, %v2121
        %v2123 = vpop.f32.mrf.mxu0
        %2124 = vmatprep.mubr.f32.mxu0 0.0
        %2125 = vmatmul.mubr.f32.gmra.mxu0 %v529
        %v2126 = vpop.f32.mrf.mxu0
        %v2127 = vadd.f32 0.0, %v2126
        %v2128 = vpop.f32.mrf.mxu0
        %2129 = vmatprep.mubr.f32.mxu0 0.0
        %2130 = vmatmul.mubr.f32.gmra.mxu0 %v532
        %v2131 = vpop.f32.mrf.mxu0
        %v2132 = vadd.f32 0.0, %v2131
        %v2133 = vpop.f32.mrf.mxu0
        %2134 = vmatprep.mubr.f32.mxu0 0.0
        %2135 = vmatmul.mubr.f32.gmra.mxu0 %v535
        %v2136 = vpop.f32.mrf.mxu0
        %v2137 = vadd.f32 0.0, %v2136
        %v2138 = vpop.f32.mrf.mxu0
        %2139 = vmatprep.mubr.f32.mxu0 0.0
        %2140 = vmatmul.mubr.f32.gmra.mxu0 %v538
        %v2141 = vpop.f32.mrf.mxu0
        %v2142 = vadd.f32 0.0, %v2141
        %v2143 = vpop.f32.mrf.mxu0
        %2144 = vmatprep.mubr.f32.mxu0 0.0
        %2145 = vmatmul.mubr.f32.gmra.mxu0 %v541
        %v2146 = vpop.f32.mrf.mxu0
        %v2147 = vadd.f32 0.0, %v2146
        %v2148 = vpop.f32.mrf.mxu0
        %2149 = vmatprep.mubr.f32.mxu0 0.0
        %2150 = vmatmul.mubr.f32.gmra.mxu0 %v544
        %v2151 = vpop.f32.mrf.mxu0
        %v2152 = vadd.f32 0.0, %v2151
        %v2153 = vpop.f32.mrf.mxu0
        %2154 = vmatprep.mubr.f32.mxu0 0.0
        %2155 = vmatmul.mubr.f32.gmra.mxu0 %v547
        %v2156 = vpop.f32.mrf.mxu0
        %v2157 = vadd.f32 0.0, %v2156
        %v2158 = vpop.f32.mrf.mxu0
        %2159 = vmatprep.mubr.f32.mxu0 0.0
        %2160 = vmatmul.mubr.f32.gmra.mxu0 %v550
        %v2161 = vpop.f32.mrf.mxu0
        %v2162 = vadd.f32 0.0, %v2161
        %v2163 = vpop.f32.mrf.mxu0
        %2164 = vmatprep.mubr.f32.mxu0 0.0
        %2165 = vmatmul.mubr.f32.gmra.mxu0 %v553
        %v2166 = vpop.f32.mrf.mxu0
        %v2167 = vadd.f32 0.0, %v2166
        %v2168 = vpop.f32.mrf.mxu0
        %2169 = vmatprep.mubr.f32.mxu0 0.0
        %2170 = vmatmul.mubr.f32.gmra.mxu0 %v556
        %v2171 = vpop.f32.mrf.mxu0
        %v2172 = vadd.f32 0.0, %v2171
        %v2173 = vpop.f32.mrf.mxu0
        %2174 = vmatprep.mubr.f32.mxu0 0.0
        %2175 = vmatmul.mubr.f32.gmra.mxu0 %v559
        %v2176 = vpop.f32.mrf.mxu0
        %v2177 = vadd.f32 0.0, %v2176
        %v2178 = vpop.f32.mrf.mxu0
        %2179 = vmatprep.mubr.f32.mxu0 0.0
        %2180 = vmatmul.mubr.f32.gmra.mxu0 %v562
        %v2181 = vpop.f32.mrf.mxu0
        %v2182 = vadd.f32 0.0, %v2181
        %v2183 = vpop.f32.mrf.mxu0
        %2184 = vmatprep.mubr.f32.mxu0 0.0
        %2185 = vmatmul.mubr.f32.gmra.mxu0 %v565
        %v2186 = vpop.f32.mrf.mxu0
        %v2187 = vadd.f32 0.0, %v2186
        %v2188 = vpop.f32.mrf.mxu0
        %2189 = vmatprep.mubr.f32.mxu0 0.0
        %2190 = vmatmul.mubr.f32.gmra.mxu0 %v568
        %v2191 = vpop.f32.mrf.mxu0
        %v2192 = vadd.f32 0.0, %v2191
        %v2193 = vpop.f32.mrf.mxu0
        %2194 = vdwg.mxu0
        %s2195 = scalar_lea.vmem %s204, 1152 [#allocation7]
        %2196 = vst [vmem:[%s2195] sm:$0xff] %v1604
        %2197 = vst [vmem:[%s2195 + $0x8] sm:$0xff] %v1606
        %2198 = vst [vmem:[%s2195 + $0x10] sm:$0xff] %v1957
        %2199 = vst [vmem:[%s2195 + $0x18] sm:$0xff] %v1610
        %2200 = vst [vmem:[%s2195 + $0x20] sm:$0xff] %v1612
        %2201 = vst [vmem:[%s2195 + $0x28] sm:$0xff] %v1962
        %2202 = vst [vmem:[%s2195 + $0x30] sm:$0xff] %v1616
        %2203 = vst [vmem:[%s2195 + $0x38] sm:$0xff] %v1618
        %2204 = vst [vmem:[%s2195 + $0x40] sm:$0xff] %v1967
        %2205 = vst [vmem:[%s2195 + $0x48] sm:$0xff] %v1622
        %2206 = vst [vmem:[%s2195 + $0x50] sm:$0xff] %v1624
        %2207 = vst [vmem:[%s2195 + $0x58] sm:$0xff] %v1972
        %2208 = vst [vmem:[%s2195 + $0x60] sm:$0xff] %v1628
        %2209 = vst [vmem:[%s2195 + $0x68] sm:$0xff] %v1630
        %2210 = vst [vmem:[%s2195 + $0x70] sm:$0xff] %v1977
        %2211 = vst [vmem:[%s2195 + $0x78] sm:$0xff] %v1634
        %2212 = vst [vmem:[%s2195 + $0x80] sm:$0xff] %v1636
        %2213 = vst [vmem:[%s2195 + $0x88] sm:$0xff] %v1982
        %2214 = vst [vmem:[%s2195 + $0x90] sm:$0xff] %v1640
        %2215 = vst [vmem:[%s2195 + $0x98] sm:$0xff] %v1642
        %2216 = vst [vmem:[%s2195 + $0xa0] sm:$0xff] %v1987
        %2217 = vst [vmem:[%s2195 + $0xa8] sm:$0xff] %v1646
        %2218 = vst [vmem:[%s2195 + $0xb0] sm:$0xff] %v1648
        %2219 = vst [vmem:[%s2195 + $0xb8] sm:$0xff] %v1992
        %2220 = vst [vmem:[%s2195 + $0xc0] sm:$0xff] %v1652
        %2221 = vst [vmem:[%s2195 + $0xc8] sm:$0xff] %v1654
        %2222 = vst [vmem:[%s2195 + $0xd0] sm:$0xff] %v1997
        %2223 = vst [vmem:[%s2195 + $0xd8] sm:$0xff] %v1658
        %2224 = vst [vmem:[%s2195 + $0xe0] sm:$0xff] %v1660
        %2225 = vst [vmem:[%s2195 + $0xe8] sm:$0xff] %v2002
        %2226 = vst [vmem:[%s2195 + $0xf0] sm:$0xff] %v1664
        %2227 = vst [vmem:[%s2195 + $0xf8] sm:$0xff] %v1666
        %2228 = vst [vmem:[%s2195 + $0x100] sm:$0xff] %v2007
        %2229 = vst [vmem:[%s2195 + $0x108] sm:$0xff] %v1670
        %2230 = vst [vmem:[%s2195 + $0x110] sm:$0xff] %v1672
        %2231 = vst [vmem:[%s2195 + $0x118] sm:$0xff] %v2012
        %2232 = vst [vmem:[%s2195 + $0x120] sm:$0xff] %v1676
        %2233 = vst [vmem:[%s2195 + $0x128] sm:$0xff] %v1678
        %2234 = vst [vmem:[%s2195 + $0x130] sm:$0xff] %v2017
        %2235 = vst [vmem:[%s2195 + $0x138] sm:$0xff] %v1682
        %2236 = vst [vmem:[%s2195 + $0x140] sm:$0xff] %v1684
        %2237 = vst [vmem:[%s2195 + $0x148] sm:$0xff] %v2022
        %2238 = vst [vmem:[%s2195 + $0x150] sm:$0xff] %v1688
        %2239 = vst [vmem:[%s2195 + $0x158] sm:$0xff] %v1690
        %2240 = vst [vmem:[%s2195 + $0x160] sm:$0xff] %v2027
        %2241 = vst [vmem:[%s2195 + $0x168] sm:$0xff] %v1694
        %2242 = vst [vmem:[%s2195 + $0x170] sm:$0xff] %v1696
        %2243 = vst [vmem:[%s2195 + $0x178] sm:$0xff] %v2032
        %2244 = vst [vmem:[%s2195 + $0x180] sm:$0xff] %v1700
        %2245 = vst [vmem:[%s2195 + $0x188] sm:$0xff] %v1702
        %2246 = vst [vmem:[%s2195 + $0x190] sm:$0xff] %v2037
        %2247 = vst [vmem:[%s2195 + $0x198] sm:$0xff] %v1706
        %2248 = vst [vmem:[%s2195 + $0x1a0] sm:$0xff] %v1708
        %2249 = vst [vmem:[%s2195 + $0x1a8] sm:$0xff] %v2042
        %2250 = vst [vmem:[%s2195 + $0x1b0] sm:$0xff] %v1712
        %2251 = vst [vmem:[%s2195 + $0x1b8] sm:$0xff] %v1714
        %2252 = vst [vmem:[%s2195 + $0x1c0] sm:$0xff] %v2047
        %2253 = vst [vmem:[%s2195 + $0x1c8] sm:$0xff] %v1718
        %2254 = vst [vmem:[%s2195 + $0x1d0] sm:$0xff] %v1720
        %2255 = vst [vmem:[%s2195 + $0x1d8] sm:$0xff] %v2052
        %2256 = vst [vmem:[%s2195 + $0x1e0] sm:$0xff] %v1724
        %2257 = vst [vmem:[%s2195 + $0x1e8] sm:$0xff] %v1726
        %2258 = vst [vmem:[%s2195 + $0x1f0] sm:$0xff] %v2057
        %2259 = vst [vmem:[%s2195 + $0x1f8] sm:$0xff] %v1730
        %2260 = vst [vmem:[%s2195 + $0x200] sm:$0xff] %v1732
        %2261 = vst [vmem:[%s2195 + $0x208] sm:$0xff] %v2062
        %2262 = vst [vmem:[%s2195 + $0x210] sm:$0xff] %v1736
        %2263 = vst [vmem:[%s2195 + $0x218] sm:$0xff] %v1738
        %2264 = vst [vmem:[%s2195 + $0x220] sm:$0xff] %v2067
        %2265 = vst [vmem:[%s2195 + $0x228] sm:$0xff] %v1742
        %2266 = vst [vmem:[%s2195 + $0x230] sm:$0xff] %v1744
        %2267 = vst [vmem:[%s2195 + $0x238] sm:$0xff] %v2072
        %2268 = vst [vmem:[%s2195 + $0x240] sm:$0xff] %v1748
        %2269 = vst [vmem:[%s2195 + $0x248] sm:$0xff] %v1750
        %2270 = vst [vmem:[%s2195 + $0x250] sm:$0xff] %v2077
        %2271 = vst [vmem:[%s2195 + $0x258] sm:$0xff] %v1754
        %2272 = vst [vmem:[%s2195 + $0x260] sm:$0xff] %v1756
        %2273 = vst [vmem:[%s2195 + $0x268] sm:$0xff] %v2082
        %2274 = vst [vmem:[%s2195 + $0x270] sm:$0xff] %v1760
        %2275 = vst [vmem:[%s2195 + $0x278] sm:$0xff] %v1762
        %2276 = vst [vmem:[%s2195 + $0x280] sm:$0xff] %v2087
        %2277 = vst [vmem:[%s2195 + $0x288] sm:$0xff] %v1766
        %2278 = vst [vmem:[%s2195 + $0x290] sm:$0xff] %v1768
        %2279 = vst [vmem:[%s2195 + $0x298] sm:$0xff] %v2092
        %2280 = vst [vmem:[%s2195 + $0x2a0] sm:$0xff] %v1772
        %2281 = vst [vmem:[%s2195 + $0x2a8] sm:$0xff] %v1774
        %2282 = vst [vmem:[%s2195 + $0x2b0] sm:$0xff] %v2097
        %2283 = vst [vmem:[%s2195 + $0x2b8] sm:$0xff] %v1778
        %2284 = vst [vmem:[%s2195 + $0x2c0] sm:$0xff] %v1780
        %2285 = vst [vmem:[%s2195 + $0x2c8] sm:$0xff] %v2102
        %2286 = vst [vmem:[%s2195 + $0x2d0] sm:$0xff] %v1784
        %2287 = vst [vmem:[%s2195 + $0x2d8] sm:$0xff] %v1786
        %2288 = vst [vmem:[%s2195 + $0x2e0] sm:$0xff] %v2107
        %2289 = vst [vmem:[%s2195 + $0x2e8] sm:$0xff] %v1790
        %2290 = vst [vmem:[%s2195 + $0x2f0] sm:$0xff] %v1792
        %2291 = vst [vmem:[%s2195 + $0x2f8] sm:$0xff] %v2112
        %2292 = vst [vmem:[%s2195 + $0x300] sm:$0xff] %v1796
        %2293 = vst [vmem:[%s2195 + $0x308] sm:$0xff] %v1798
        %2294 = vst [vmem:[%s2195 + $0x310] sm:$0xff] %v2117
        %2295 = vst [vmem:[%s2195 + $0x318] sm:$0xff] %v1802
        %2296 = vst [vmem:[%s2195 + $0x320] sm:$0xff] %v1804
        %2297 = vst [vmem:[%s2195 + $0x328] sm:$0xff] %v2122
        %2298 = vst [vmem:[%s2195 + $0x330] sm:$0xff] %v1808
        %2299 = vst [vmem:[%s2195 + $0x338] sm:$0xff] %v1810
        %2300 = vst [vmem:[%s2195 + $0x340] sm:$0xff] %v2127
        %2301 = vst [vmem:[%s2195 + $0x348] sm:$0xff] %v1814
        %2302 = vst [vmem:[%s2195 + $0x350] sm:$0xff] %v1816
        %2303 = vst [vmem:[%s2195 + $0x358] sm:$0xff] %v2132
        %2304 = vst [vmem:[%s2195 + $0x360] sm:$0xff] %v1820
        %2305 = vst [vmem:[%s2195 + $0x368] sm:$0xff] %v1822
        %2306 = vst [vmem:[%s2195 + $0x370] sm:$0xff] %v2137
        %2307 = vst [vmem:[%s2195 + $0x378] sm:$0xff] %v1826
        %2308 = vst [vmem:[%s2195 + $0x380] sm:$0xff] %v1828
        %2309 = vst [vmem:[%s2195 + $0x388] sm:$0xff] %v2142
        %2310 = vst [vmem:[%s2195 + $0x390] sm:$0xff] %v1832
        %2311 = vst [vmem:[%s2195 + $0x398] sm:$0xff] %v1834
        %2312 = vst [vmem:[%s2195 + $0x3a0] sm:$0xff] %v2147
        %2313 = vst [vmem:[%s2195 + $0x3a8] sm:$0xff] %v1838
        %2314 = vst [vmem:[%s2195 + $0x3b0] sm:$0xff] %v1840
        %2315 = vst [vmem:[%s2195 + $0x3b8] sm:$0xff] %v2152
        %2316 = vst [vmem:[%s2195 + $0x3c0] sm:$0xff] %v1844
        %2317 = vst [vmem:[%s2195 + $0x3c8] sm:$0xff] %v1846
        %2318 = vst [vmem:[%s2195 + $0x3d0] sm:$0xff] %v2157
        %2319 = vst [vmem:[%s2195 + $0x3d8] sm:$0xff] %v1850
        %2320 = vst [vmem:[%s2195 + $0x3e0] sm:$0xff] %v1852
        %2321 = vst [vmem:[%s2195 + $0x3e8] sm:$0xff] %v2162
        %2322 = vst [vmem:[%s2195 + $0x3f0] sm:$0xff] %v1856
        %2323 = vst [vmem:[%s2195 + $0x3f8] sm:$0xff] %v1858
        %2324 = vst [vmem:[%s2195 + $0x400] sm:$0xff] %v2167
        %2325 = vst [vmem:[%s2195 + $0x408] sm:$0xff] %v1862
        %2326 = vst [vmem:[%s2195 + $0x410] sm:$0xff] %v1864
        %2327 = vst [vmem:[%s2195 + $0x418] sm:$0xff] %v2172
        %2328 = vst [vmem:[%s2195 + $0x420] sm:$0xff] %v1868
        %2329 = vst [vmem:[%s2195 + $0x428] sm:$0xff] %v1870
        %2330 = vst [vmem:[%s2195 + $0x430] sm:$0xff] %v2177
        %2331 = vst [vmem:[%s2195 + $0x438] sm:$0xff] %v1874
        %2332 = vst [vmem:[%s2195 + $0x440] sm:$0xff] %v1876
        %2333 = vst [vmem:[%s2195 + $0x448] sm:$0xff] %v2182
        %2334 = vst [vmem:[%s2195 + $0x450] sm:$0xff] %v1880
        %2335 = vst [vmem:[%s2195 + $0x458] sm:$0xff] %v1882
        %2336 = vst [vmem:[%s2195 + $0x460] sm:$0xff] %v2187
        %2337 = vst [vmem:[%s2195 + $0x468] sm:$0xff] %v1886
        %2338 = vst [vmem:[%s2195 + $0x470] sm:$0xff] %v1888
        %2339 = vst [vmem:[%s2195 + $0x478] sm:$0xff] %v2192
        %s2340 = scalar_lea.vmem %s178, 32 [#allocation2]
        %v2341 = vld [vmem:[%s2340] sm:$0xff]
        %v2342 = vld [vmem:[%s2340 + $0x8] sm:$0xff]
        %v2343 = vmul.f32 %v2341, 2.0
        %v2344 = vmul.f32 %v2342, 2.0
        %v2345 = vsub.f32 %v2343, 1.0
        %v2346 = vsub.f32 %v2344, 1.0
        %v2348 = vsel %vm267, %v2345, 0
        %v2351 = vsel %vm267, %v2346, 0
        %2353 = vmatprep.subr.mxu0 0.0
        %2354 = vmatpush1.msra.mxu0 0.0
        %2355 = vmatprep.subr.mxu0 0.0
        %2356 = vmatpush1.msra.mxu0 0.0
        %2357 = vmatprep.subr.mxu0 0.0
        %2358 = vmatpush1.msra.mxu0 0.0
        %2359 = vmatprep.subr.mxu0 0.0
        %2360 = vmatpush1.msra.mxu0 0.0
        %2361 = vmatprep.subr.mxu0 0.0
        %2362 = vmatpush1.msra.mxu0 0.0
        %2363 = vmatprep.subr.mxu0 0.0
        %2364 = vmatpush1.msra.mxu0 0.0
        %2365 = vmatprep.subr.mxu0 0.0
        %2366 = vmatpush1.msra.mxu0 0.0
        %2367 = vmatprep.subr.mxu0 0.0
        %2368 = vmatpush1.msra.mxu0 0.0
        %2369 = vmatprep.subr.mxu0 0.0
        %2370 = vmatpush1.msra.mxu0 0.0
        %2371 = vmatprep.subr.mxu0 0.0
        %2372 = vmatpush1.msra.mxu0 0.0
        %2373 = vmatprep.subr.mxu0 0.0
        %2374 = vmatpush1.msra.mxu0 0.0
        %2375 = vmatprep.subr.mxu0 0.0
        %2376 = vmatpush1.msra.mxu0 0.0
        %2377 = vmatprep.subr.mxu0 0.0
        %2378 = vmatpush1.msra.mxu0 0.0
        %2379 = vmatprep.subr.mxu0 0.0
        %2380 = vmatpush1.msra.mxu0 0.0
        %2381 = vmatprep.subr.mxu0 %v259
        %2382 = vmatpush1.msra.mxu0 %v258
        %2383 = vmatprep.subr.mxu0 %v256
        %2384 = vmatpush1.msra.mxu0 %v255
        %2385 = vmatprep.subr.mxu0 0.0
        %2386 = vmatpush2.msra.mxu0 0.0
        %2387 = vmatprep.subr.mxu0 0.0
        %2388 = vmatpush2.msra.mxu0 0.0
        %2389 = vmatprep.subr.mxu0 0.0
        %2390 = vmatpush2.msra.mxu0 0.0
        %2391 = vmatprep.subr.mxu0 0.0
        %2392 = vmatpush2.msra.mxu0 0.0
        %2393 = vmatprep.subr.mxu0 0.0
        %2394 = vmatpush2.msra.mxu0 0.0
        %2395 = vmatprep.subr.mxu0 0.0
        %2396 = vmatpush2.msra.mxu0 0.0
        %2397 = vmatprep.subr.mxu0 0.0
        %2398 = vmatpush2.msra.mxu0 0.0
        %2399 = vmatprep.subr.mxu0 0.0
        %2400 = vmatpush2.msra.mxu0 0.0
        %2401 = vmatprep.subr.mxu0 0.0
        %2402 = vmatpush2.msra.mxu0 0.0
        %2403 = vmatprep.subr.mxu0 0.0
        %2404 = vmatpush2.msra.mxu0 0.0
        %2405 = vmatprep.subr.mxu0 0.0
        %2406 = vmatpush2.msra.mxu0 0.0
        %2407 = vmatprep.subr.mxu0 0.0
        %2408 = vmatpush2.msra.mxu0 0.0
        %2409 = vmatprep.subr.mxu0 0.0
        %2410 = vmatpush2.msra.mxu0 0.0
        %2411 = vmatprep.subr.mxu0 0.0
        %2412 = vmatpush2.msra.mxu0 0.0
        %2413 = vmatprep.subr.mxu0 0.0
        %2414 = vmatpush2.msra.mxu0 0.0
        %2415 = vmatprep.subr.mxu0 0.0
        %2416 = vmatpush2.msra.mxu0 0.0
        %2417 = vmatprep.mubr.f32.mxu0 0.0
        %2418 = vmatmul.mubr.f32.gmra.mxu0 %v2348
        %v2419 = vpop.f32.mrf.mxu0
        %v2420 = vadd.f32 0.0, %v2419
        %v2421 = vpop.f32.mrf.mxu0
        %v2422 = vadd.f32 0.0, %v2421
        %2423 = vmatprep.mubr.f32.mxu0 0.0
        %2424 = vmatmul.mubr.f32.gmra.mxu0 %v2351
        %v2425 = vpop.f32.mrf.mxu0
        %v2426 = vadd.f32 0.0, %v2425
        %v2427 = vpop.f32.mrf.mxu0
        %v2428 = vadd.f32 0.0, %v2427
        %2429 = vdwg.mxu0
        %2430 = vmatprep.subr.mxu0 0.0
        %2431 = vmatpush1.msra.mxu0 0.0
        %2432 = vmatprep.subr.mxu0 0.0
        %2433 = vmatpush1.msra.mxu0 0.0
        %2434 = vmatprep.subr.mxu0 0.0
        %2435 = vmatpush1.msra.mxu0 0.0
        %2436 = vmatprep.subr.mxu0 0.0
        %2437 = vmatpush1.msra.mxu0 0.0
        %2438 = vmatprep.subr.mxu0 0.0
        %2439 = vmatpush1.msra.mxu0 0.0
        %2440 = vmatprep.subr.mxu0 0.0
        %2441 = vmatpush1.msra.mxu0 0.0
        %2442 = vmatprep.subr.mxu0 0.0
        %2443 = vmatpush1.msra.mxu0 0.0
        %2444 = vmatprep.subr.mxu0 0.0
        %2445 = vmatpush1.msra.mxu0 0.0
        %2446 = vmatprep.subr.mxu0 0.0
        %2447 = vmatpush1.msra.mxu0 0.0
        %2448 = vmatprep.subr.mxu0 0.0
        %2449 = vmatpush1.msra.mxu0 0.0
        %2450 = vmatprep.subr.mxu0 0.0
        %2451 = vmatpush1.msra.mxu0 0.0
        %2452 = vmatprep.subr.mxu0 0.0
        %2453 = vmatpush1.msra.mxu0 0.0
        %2454 = vmatprep.subr.mxu0 0.0
        %2455 = vmatpush1.msra.mxu0 0.0
        %2456 = vmatprep.subr.mxu0 0.0
        %2457 = vmatpush1.msra.mxu0 0.0
        %2458 = vmatprep.subr.mxu0 0.0
        %2459 = vmatpush1.msra.mxu0 %v260
        %2460 = vmatprep.subr.mxu0 0.0
        %2461 = vmatpush1.msra.mxu0 %v257
        %2462 = vmatprep.subr.mxu0 0.0
        %2463 = vmatpush2.msra.mxu0 0.0
        %2464 = vmatprep.subr.mxu0 0.0
        %2465 = vmatpush2.msra.mxu0 0.0
        %2466 = vmatprep.subr.mxu0 0.0
        %2467 = vmatpush2.msra.mxu0 0.0
        %2468 = vmatprep.subr.mxu0 0.0
        %2469 = vmatpush2.msra.mxu0 0.0
        %2470 = vmatprep.subr.mxu0 0.0
        %2471 = vmatpush2.msra.mxu0 0.0
        %2472 = vmatprep.subr.mxu0 0.0
        %2473 = vmatpush2.msra.mxu0 0.0
        %2474 = vmatprep.subr.mxu0 0.0
        %2475 = vmatpush2.msra.mxu0 0.0
        %2476 = vmatprep.subr.mxu0 0.0
        %2477 = vmatpush2.msra.mxu0 0.0
        %2478 = vmatprep.subr.mxu0 0.0
        %2479 = vmatpush2.msra.mxu0 0.0
        %2480 = vmatprep.subr.mxu0 0.0
        %2481 = vmatpush2.msra.mxu0 0.0
        %2482 = vmatprep.subr.mxu0 0.0
        %2483 = vmatpush2.msra.mxu0 0.0
        %2484 = vmatprep.subr.mxu0 0.0
        %2485 = vmatpush2.msra.mxu0 0.0
        %2486 = vmatprep.subr.mxu0 0.0
        %2487 = vmatpush2.msra.mxu0 0.0
        %2488 = vmatprep.subr.mxu0 0.0
        %2489 = vmatpush2.msra.mxu0 0.0
        %2490 = vmatprep.subr.mxu0 0.0
        %2491 = vmatpush2.msra.mxu0 0.0
        %2492 = vmatprep.subr.mxu0 0.0
        %2493 = vmatpush2.msra.mxu0 0.0
        %2494 = vmatprep.mubr.f32.mxu0 0.0
        %2495 = vmatmul.mubr.f32.gmra.mxu0 %v2348
        %v2496 = vpop.f32.mrf.mxu0
        %v2497 = vadd.f32 0.0, %v2496
        %v2498 = vpop.f32.mrf.mxu0
        %2499 = vmatprep.mubr.f32.mxu0 0.0
        %2500 = vmatmul.mubr.f32.gmra.mxu0 %v2351
        %v2501 = vpop.f32.mrf.mxu0
        %v2502 = vadd.f32 0.0, %v2501
        %v2503 = vpop.f32.mrf.mxu0
        %2504 = vdwg.mxu0
        %2505 = vmatprep.subr.mxu0 0.0
        %2506 = vmatpush1.msra.mxu0 0.0
        %2507 = vmatprep.subr.mxu0 0.0
        %2508 = vmatpush1.msra.mxu0 0.0
        %2509 = vmatprep.subr.mxu0 0.0
        %2510 = vmatpush1.msra.mxu0 0.0
        %2511 = vmatprep.subr.mxu0 0.0
        %2512 = vmatpush1.msra.mxu0 0.0
        %2513 = vmatprep.subr.mxu0 0.0
        %2514 = vmatpush1.msra.mxu0 0.0
        %2515 = vmatprep.subr.mxu0 0.0
        %2516 = vmatpush1.msra.mxu0 0.0
        %2517 = vmatprep.subr.mxu0 0.0
        %2518 = vmatpush1.msra.mxu0 0.0
        %2519 = vmatprep.subr.mxu0 0.0
        %2520 = vmatpush1.msra.mxu0 0.0
        %2521 = vmatprep.subr.mxu0 0.0
        %2522 = vmatpush1.msra.mxu0 0.0
        %2523 = vmatprep.subr.mxu0 0.0
        %2524 = vmatpush1.msra.mxu0 0.0
        %2525 = vmatprep.subr.mxu0 0.0
        %2526 = vmatpush1.msra.mxu0 0.0
        %2527 = vmatprep.subr.mxu0 0.0
        %2528 = vmatpush1.msra.mxu0 0.0
        %2529 = vmatprep.subr.mxu0 0.0
        %2530 = vmatpush1.msra.mxu0 0.0
        %2531 = vmatprep.subr.mxu0 0.0
        %2532 = vmatpush1.msra.mxu0 0.0
        %2533 = vmatprep.subr.mxu0 %v2428
        %2534 = vmatpush1.msra.mxu0 %v2426
        %2535 = vmatprep.subr.mxu0 %v2422
        %2536 = vmatpush1.msra.mxu0 %v2420
        %2537 = vmatprep.subr.mxu0 0.0
        %2538 = vmatpush2.msra.mxu0 0.0
        %2539 = vmatprep.subr.mxu0 0.0
        %2540 = vmatpush2.msra.mxu0 0.0
        %2541 = vmatprep.subr.mxu0 0.0
        %2542 = vmatpush2.msra.mxu0 0.0
        %2543 = vmatprep.subr.mxu0 0.0
        %2544 = vmatpush2.msra.mxu0 0.0
        %2545 = vmatprep.subr.mxu0 0.0
        %2546 = vmatpush2.msra.mxu0 0.0
        %2547 = vmatprep.subr.mxu0 0.0
        %2548 = vmatpush2.msra.mxu0 0.0
        %2549 = vmatprep.subr.mxu0 0.0
        %2550 = vmatpush2.msra.mxu0 0.0
        %2551 = vmatprep.subr.mxu0 0.0
        %2552 = vmatpush2.msra.mxu0 0.0
        %2553 = vmatprep.subr.mxu0 0.0
        %2554 = vmatpush2.msra.mxu0 0.0
        %2555 = vmatprep.subr.mxu0 0.0
        %2556 = vmatpush2.msra.mxu0 0.0
        %2557 = vmatprep.subr.mxu0 0.0
        %2558 = vmatpush2.msra.mxu0 0.0
        %2559 = vmatprep.subr.mxu0 0.0
        %2560 = vmatpush2.msra.mxu0 0.0
        %2561 = vmatprep.subr.mxu0 0.0
        %2562 = vmatpush2.msra.mxu0 0.0
        %2563 = vmatprep.subr.mxu0 0.0
        %2564 = vmatpush2.msra.mxu0 0.0
        %2565 = vmatprep.subr.mxu0 0.0
        %2566 = vmatpush2.msra.mxu0 0.0
        %2567 = vmatprep.subr.mxu0 0.0
        %2568 = vmatpush2.msra.mxu0 0.0
        %2569 = vmatprep.mubr.f32.mxu0 0.0
        %2570 = vmatmul.mubr.f32.gmra.mxu0 %v427
        %v2571 = vpop.f32.mrf.mxu0
        %v2572 = vadd.f32 0.0, %v2571
        %v2573 = vpop.f32.mrf.mxu0
        %v2574 = vadd.f32 0.0, %v2573
        %2575 = vmatprep.mubr.f32.mxu0 0.0
        %2576 = vmatmul.mubr.f32.gmra.mxu0 %v430
        %v2577 = vpop.f32.mrf.mxu0
        %v2578 = vadd.f32 0.0, %v2577
        %v2579 = vpop.f32.mrf.mxu0
        %v2580 = vadd.f32 0.0, %v2579
        %2581 = vmatprep.mubr.f32.mxu0 0.0
        %2582 = vmatmul.mubr.f32.gmra.mxu0 %v433
        %v2583 = vpop.f32.mrf.mxu0
        %v2584 = vadd.f32 0.0, %v2583
        %v2585 = vpop.f32.mrf.mxu0
        %v2586 = vadd.f32 0.0, %v2585
        %2587 = vmatprep.mubr.f32.mxu0 0.0
        %2588 = vmatmul.mubr.f32.gmra.mxu0 %v436
        %v2589 = vpop.f32.mrf.mxu0
        %v2590 = vadd.f32 0.0, %v2589
        %v2591 = vpop.f32.mrf.mxu0
        %v2592 = vadd.f32 0.0, %v2591
        %2593 = vmatprep.mubr.f32.mxu0 0.0
        %2594 = vmatmul.mubr.f32.gmra.mxu0 %v439
        %v2595 = vpop.f32.mrf.mxu0
        %v2596 = vadd.f32 0.0, %v2595
        %v2597 = vpop.f32.mrf.mxu0
        %v2598 = vadd.f32 0.0, %v2597
        %2599 = vmatprep.mubr.f32.mxu0 0.0
        %2600 = vmatmul.mubr.f32.gmra.mxu0 %v442
        %v2601 = vpop.f32.mrf.mxu0
        %v2602 = vadd.f32 0.0, %v2601
        %v2603 = vpop.f32.mrf.mxu0
        %v2604 = vadd.f32 0.0, %v2603
        %2605 = vmatprep.mubr.f32.mxu0 0.0
        %2606 = vmatmul.mubr.f32.gmra.mxu0 %v445
        %v2607 = vpop.f32.mrf.mxu0
        %v2608 = vadd.f32 0.0, %v2607
        %v2609 = vpop.f32.mrf.mxu0
        %v2610 = vadd.f32 0.0, %v2609
        %2611 = vmatprep.mubr.f32.mxu0 0.0
        %2612 = vmatmul.mubr.f32.gmra.mxu0 %v448
        %v2613 = vpop.f32.mrf.mxu0
        %v2614 = vadd.f32 0.0, %v2613
        %v2615 = vpop.f32.mrf.mxu0
        %v2616 = vadd.f32 0.0, %v2615
        %2617 = vmatprep.mubr.f32.mxu0 0.0
        %2618 = vmatmul.mubr.f32.gmra.mxu0 %v451
        %v2619 = vpop.f32.mrf.mxu0
        %v2620 = vadd.f32 0.0, %v2619
        %v2621 = vpop.f32.mrf.mxu0
        %v2622 = vadd.f32 0.0, %v2621
        %2623 = vmatprep.mubr.f32.mxu0 0.0
        %2624 = vmatmul.mubr.f32.gmra.mxu0 %v454
        %v2625 = vpop.f32.mrf.mxu0
        %v2626 = vadd.f32 0.0, %v2625
        %v2627 = vpop.f32.mrf.mxu0
        %v2628 = vadd.f32 0.0, %v2627
        %2629 = vmatprep.mubr.f32.mxu0 0.0
        %2630 = vmatmul.mubr.f32.gmra.mxu0 %v457
        %v2631 = vpop.f32.mrf.mxu0
        %v2632 = vadd.f32 0.0, %v2631
        %v2633 = vpop.f32.mrf.mxu0
        %v2634 = vadd.f32 0.0, %v2633
        %2635 = vmatprep.mubr.f32.mxu0 0.0
        %2636 = vmatmul.mubr.f32.gmra.mxu0 %v460
        %v2637 = vpop.f32.mrf.mxu0
        %v2638 = vadd.f32 0.0, %v2637
        %v2639 = vpop.f32.mrf.mxu0
        %v2640 = vadd.f32 0.0, %v2639
        %2641 = vmatprep.mubr.f32.mxu0 0.0
        %2642 = vmatmul.mubr.f32.gmra.mxu0 %v463
        %v2643 = vpop.f32.mrf.mxu0
        %v2644 = vadd.f32 0.0, %v2643
        %v2645 = vpop.f32.mrf.mxu0
        %v2646 = vadd.f32 0.0, %v2645
        %2647 = vmatprep.mubr.f32.mxu0 0.0
        %2648 = vmatmul.mubr.f32.gmra.mxu0 %v466
        %v2649 = vpop.f32.mrf.mxu0
        %v2650 = vadd.f32 0.0, %v2649
        %v2651 = vpop.f32.mrf.mxu0
        %v2652 = vadd.f32 0.0, %v2651
        %2653 = vmatprep.mubr.f32.mxu0 0.0
        %2654 = vmatmul.mubr.f32.gmra.mxu0 %v469
        %v2655 = vpop.f32.mrf.mxu0
        %v2656 = vadd.f32 0.0, %v2655
        %v2657 = vpop.f32.mrf.mxu0
        %v2658 = vadd.f32 0.0, %v2657
        %2659 = vmatprep.mubr.f32.mxu0 0.0
        %2660 = vmatmul.mubr.f32.gmra.mxu0 %v472
        %v2661 = vpop.f32.mrf.mxu0
        %v2662 = vadd.f32 0.0, %v2661
        %v2663 = vpop.f32.mrf.mxu0
        %v2664 = vadd.f32 0.0, %v2663
        %2665 = vmatprep.mubr.f32.mxu0 0.0
        %2666 = vmatmul.mubr.f32.gmra.mxu0 %v475
        %v2667 = vpop.f32.mrf.mxu0
        %v2668 = vadd.f32 0.0, %v2667
        %v2669 = vpop.f32.mrf.mxu0
        %v2670 = vadd.f32 0.0, %v2669
        %2671 = vmatprep.mubr.f32.mxu0 0.0
        %2672 = vmatmul.mubr.f32.gmra.mxu0 %v478
        %v2673 = vpop.f32.mrf.mxu0
        %v2674 = vadd.f32 0.0, %v2673
        %v2675 = vpop.f32.mrf.mxu0
        %v2676 = vadd.f32 0.0, %v2675
        %2677 = vmatprep.mubr.f32.mxu0 0.0
        %2678 = vmatmul.mubr.f32.gmra.mxu0 %v481
        %v2679 = vpop.f32.mrf.mxu0
        %v2680 = vadd.f32 0.0, %v2679
        %v2681 = vpop.f32.mrf.mxu0
        %v2682 = vadd.f32 0.0, %v2681
        %2683 = vmatprep.mubr.f32.mxu0 0.0
        %2684 = vmatmul.mubr.f32.gmra.mxu0 %v484
        %v2685 = vpop.f32.mrf.mxu0
        %v2686 = vadd.f32 0.0, %v2685
        %v2687 = vpop.f32.mrf.mxu0
        %v2688 = vadd.f32 0.0, %v2687
        %2689 = vmatprep.mubr.f32.mxu0 0.0
        %2690 = vmatmul.mubr.f32.gmra.mxu0 %v487
        %v2691 = vpop.f32.mrf.mxu0
        %v2692 = vadd.f32 0.0, %v2691
        %v2693 = vpop.f32.mrf.mxu0
        %v2694 = vadd.f32 0.0, %v2693
        %2695 = vmatprep.mubr.f32.mxu0 0.0
        %2696 = vmatmul.mubr.f32.gmra.mxu0 %v490
        %v2697 = vpop.f32.mrf.mxu0
        %v2698 = vadd.f32 0.0, %v2697
        %v2699 = vpop.f32.mrf.mxu0
        %v2700 = vadd.f32 0.0, %v2699
        %2701 = vmatprep.mubr.f32.mxu0 0.0
        %2702 = vmatmul.mubr.f32.gmra.mxu0 %v493
        %v2703 = vpop.f32.mrf.mxu0
        %v2704 = vadd.f32 0.0, %v2703
        %v2705 = vpop.f32.mrf.mxu0
        %v2706 = vadd.f32 0.0, %v2705
        %2707 = vmatprep.mubr.f32.mxu0 0.0
        %2708 = vmatmul.mubr.f32.gmra.mxu0 %v496
        %v2709 = vpop.f32.mrf.mxu0
        %v2710 = vadd.f32 0.0, %v2709
        %v2711 = vpop.f32.mrf.mxu0
        %v2712 = vadd.f32 0.0, %v2711
        %2713 = vmatprep.mubr.f32.mxu0 0.0
        %2714 = vmatmul.mubr.f32.gmra.mxu0 %v499
        %v2715 = vpop.f32.mrf.mxu0
        %v2716 = vadd.f32 0.0, %v2715
        %v2717 = vpop.f32.mrf.mxu0
        %v2718 = vadd.f32 0.0, %v2717
        %2719 = vmatprep.mubr.f32.mxu0 0.0
        %2720 = vmatmul.mubr.f32.gmra.mxu0 %v502
        %v2721 = vpop.f32.mrf.mxu0
        %v2722 = vadd.f32 0.0, %v2721
        %v2723 = vpop.f32.mrf.mxu0
        %v2724 = vadd.f32 0.0, %v2723
        %2725 = vmatprep.mubr.f32.mxu0 0.0
        %2726 = vmatmul.mubr.f32.gmra.mxu0 %v505
        %v2727 = vpop.f32.mrf.mxu0
        %v2728 = vadd.f32 0.0, %v2727
        %v2729 = vpop.f32.mrf.mxu0
        %v2730 = vadd.f32 0.0, %v2729
        %2731 = vmatprep.mubr.f32.mxu0 0.0
        %2732 = vmatmul.mubr.f32.gmra.mxu0 %v508
        %v2733 = vpop.f32.mrf.mxu0
        %v2734 = vadd.f32 0.0, %v2733
        %v2735 = vpop.f32.mrf.mxu0
        %v2736 = vadd.f32 0.0, %v2735
        %2737 = vmatprep.mubr.f32.mxu0 0.0
        %2738 = vmatmul.mubr.f32.gmra.mxu0 %v511
        %v2739 = vpop.f32.mrf.mxu0
        %v2740 = vadd.f32 0.0, %v2739
        %v2741 = vpop.f32.mrf.mxu0
        %v2742 = vadd.f32 0.0, %v2741
        %2743 = vmatprep.mubr.f32.mxu0 0.0
        %2744 = vmatmul.mubr.f32.gmra.mxu0 %v514
        %v2745 = vpop.f32.mrf.mxu0
        %v2746 = vadd.f32 0.0, %v2745
        %v2747 = vpop.f32.mrf.mxu0
        %v2748 = vadd.f32 0.0, %v2747
        %2749 = vmatprep.mubr.f32.mxu0 0.0
        %2750 = vmatmul.mubr.f32.gmra.mxu0 %v517
        %v2751 = vpop.f32.mrf.mxu0
        %v2752 = vadd.f32 0.0, %v2751
        %v2753 = vpop.f32.mrf.mxu0
        %v2754 = vadd.f32 0.0, %v2753
        %2755 = vmatprep.mubr.f32.mxu0 0.0
        %2756 = vmatmul.mubr.f32.gmra.mxu0 %v520
        %v2757 = vpop.f32.mrf.mxu0
        %v2758 = vadd.f32 0.0, %v2757
        %v2759 = vpop.f32.mrf.mxu0
        %v2760 = vadd.f32 0.0, %v2759
        %2761 = vmatprep.mubr.f32.mxu0 0.0
        %2762 = vmatmul.mubr.f32.gmra.mxu0 %v523
        %v2763 = vpop.f32.mrf.mxu0
        %v2764 = vadd.f32 0.0, %v2763
        %v2765 = vpop.f32.mrf.mxu0
        %v2766 = vadd.f32 0.0, %v2765
        %2767 = vmatprep.mubr.f32.mxu0 0.0
        %2768 = vmatmul.mubr.f32.gmra.mxu0 %v526
        %v2769 = vpop.f32.mrf.mxu0
        %v2770 = vadd.f32 0.0, %v2769
        %v2771 = vpop.f32.mrf.mxu0
        %v2772 = vadd.f32 0.0, %v2771
        %2773 = vmatprep.mubr.f32.mxu0 0.0
        %2774 = vmatmul.mubr.f32.gmra.mxu0 %v529
        %v2775 = vpop.f32.mrf.mxu0
        %v2776 = vadd.f32 0.0, %v2775
        %v2777 = vpop.f32.mrf.mxu0
        %v2778 = vadd.f32 0.0, %v2777
        %2779 = vmatprep.mubr.f32.mxu0 0.0
        %2780 = vmatmul.mubr.f32.gmra.mxu0 %v532
        %v2781 = vpop.f32.mrf.mxu0
        %v2782 = vadd.f32 0.0, %v2781
        %v2783 = vpop.f32.mrf.mxu0
        %v2784 = vadd.f32 0.0, %v2783
        %2785 = vmatprep.mubr.f32.mxu0 0.0
        %2786 = vmatmul.mubr.f32.gmra.mxu0 %v535
        %v2787 = vpop.f32.mrf.mxu0
        %v2788 = vadd.f32 0.0, %v2787
        %v2789 = vpop.f32.mrf.mxu0
        %v2790 = vadd.f32 0.0, %v2789
        %2791 = vmatprep.mubr.f32.mxu0 0.0
        %2792 = vmatmul.mubr.f32.gmra.mxu0 %v538
        %v2793 = vpop.f32.mrf.mxu0
        %v2794 = vadd.f32 0.0, %v2793
        %v2795 = vpop.f32.mrf.mxu0
        %v2796 = vadd.f32 0.0, %v2795
        %2797 = vmatprep.mubr.f32.mxu0 0.0
        %2798 = vmatmul.mubr.f32.gmra.mxu0 %v541
        %v2799 = vpop.f32.mrf.mxu0
        %v2800 = vadd.f32 0.0, %v2799
        %v2801 = vpop.f32.mrf.mxu0
        %v2802 = vadd.f32 0.0, %v2801
        %2803 = vmatprep.mubr.f32.mxu0 0.0
        %2804 = vmatmul.mubr.f32.gmra.mxu0 %v544
        %v2805 = vpop.f32.mrf.mxu0
        %v2806 = vadd.f32 0.0, %v2805
        %v2807 = vpop.f32.mrf.mxu0
        %v2808 = vadd.f32 0.0, %v2807
        %2809 = vmatprep.mubr.f32.mxu0 0.0
        %2810 = vmatmul.mubr.f32.gmra.mxu0 %v547
        %v2811 = vpop.f32.mrf.mxu0
        %v2812 = vadd.f32 0.0, %v2811
        %v2813 = vpop.f32.mrf.mxu0
        %v2814 = vadd.f32 0.0, %v2813
        %2815 = vmatprep.mubr.f32.mxu0 0.0
        %2816 = vmatmul.mubr.f32.gmra.mxu0 %v550
        %v2817 = vpop.f32.mrf.mxu0
        %v2818 = vadd.f32 0.0, %v2817
        %v2819 = vpop.f32.mrf.mxu0
        %v2820 = vadd.f32 0.0, %v2819
        %2821 = vmatprep.mubr.f32.mxu0 0.0
        %2822 = vmatmul.mubr.f32.gmra.mxu0 %v553
        %v2823 = vpop.f32.mrf.mxu0
        %v2824 = vadd.f32 0.0, %v2823
        %v2825 = vpop.f32.mrf.mxu0
        %v2826 = vadd.f32 0.0, %v2825
        %2827 = vmatprep.mubr.f32.mxu0 0.0
        %2828 = vmatmul.mubr.f32.gmra.mxu0 %v556
        %v2829 = vpop.f32.mrf.mxu0
        %v2830 = vadd.f32 0.0, %v2829
        %v2831 = vpop.f32.mrf.mxu0
        %v2832 = vadd.f32 0.0, %v2831
        %2833 = vmatprep.mubr.f32.mxu0 0.0
        %2834 = vmatmul.mubr.f32.gmra.mxu0 %v559
        %v2835 = vpop.f32.mrf.mxu0
        %v2836 = vadd.f32 0.0, %v2835
        %v2837 = vpop.f32.mrf.mxu0
        %v2838 = vadd.f32 0.0, %v2837
        %2839 = vmatprep.mubr.f32.mxu0 0.0
        %2840 = vmatmul.mubr.f32.gmra.mxu0 %v562
        %v2841 = vpop.f32.mrf.mxu0
        %v2842 = vadd.f32 0.0, %v2841
        %v2843 = vpop.f32.mrf.mxu0
        %v2844 = vadd.f32 0.0, %v2843
        %2845 = vmatprep.mubr.f32.mxu0 0.0
        %2846 = vmatmul.mubr.f32.gmra.mxu0 %v565
        %v2847 = vpop.f32.mrf.mxu0
        %v2848 = vadd.f32 0.0, %v2847
        %v2849 = vpop.f32.mrf.mxu0
        %v2850 = vadd.f32 0.0, %v2849
        %2851 = vmatprep.mubr.f32.mxu0 0.0
        %2852 = vmatmul.mubr.f32.gmra.mxu0 %v568
        %v2853 = vpop.f32.mrf.mxu0
        %v2854 = vadd.f32 0.0, %v2853
        %v2855 = vpop.f32.mrf.mxu0
        %v2856 = vadd.f32 0.0, %v2855
        %2857 = vdwg.mxu0
        %2858 = vmatprep.subr.mxu0 0.0
        %2859 = vmatpush1.msra.mxu0 0.0
        %2860 = vmatprep.subr.mxu0 0.0
        %2861 = vmatpush1.msra.mxu0 0.0
        %2862 = vmatprep.subr.mxu0 0.0
        %2863 = vmatpush1.msra.mxu0 0.0
        %2864 = vmatprep.subr.mxu0 0.0
        %2865 = vmatpush1.msra.mxu0 0.0
        %2866 = vmatprep.subr.mxu0 0.0
        %2867 = vmatpush1.msra.mxu0 0.0
        %2868 = vmatprep.subr.mxu0 0.0
        %2869 = vmatpush1.msra.mxu0 0.0
        %2870 = vmatprep.subr.mxu0 0.0
        %2871 = vmatpush1.msra.mxu0 0.0
        %2872 = vmatprep.subr.mxu0 0.0
        %2873 = vmatpush1.msra.mxu0 0.0
        %2874 = vmatprep.subr.mxu0 0.0
        %2875 = vmatpush1.msra.mxu0 0.0
        %2876 = vmatprep.subr.mxu0 0.0
        %2877 = vmatpush1.msra.mxu0 0.0
        %2878 = vmatprep.subr.mxu0 0.0
        %2879 = vmatpush1.msra.mxu0 0.0
        %2880 = vmatprep.subr.mxu0 0.0
        %2881 = vmatpush1.msra.mxu0 0.0
        %2882 = vmatprep.subr.mxu0 0.0
        %2883 = vmatpush1.msra.mxu0 0.0
        %2884 = vmatprep.subr.mxu0 0.0
        %2885 = vmatpush1.msra.mxu0 0.0
        %2886 = vmatprep.subr.mxu0 0.0
        %2887 = vmatpush1.msra.mxu0 %v2502
        %2888 = vmatprep.subr.mxu0 0.0
        %2889 = vmatpush1.msra.mxu0 %v2497
        %2890 = vmatprep.subr.mxu0 0.0
        %2891 = vmatpush2.msra.mxu0 0.0
        %2892 = vmatprep.subr.mxu0 0.0
        %2893 = vmatpush2.msra.mxu0 0.0
        %2894 = vmatprep.subr.mxu0 0.0
        %2895 = vmatpush2.msra.mxu0 0.0
        %2896 = vmatprep.subr.mxu0 0.0
        %2897 = vmatpush2.msra.mxu0 0.0
        %2898 = vmatprep.subr.mxu0 0.0
        %2899 = vmatpush2.msra.mxu0 0.0
        %2900 = vmatprep.subr.mxu0 0.0
        %2901 = vmatpush2.msra.mxu0 0.0
        %2902 = vmatprep.subr.mxu0 0.0
        %2903 = vmatpush2.msra.mxu0 0.0
        %2904 = vmatprep.subr.mxu0 0.0
        %2905 = vmatpush2.msra.mxu0 0.0
        %2906 = vmatprep.subr.mxu0 0.0
        %2907 = vmatpush2.msra.mxu0 0.0
        %2908 = vmatprep.subr.mxu0 0.0
        %2909 = vmatpush2.msra.mxu0 0.0
        %2910 = vmatprep.subr.mxu0 0.0
        %2911 = vmatpush2.msra.mxu0 0.0
        %2912 = vmatprep.subr.mxu0 0.0
        %2913 = vmatpush2.msra.mxu0 0.0
        %2914 = vmatprep.subr.mxu0 0.0
        %2915 = vmatpush2.msra.mxu0 0.0
        %2916 = vmatprep.subr.mxu0 0.0
        %2917 = vmatpush2.msra.mxu0 0.0
        %2918 = vmatprep.subr.mxu0 0.0
        %2919 = vmatpush2.msra.mxu0 0.0
        %2920 = vmatprep.subr.mxu0 0.0
        %2921 = vmatpush2.msra.mxu0 0.0
        %2922 = vmatprep.mubr.f32.mxu0 0.0
        %2923 = vmatmul.mubr.f32.gmra.mxu0 %v427
        %v2924 = vpop.f32.mrf.mxu0
        %v2925 = vadd.f32 0.0, %v2924
        %v2926 = vpop.f32.mrf.mxu0
        %2927 = vmatprep.mubr.f32.mxu0 0.0
        %2928 = vmatmul.mubr.f32.gmra.mxu0 %v430
        %v2929 = vpop.f32.mrf.mxu0
        %v2930 = vadd.f32 0.0, %v2929
        %v2931 = vpop.f32.mrf.mxu0
        %2932 = vmatprep.mubr.f32.mxu0 0.0
        %2933 = vmatmul.mubr.f32.gmra.mxu0 %v433
        %v2934 = vpop.f32.mrf.mxu0
        %v2935 = vadd.f32 0.0, %v2934
        %v2936 = vpop.f32.mrf.mxu0
        %2937 = vmatprep.mubr.f32.mxu0 0.0
        %2938 = vmatmul.mubr.f32.gmra.mxu0 %v436
        %v2939 = vpop.f32.mrf.mxu0
        %v2940 = vadd.f32 0.0, %v2939
        %v2941 = vpop.f32.mrf.mxu0
        %2942 = vmatprep.mubr.f32.mxu0 0.0
        %2943 = vmatmul.mubr.f32.gmra.mxu0 %v439
        %v2944 = vpop.f32.mrf.mxu0
        %v2945 = vadd.f32 0.0, %v2944
        %v2946 = vpop.f32.mrf.mxu0
        %2947 = vmatprep.mubr.f32.mxu0 0.0
        %2948 = vmatmul.mubr.f32.gmra.mxu0 %v442
        %v2949 = vpop.f32.mrf.mxu0
        %v2950 = vadd.f32 0.0, %v2949
        %v2951 = vpop.f32.mrf.mxu0
        %2952 = vmatprep.mubr.f32.mxu0 0.0
        %2953 = vmatmul.mubr.f32.gmra.mxu0 %v445
        %v2954 = vpop.f32.mrf.mxu0
        %v2955 = vadd.f32 0.0, %v2954
        %v2956 = vpop.f32.mrf.mxu0
        %2957 = vmatprep.mubr.f32.mxu0 0.0
        %2958 = vmatmul.mubr.f32.gmra.mxu0 %v448
        %v2959 = vpop.f32.mrf.mxu0
        %v2960 = vadd.f32 0.0, %v2959
        %v2961 = vpop.f32.mrf.mxu0
        %2962 = vmatprep.mubr.f32.mxu0 0.0
        %2963 = vmatmul.mubr.f32.gmra.mxu0 %v451
        %v2964 = vpop.f32.mrf.mxu0
        %v2965 = vadd.f32 0.0, %v2964
        %v2966 = vpop.f32.mrf.mxu0
        %2967 = vmatprep.mubr.f32.mxu0 0.0
        %2968 = vmatmul.mubr.f32.gmra.mxu0 %v454
        %v2969 = vpop.f32.mrf.mxu0
        %v2970 = vadd.f32 0.0, %v2969
        %v2971 = vpop.f32.mrf.mxu0
        %2972 = vmatprep.mubr.f32.mxu0 0.0
        %2973 = vmatmul.mubr.f32.gmra.mxu0 %v457
        %v2974 = vpop.f32.mrf.mxu0
        %v2975 = vadd.f32 0.0, %v2974
        %v2976 = vpop.f32.mrf.mxu0
        %2977 = vmatprep.mubr.f32.mxu0 0.0
        %2978 = vmatmul.mubr.f32.gmra.mxu0 %v460
        %v2979 = vpop.f32.mrf.mxu0
        %v2980 = vadd.f32 0.0, %v2979
        %v2981 = vpop.f32.mrf.mxu0
        %2982 = vmatprep.mubr.f32.mxu0 0.0
        %2983 = vmatmul.mubr.f32.gmra.mxu0 %v463
        %v2984 = vpop.f32.mrf.mxu0
        %v2985 = vadd.f32 0.0, %v2984
        %v2986 = vpop.f32.mrf.mxu0
        %2987 = vmatprep.mubr.f32.mxu0 0.0
        %2988 = vmatmul.mubr.f32.gmra.mxu0 %v466
        %v2989 = vpop.f32.mrf.mxu0
        %v2990 = vadd.f32 0.0, %v2989
        %v2991 = vpop.f32.mrf.mxu0
        %2992 = vmatprep.mubr.f32.mxu0 0.0
        %2993 = vmatmul.mubr.f32.gmra.mxu0 %v469
        %v2994 = vpop.f32.mrf.mxu0
        %v2995 = vadd.f32 0.0, %v2994
        %v2996 = vpop.f32.mrf.mxu0
        %2997 = vmatprep.mubr.f32.mxu0 0.0
        %2998 = vmatmul.mubr.f32.gmra.mxu0 %v472
        %v2999 = vpop.f32.mrf.mxu0
        %v3000 = vadd.f32 0.0, %v2999
        %v3001 = vpop.f32.mrf.mxu0
        %3002 = vmatprep.mubr.f32.mxu0 0.0
        %3003 = vmatmul.mubr.f32.gmra.mxu0 %v475
        %v3004 = vpop.f32.mrf.mxu0
        %v3005 = vadd.f32 0.0, %v3004
        %v3006 = vpop.f32.mrf.mxu0
        %3007 = vmatprep.mubr.f32.mxu0 0.0
        %3008 = vmatmul.mubr.f32.gmra.mxu0 %v478
        %v3009 = vpop.f32.mrf.mxu0
        %v3010 = vadd.f32 0.0, %v3009
        %v3011 = vpop.f32.mrf.mxu0
        %3012 = vmatprep.mubr.f32.mxu0 0.0
        %3013 = vmatmul.mubr.f32.gmra.mxu0 %v481
        %v3014 = vpop.f32.mrf.mxu0
        %v3015 = vadd.f32 0.0, %v3014
        %v3016 = vpop.f32.mrf.mxu0
        %3017 = vmatprep.mubr.f32.mxu0 0.0
        %3018 = vmatmul.mubr.f32.gmra.mxu0 %v484
        %v3019 = vpop.f32.mrf.mxu0
        %v3020 = vadd.f32 0.0, %v3019
        %v3021 = vpop.f32.mrf.mxu0
        %3022 = vmatprep.mubr.f32.mxu0 0.0
        %3023 = vmatmul.mubr.f32.gmra.mxu0 %v487
        %v3024 = vpop.f32.mrf.mxu0
        %v3025 = vadd.f32 0.0, %v3024
        %v3026 = vpop.f32.mrf.mxu0
        %3027 = vmatprep.mubr.f32.mxu0 0.0
        %3028 = vmatmul.mubr.f32.gmra.mxu0 %v490
        %v3029 = vpop.f32.mrf.mxu0
        %v3030 = vadd.f32 0.0, %v3029
        %v3031 = vpop.f32.mrf.mxu0
        %3032 = vmatprep.mubr.f32.mxu0 0.0
        %3033 = vmatmul.mubr.f32.gmra.mxu0 %v493
        %v3034 = vpop.f32.mrf.mxu0
        %v3035 = vadd.f32 0.0, %v3034
        %v3036 = vpop.f32.mrf.mxu0
        %3037 = vmatprep.mubr.f32.mxu0 0.0
        %3038 = vmatmul.mubr.f32.gmra.mxu0 %v496
        %v3039 = vpop.f32.mrf.mxu0
        %v3040 = vadd.f32 0.0, %v3039
        %v3041 = vpop.f32.mrf.mxu0
        %3042 = vmatprep.mubr.f32.mxu0 0.0
        %3043 = vmatmul.mubr.f32.gmra.mxu0 %v499
        %v3044 = vpop.f32.mrf.mxu0
        %v3045 = vadd.f32 0.0, %v3044
        %v3046 = vpop.f32.mrf.mxu0
        %3047 = vmatprep.mubr.f32.mxu0 0.0
        %3048 = vmatmul.mubr.f32.gmra.mxu0 %v502
        %v3049 = vpop.f32.mrf.mxu0
        %v3050 = vadd.f32 0.0, %v3049
        %v3051 = vpop.f32.mrf.mxu0
        %3052 = vmatprep.mubr.f32.mxu0 0.0
        %3053 = vmatmul.mubr.f32.gmra.mxu0 %v505
        %v3054 = vpop.f32.mrf.mxu0
        %v3055 = vadd.f32 0.0, %v3054
        %v3056 = vpop.f32.mrf.mxu0
        %3057 = vmatprep.mubr.f32.mxu0 0.0
        %3058 = vmatmul.mubr.f32.gmra.mxu0 %v508
        %v3059 = vpop.f32.mrf.mxu0
        %v3060 = vadd.f32 0.0, %v3059
        %v3061 = vpop.f32.mrf.mxu0
        %3062 = vmatprep.mubr.f32.mxu0 0.0
        %3063 = vmatmul.mubr.f32.gmra.mxu0 %v511
        %v3064 = vpop.f32.mrf.mxu0
        %v3065 = vadd.f32 0.0, %v3064
        %v3066 = vpop.f32.mrf.mxu0
        %3067 = vmatprep.mubr.f32.mxu0 0.0
        %3068 = vmatmul.mubr.f32.gmra.mxu0 %v514
        %v3069 = vpop.f32.mrf.mxu0
        %v3070 = vadd.f32 0.0, %v3069
        %v3071 = vpop.f32.mrf.mxu0
        %3072 = vmatprep.mubr.f32.mxu0 0.0
        %3073 = vmatmul.mubr.f32.gmra.mxu0 %v517
        %v3074 = vpop.f32.mrf.mxu0
        %v3075 = vadd.f32 0.0, %v3074
        %v3076 = vpop.f32.mrf.mxu0
        %3077 = vmatprep.mubr.f32.mxu0 0.0
        %3078 = vmatmul.mubr.f32.gmra.mxu0 %v520
        %v3079 = vpop.f32.mrf.mxu0
        %v3080 = vadd.f32 0.0, %v3079
        %v3081 = vpop.f32.mrf.mxu0
        %3082 = vmatprep.mubr.f32.mxu0 0.0
        %3083 = vmatmul.mubr.f32.gmra.mxu0 %v523
        %v3084 = vpop.f32.mrf.mxu0
        %v3085 = vadd.f32 0.0, %v3084
        %v3086 = vpop.f32.mrf.mxu0
        %3087 = vmatprep.mubr.f32.mxu0 0.0
        %3088 = vmatmul.mubr.f32.gmra.mxu0 %v526
        %v3089 = vpop.f32.mrf.mxu0
        %v3090 = vadd.f32 0.0, %v3089
        %v3091 = vpop.f32.mrf.mxu0
        %3092 = vmatprep.mubr.f32.mxu0 0.0
        %3093 = vmatmul.mubr.f32.gmra.mxu0 %v529
        %v3094 = vpop.f32.mrf.mxu0
        %v3095 = vadd.f32 0.0, %v3094
        %v3096 = vpop.f32.mrf.mxu0
        %3097 = vmatprep.mubr.f32.mxu0 0.0
        %3098 = vmatmul.mubr.f32.gmra.mxu0 %v532
        %v3099 = vpop.f32.mrf.mxu0
        %v3100 = vadd.f32 0.0, %v3099
        %v3101 = vpop.f32.mrf.mxu0
        %3102 = vmatprep.mubr.f32.mxu0 0.0
        %3103 = vmatmul.mubr.f32.gmra.mxu0 %v535
        %v3104 = vpop.f32.mrf.mxu0
        %v3105 = vadd.f32 0.0, %v3104
        %v3106 = vpop.f32.mrf.mxu0
        %3107 = vmatprep.mubr.f32.mxu0 0.0
        %3108 = vmatmul.mubr.f32.gmra.mxu0 %v538
        %v3109 = vpop.f32.mrf.mxu0
        %v3110 = vadd.f32 0.0, %v3109
        %v3111 = vpop.f32.mrf.mxu0
        %3112 = vmatprep.mubr.f32.mxu0 0.0
        %3113 = vmatmul.mubr.f32.gmra.mxu0 %v541
        %v3114 = vpop.f32.mrf.mxu0
        %v3115 = vadd.f32 0.0, %v3114
        %v3116 = vpop.f32.mrf.mxu0
        %3117 = vmatprep.mubr.f32.mxu0 0.0
        %3118 = vmatmul.mubr.f32.gmra.mxu0 %v544
        %v3119 = vpop.f32.mrf.mxu0
        %v3120 = vadd.f32 0.0, %v3119
        %v3121 = vpop.f32.mrf.mxu0
        %3122 = vmatprep.mubr.f32.mxu0 0.0
        %3123 = vmatmul.mubr.f32.gmra.mxu0 %v547
        %v3124 = vpop.f32.mrf.mxu0
        %v3125 = vadd.f32 0.0, %v3124
        %v3126 = vpop.f32.mrf.mxu0
        %3127 = vmatprep.mubr.f32.mxu0 0.0
        %3128 = vmatmul.mubr.f32.gmra.mxu0 %v550
        %v3129 = vpop.f32.mrf.mxu0
        %v3130 = vadd.f32 0.0, %v3129
        %v3131 = vpop.f32.mrf.mxu0
        %3132 = vmatprep.mubr.f32.mxu0 0.0
        %3133 = vmatmul.mubr.f32.gmra.mxu0 %v553
        %v3134 = vpop.f32.mrf.mxu0
        %v3135 = vadd.f32 0.0, %v3134
        %v3136 = vpop.f32.mrf.mxu0
        %3137 = vmatprep.mubr.f32.mxu0 0.0
        %3138 = vmatmul.mubr.f32.gmra.mxu0 %v556
        %v3139 = vpop.f32.mrf.mxu0
        %v3140 = vadd.f32 0.0, %v3139
        %v3141 = vpop.f32.mrf.mxu0
        %3142 = vmatprep.mubr.f32.mxu0 0.0
        %3143 = vmatmul.mubr.f32.gmra.mxu0 %v559
        %v3144 = vpop.f32.mrf.mxu0
        %v3145 = vadd.f32 0.0, %v3144
        %v3146 = vpop.f32.mrf.mxu0
        %3147 = vmatprep.mubr.f32.mxu0 0.0
        %3148 = vmatmul.mubr.f32.gmra.mxu0 %v562
        %v3149 = vpop.f32.mrf.mxu0
        %v3150 = vadd.f32 0.0, %v3149
        %v3151 = vpop.f32.mrf.mxu0
        %3152 = vmatprep.mubr.f32.mxu0 0.0
        %3153 = vmatmul.mubr.f32.gmra.mxu0 %v565
        %v3154 = vpop.f32.mrf.mxu0
        %v3155 = vadd.f32 0.0, %v3154
        %v3156 = vpop.f32.mrf.mxu0
        %3157 = vmatprep.mubr.f32.mxu0 0.0
        %3158 = vmatmul.mubr.f32.gmra.mxu0 %v568
        %v3159 = vpop.f32.mrf.mxu0
        %v3160 = vadd.f32 0.0, %v3159
        %v3161 = vpop.f32.mrf.mxu0
        %3162 = vdwg.mxu0
        %s3163 = scalar_lea.vmem %s204, 2304 [#allocation7]
        %3164 = vst [vmem:[%s3163] sm:$0xff] %v2572
        %3165 = vst [vmem:[%s3163 + $0x8] sm:$0xff] %v2574
        %3166 = vst [vmem:[%s3163 + $0x10] sm:$0xff] %v2925
        %3167 = vst [vmem:[%s3163 + $0x18] sm:$0xff] %v2578
        %3168 = vst [vmem:[%s3163 + $0x20] sm:$0xff] %v2580
        %3169 = vst [vmem:[%s3163 + $0x28] sm:$0xff] %v2930
        %3170 = vst [vmem:[%s3163 + $0x30] sm:$0xff] %v2584
        %3171 = vst [vmem:[%s3163 + $0x38] sm:$0xff] %v2586
        %3172 = vst [vmem:[%s3163 + $0x40] sm:$0xff] %v2935
        %3173 = vst [vmem:[%s3163 + $0x48] sm:$0xff] %v2590
        %3174 = vst [vmem:[%s3163 + $0x50] sm:$0xff] %v2592
        %3175 = vst [vmem:[%s3163 + $0x58] sm:$0xff] %v2940
        %3176 = vst [vmem:[%s3163 + $0x60] sm:$0xff] %v2596
        %3177 = vst [vmem:[%s3163 + $0x68] sm:$0xff] %v2598
        %3178 = vst [vmem:[%s3163 + $0x70] sm:$0xff] %v2945
        %3179 = vst [vmem:[%s3163 + $0x78] sm:$0xff] %v2602
        %3180 = vst [vmem:[%s3163 + $0x80] sm:$0xff] %v2604
        %3181 = vst [vmem:[%s3163 + $0x88] sm:$0xff] %v2950
        %3182 = vst [vmem:[%s3163 + $0x90] sm:$0xff] %v2608
        %3183 = vst [vmem:[%s3163 + $0x98] sm:$0xff] %v2610
        %3184 = vst [vmem:[%s3163 + $0xa0] sm:$0xff] %v2955
        %3185 = vst [vmem:[%s3163 + $0xa8] sm:$0xff] %v2614
        %3186 = vst [vmem:[%s3163 + $0xb0] sm:$0xff] %v2616
        %3187 = vst [vmem:[%s3163 + $0xb8] sm:$0xff] %v2960
        %3188 = vst [vmem:[%s3163 + $0xc0] sm:$0xff] %v2620
        %3189 = vst [vmem:[%s3163 + $0xc8] sm:$0xff] %v2622
        %3190 = vst [vmem:[%s3163 + $0xd0] sm:$0xff] %v2965
        %3191 = vst [vmem:[%s3163 + $0xd8] sm:$0xff] %v2626
        %3192 = vst [vmem:[%s3163 + $0xe0] sm:$0xff] %v2628
        %3193 = vst [vmem:[%s3163 + $0xe8] sm:$0xff] %v2970
        %3194 = vst [vmem:[%s3163 + $0xf0] sm:$0xff] %v2632
        %3195 = vst [vmem:[%s3163 + $0xf8] sm:$0xff] %v2634
        %3196 = vst [vmem:[%s3163 + $0x100] sm:$0xff] %v2975
        %3197 = vst [vmem:[%s3163 + $0x108] sm:$0xff] %v2638
        %3198 = vst [vmem:[%s3163 + $0x110] sm:$0xff] %v2640
        %3199 = vst [vmem:[%s3163 + $0x118] sm:$0xff] %v2980
        %3200 = vst [vmem:[%s3163 + $0x120] sm:$0xff] %v2644
        %3201 = vst [vmem:[%s3163 + $0x128] sm:$0xff] %v2646
        %3202 = vst [vmem:[%s3163 + $0x130] sm:$0xff] %v2985
        %3203 = vst [vmem:[%s3163 + $0x138] sm:$0xff] %v2650
        %3204 = vst [vmem:[%s3163 + $0x140] sm:$0xff] %v2652
        %3205 = vst [vmem:[%s3163 + $0x148] sm:$0xff] %v2990
        %3206 = vst [vmem:[%s3163 + $0x150] sm:$0xff] %v2656
        %3207 = vst [vmem:[%s3163 + $0x158] sm:$0xff] %v2658
        %3208 = vst [vmem:[%s3163 + $0x160] sm:$0xff] %v2995
        %3209 = vst [vmem:[%s3163 + $0x168] sm:$0xff] %v2662
        %3210 = vst [vmem:[%s3163 + $0x170] sm:$0xff] %v2664
        %3211 = vst [vmem:[%s3163 + $0x178] sm:$0xff] %v3000
        %3212 = vst [vmem:[%s3163 + $0x180] sm:$0xff] %v2668
        %3213 = vst [vmem:[%s3163 + $0x188] sm:$0xff] %v2670
        %3214 = vst [vmem:[%s3163 + $0x190] sm:$0xff] %v3005
        %3215 = vst [vmem:[%s3163 + $0x198] sm:$0xff] %v2674
        %3216 = vst [vmem:[%s3163 + $0x1a0] sm:$0xff] %v2676
        %3217 = vst [vmem:[%s3163 + $0x1a8] sm:$0xff] %v3010
        %3218 = vst [vmem:[%s3163 + $0x1b0] sm:$0xff] %v2680
        %3219 = vst [vmem:[%s3163 + $0x1b8] sm:$0xff] %v2682
        %3220 = vst [vmem:[%s3163 + $0x1c0] sm:$0xff] %v3015
        %3221 = vst [vmem:[%s3163 + $0x1c8] sm:$0xff] %v2686
        %3222 = vst [vmem:[%s3163 + $0x1d0] sm:$0xff] %v2688
        %3223 = vst [vmem:[%s3163 + $0x1d8] sm:$0xff] %v3020
        %3224 = vst [vmem:[%s3163 + $0x1e0] sm:$0xff] %v2692
        %3225 = vst [vmem:[%s3163 + $0x1e8] sm:$0xff] %v2694
        %3226 = vst [vmem:[%s3163 + $0x1f0] sm:$0xff] %v3025
        %3227 = vst [vmem:[%s3163 + $0x1f8] sm:$0xff] %v2698
        %3228 = vst [vmem:[%s3163 + $0x200] sm:$0xff] %v2700
        %3229 = vst [vmem:[%s3163 + $0x208] sm:$0xff] %v3030
        %3230 = vst [vmem:[%s3163 + $0x210] sm:$0xff] %v2704
        %3231 = vst [vmem:[%s3163 + $0x218] sm:$0xff] %v2706
        %3232 = vst [vmem:[%s3163 + $0x220] sm:$0xff] %v3035
        %3233 = vst [vmem:[%s3163 + $0x228] sm:$0xff] %v2710
        %3234 = vst [vmem:[%s3163 + $0x230] sm:$0xff] %v2712
        %3235 = vst [vmem:[%s3163 + $0x238] sm:$0xff] %v3040
        %3236 = vst [vmem:[%s3163 + $0x240] sm:$0xff] %v2716
        %3237 = vst [vmem:[%s3163 + $0x248] sm:$0xff] %v2718
        %3238 = vst [vmem:[%s3163 + $0x250] sm:$0xff] %v3045
        %3239 = vst [vmem:[%s3163 + $0x258] sm:$0xff] %v2722
        %3240 = vst [vmem:[%s3163 + $0x260] sm:$0xff] %v2724
        %3241 = vst [vmem:[%s3163 + $0x268] sm:$0xff] %v3050
        %3242 = vst [vmem:[%s3163 + $0x270] sm:$0xff] %v2728
        %3243 = vst [vmem:[%s3163 + $0x278] sm:$0xff] %v2730
        %3244 = vst [vmem:[%s3163 + $0x280] sm:$0xff] %v3055
        %3245 = vst [vmem:[%s3163 + $0x288] sm:$0xff] %v2734
        %3246 = vst [vmem:[%s3163 + $0x290] sm:$0xff] %v2736
        %3247 = vst [vmem:[%s3163 + $0x298] sm:$0xff] %v3060
        %3248 = vst [vmem:[%s3163 + $0x2a0] sm:$0xff] %v2740
        %3249 = vst [vmem:[%s3163 + $0x2a8] sm:$0xff] %v2742
        %3250 = vst [vmem:[%s3163 + $0x2b0] sm:$0xff] %v3065
        %3251 = vst [vmem:[%s3163 + $0x2b8] sm:$0xff] %v2746
        %3252 = vst [vmem:[%s3163 + $0x2c0] sm:$0xff] %v2748
        %3253 = vst [vmem:[%s3163 + $0x2c8] sm:$0xff] %v3070
        %3254 = vst [vmem:[%s3163 + $0x2d0] sm:$0xff] %v2752
        %3255 = vst [vmem:[%s3163 + $0x2d8] sm:$0xff] %v2754
        %3256 = vst [vmem:[%s3163 + $0x2e0] sm:$0xff] %v3075
        %3257 = vst [vmem:[%s3163 + $0x2e8] sm:$0xff] %v2758
        %3258 = vst [vmem:[%s3163 + $0x2f0] sm:$0xff] %v2760
        %3259 = vst [vmem:[%s3163 + $0x2f8] sm:$0xff] %v3080
        %3260 = vst [vmem:[%s3163 + $0x300] sm:$0xff] %v2764
        %3261 = vst [vmem:[%s3163 + $0x308] sm:$0xff] %v2766
        %3262 = vst [vmem:[%s3163 + $0x310] sm:$0xff] %v3085
        %3263 = vst [vmem:[%s3163 + $0x318] sm:$0xff] %v2770
        %3264 = vst [vmem:[%s3163 + $0x320] sm:$0xff] %v2772
        %3265 = vst [vmem:[%s3163 + $0x328] sm:$0xff] %v3090
        %3266 = vst [vmem:[%s3163 + $0x330] sm:$0xff] %v2776
        %3267 = vst [vmem:[%s3163 + $0x338] sm:$0xff] %v2778
        %3268 = vst [vmem:[%s3163 + $0x340] sm:$0xff] %v3095
        %3269 = vst [vmem:[%s3163 + $0x348] sm:$0xff] %v2782
        %3270 = vst [vmem:[%s3163 + $0x350] sm:$0xff] %v2784
        %3271 = vst [vmem:[%s3163 + $0x358] sm:$0xff] %v3100
        %3272 = vst [vmem:[%s3163 + $0x360] sm:$0xff] %v2788
        %3273 = vst [vmem:[%s3163 + $0x368] sm:$0xff] %v2790
        %3274 = vst [vmem:[%s3163 + $0x370] sm:$0xff] %v3105
        %3275 = vst [vmem:[%s3163 + $0x378] sm:$0xff] %v2794
        %3276 = vst [vmem:[%s3163 + $0x380] sm:$0xff] %v2796
        %3277 = vst [vmem:[%s3163 + $0x388] sm:$0xff] %v3110
        %3278 = vst [vmem:[%s3163 + $0x390] sm:$0xff] %v2800
        %3279 = vst [vmem:[%s3163 + $0x398] sm:$0xff] %v2802
        %3280 = vst [vmem:[%s3163 + $0x3a0] sm:$0xff] %v3115
        %3281 = vst [vmem:[%s3163 + $0x3a8] sm:$0xff] %v2806
        %3282 = vst [vmem:[%s3163 + $0x3b0] sm:$0xff] %v2808
        %3283 = vst [vmem:[%s3163 + $0x3b8] sm:$0xff] %v3120
        %3284 = vst [vmem:[%s3163 + $0x3c0] sm:$0xff] %v2812
        %3285 = vst [vmem:[%s3163 + $0x3c8] sm:$0xff] %v2814
        %3286 = vst [vmem:[%s3163 + $0x3d0] sm:$0xff] %v3125
        %3287 = vst [vmem:[%s3163 + $0x3d8] sm:$0xff] %v2818
        %3288 = vst [vmem:[%s3163 + $0x3e0] sm:$0xff] %v2820
        %3289 = vst [vmem:[%s3163 + $0x3e8] sm:$0xff] %v3130
        %3290 = vst [vmem:[%s3163 + $0x3f0] sm:$0xff] %v2824
        %3291 = vst [vmem:[%s3163 + $0x3f8] sm:$0xff] %v2826
        %3292 = vst [vmem:[%s3163 + $0x400] sm:$0xff] %v3135
        %3293 = vst [vmem:[%s3163 + $0x408] sm:$0xff] %v2830
        %3294 = vst [vmem:[%s3163 + $0x410] sm:$0xff] %v2832
        %3295 = vst [vmem:[%s3163 + $0x418] sm:$0xff] %v3140
        %3296 = vst [vmem:[%s3163 + $0x420] sm:$0xff] %v2836
        %3297 = vst [vmem:[%s3163 + $0x428] sm:$0xff] %v2838
        %3298 = vst [vmem:[%s3163 + $0x430] sm:$0xff] %v3145
        %3299 = vst [vmem:[%s3163 + $0x438] sm:$0xff] %v2842
        %3300 = vst [vmem:[%s3163 + $0x440] sm:$0xff] %v2844
        %3301 = vst [vmem:[%s3163 + $0x448] sm:$0xff] %v3150
        %3302 = vst [vmem:[%s3163 + $0x450] sm:$0xff] %v2848
        %3303 = vst [vmem:[%s3163 + $0x458] sm:$0xff] %v2850
        %3304 = vst [vmem:[%s3163 + $0x460] sm:$0xff] %v3155
        %3305 = vst [vmem:[%s3163 + $0x468] sm:$0xff] %v2854
        %3306 = vst [vmem:[%s3163 + $0x470] sm:$0xff] %v2856
        %3307 = vst [vmem:[%s3163 + $0x478] sm:$0xff] %v3160
        %s3308 = scalar_lea.vmem %s178, 48 [#allocation2]
        %v3309 = vld [vmem:[%s3308] sm:$0xff]
        %v3310 = vld [vmem:[%s3308 + $0x8] sm:$0xff]
        %v3311 = vmul.f32 %v3309, 2.0
        %v3312 = vmul.f32 %v3310, 2.0
        %v3313 = vsub.f32 %v3311, 1.0
        %v3314 = vsub.f32 %v3312, 1.0
        %v3316 = vsel %vm267, %v3313, 0
        %v3319 = vsel %vm267, %v3314, 0
        %3321 = vmatprep.subr.mxu0 0.0
        %3322 = vmatpush1.msra.mxu0 0.0
        %3323 = vmatprep.subr.mxu0 0.0
        %3324 = vmatpush1.msra.mxu0 0.0
        %3325 = vmatprep.subr.mxu0 0.0
        %3326 = vmatpush1.msra.mxu0 0.0
        %3327 = vmatprep.subr.mxu0 0.0
        %3328 = vmatpush1.msra.mxu0 0.0
        %3329 = vmatprep.subr.mxu0 0.0
        %3330 = vmatpush1.msra.mxu0 0.0
        %3331 = vmatprep.subr.mxu0 0.0
        %3332 = vmatpush1.msra.mxu0 0.0
        %3333 = vmatprep.subr.mxu0 0.0
        %3334 = vmatpush1.msra.mxu0 0.0
        %3335 = vmatprep.subr.mxu0 0.0
        %3336 = vmatpush1.msra.mxu0 0.0
        %3337 = vmatprep.subr.mxu0 0.0
        %3338 = vmatpush1.msra.mxu0 0.0
        %3339 = vmatprep.subr.mxu0 0.0
        %3340 = vmatpush1.msra.mxu0 0.0
        %3341 = vmatprep.subr.mxu0 0.0
        %3342 = vmatpush1.msra.mxu0 0.0
        %3343 = vmatprep.subr.mxu0 0.0
        %3344 = vmatpush1.msra.mxu0 0.0
        %3345 = vmatprep.subr.mxu0 0.0
        %3346 = vmatpush1.msra.mxu0 0.0
        %3347 = vmatprep.subr.mxu0 0.0
        %3348 = vmatpush1.msra.mxu0 0.0
        %3349 = vmatprep.subr.mxu0 %v259
        %3350 = vmatpush1.msra.mxu0 %v258
        %3351 = vmatprep.subr.mxu0 %v256
        %3352 = vmatpush1.msra.mxu0 %v255
        %3353 = vmatprep.subr.mxu0 0.0
        %3354 = vmatpush2.msra.mxu0 0.0
        %3355 = vmatprep.subr.mxu0 0.0
        %3356 = vmatpush2.msra.mxu0 0.0
        %3357 = vmatprep.subr.mxu0 0.0
        %3358 = vmatpush2.msra.mxu0 0.0
        %3359 = vmatprep.subr.mxu0 0.0
        %3360 = vmatpush2.msra.mxu0 0.0
        %3361 = vmatprep.subr.mxu0 0.0
        %3362 = vmatpush2.msra.mxu0 0.0
        %3363 = vmatprep.subr.mxu0 0.0
        %3364 = vmatpush2.msra.mxu0 0.0
        %3365 = vmatprep.subr.mxu0 0.0
        %3366 = vmatpush2.msra.mxu0 0.0
        %3367 = vmatprep.subr.mxu0 0.0
        %3368 = vmatpush2.msra.mxu0 0.0
        %3369 = vmatprep.subr.mxu0 0.0
        %3370 = vmatpush2.msra.mxu0 0.0
        %3371 = vmatprep.subr.mxu0 0.0
        %3372 = vmatpush2.msra.mxu0 0.0
        %3373 = vmatprep.subr.mxu0 0.0
        %3374 = vmatpush2.msra.mxu0 0.0
        %3375 = vmatprep.subr.mxu0 0.0
        %3376 = vmatpush2.msra.mxu0 0.0
        %3377 = vmatprep.subr.mxu0 0.0
        %3378 = vmatpush2.msra.mxu0 0.0
        %3379 = vmatprep.subr.mxu0 0.0
        %3380 = vmatpush2.msra.mxu0 0.0
        %3381 = vmatprep.subr.mxu0 0.0
        %3382 = vmatpush2.msra.mxu0 0.0
        %3383 = vmatprep.subr.mxu0 0.0
        %3384 = vmatpush2.msra.mxu0 0.0
        %3385 = vmatprep.mubr.f32.mxu0 0.0
        %3386 = vmatmul.mubr.f32.gmra.mxu0 %v3316
        %v3387 = vpop.f32.mrf.mxu0
        %v3388 = vadd.f32 0.0, %v3387
        %v3389 = vpop.f32.mrf.mxu0
        %v3390 = vadd.f32 0.0, %v3389
        %3391 = vmatprep.mubr.f32.mxu0 0.0
        %3392 = vmatmul.mubr.f32.gmra.mxu0 %v3319
        %v3393 = vpop.f32.mrf.mxu0
        %v3394 = vadd.f32 0.0, %v3393
        %v3395 = vpop.f32.mrf.mxu0
        %v3396 = vadd.f32 0.0, %v3395
        %3397 = vdwg.mxu0
        %3398 = vmatprep.subr.mxu0 0.0
        %3399 = vmatpush1.msra.mxu0 0.0
        %3400 = vmatprep.subr.mxu0 0.0
        %3401 = vmatpush1.msra.mxu0 0.0
        %3402 = vmatprep.subr.mxu0 0.0
        %3403 = vmatpush1.msra.mxu0 0.0
        %3404 = vmatprep.subr.mxu0 0.0
        %3405 = vmatpush1.msra.mxu0 0.0
        %3406 = vmatprep.subr.mxu0 0.0
        %3407 = vmatpush1.msra.mxu0 0.0
        %3408 = vmatprep.subr.mxu0 0.0
        %3409 = vmatpush1.msra.mxu0 0.0
        %3410 = vmatprep.subr.mxu0 0.0
        %3411 = vmatpush1.msra.mxu0 0.0
        %3412 = vmatprep.subr.mxu0 0.0
        %3413 = vmatpush1.msra.mxu0 0.0
        %3414 = vmatprep.subr.mxu0 0.0
        %3415 = vmatpush1.msra.mxu0 0.0
        %3416 = vmatprep.subr.mxu0 0.0
        %3417 = vmatpush1.msra.mxu0 0.0
        %3418 = vmatprep.subr.mxu0 0.0
        %3419 = vmatpush1.msra.mxu0 0.0
        %3420 = vmatprep.subr.mxu0 0.0
        %3421 = vmatpush1.msra.mxu0 0.0
        %3422 = vmatprep.subr.mxu0 0.0
        %3423 = vmatpush1.msra.mxu0 0.0
        %3424 = vmatprep.subr.mxu0 0.0
        %3425 = vmatpush1.msra.mxu0 0.0
        %3426 = vmatprep.subr.mxu0 0.0
        %3427 = vmatpush1.msra.mxu0 %v260
        %3428 = vmatprep.subr.mxu0 0.0
        %3429 = vmatpush1.msra.mxu0 %v257
        %3430 = vmatprep.subr.mxu0 0.0
        %3431 = vmatpush2.msra.mxu0 0.0
        %3432 = vmatprep.subr.mxu0 0.0
        %3433 = vmatpush2.msra.mxu0 0.0
        %3434 = vmatprep.subr.mxu0 0.0
        %3435 = vmatpush2.msra.mxu0 0.0
        %3436 = vmatprep.subr.mxu0 0.0
        %3437 = vmatpush2.msra.mxu0 0.0
        %3438 = vmatprep.subr.mxu0 0.0
        %3439 = vmatpush2.msra.mxu0 0.0
        %3440 = vmatprep.subr.mxu0 0.0
        %3441 = vmatpush2.msra.mxu0 0.0
        %3442 = vmatprep.subr.mxu0 0.0
        %3443 = vmatpush2.msra.mxu0 0.0
        %3444 = vmatprep.subr.mxu0 0.0
        %3445 = vmatpush2.msra.mxu0 0.0
        %3446 = vmatprep.subr.mxu0 0.0
        %3447 = vmatpush2.msra.mxu0 0.0
        %3448 = vmatprep.subr.mxu0 0.0
        %3449 = vmatpush2.msra.mxu0 0.0
        %3450 = vmatprep.subr.mxu0 0.0
        %3451 = vmatpush2.msra.mxu0 0.0
        %3452 = vmatprep.subr.mxu0 0.0
        %3453 = vmatpush2.msra.mxu0 0.0
        %3454 = vmatprep.subr.mxu0 0.0
        %3455 = vmatpush2.msra.mxu0 0.0
        %3456 = vmatprep.subr.mxu0 0.0
        %3457 = vmatpush2.msra.mxu0 0.0
        %3458 = vmatprep.subr.mxu0 0.0
        %3459 = vmatpush2.msra.mxu0 0.0
        %3460 = vmatprep.subr.mxu0 0.0
        %3461 = vmatpush2.msra.mxu0 0.0
        %3462 = vmatprep.mubr.f32.mxu0 0.0
        %3463 = vmatmul.mubr.f32.gmra.mxu0 %v3316
        %v3464 = vpop.f32.mrf.mxu0
        %v3465 = vadd.f32 0.0, %v3464
        %v3466 = vpop.f32.mrf.mxu0
        %3467 = vmatprep.mubr.f32.mxu0 0.0
        %3468 = vmatmul.mubr.f32.gmra.mxu0 %v3319
        %v3469 = vpop.f32.mrf.mxu0
        %v3470 = vadd.f32 0.0, %v3469
        %v3471 = vpop.f32.mrf.mxu0
        %3472 = vdwg.mxu0
        %3473 = vmatprep.subr.mxu0 0.0
        %3474 = vmatpush1.msra.mxu0 0.0
        %3475 = vmatprep.subr.mxu0 0.0
        %3476 = vmatpush1.msra.mxu0 0.0
        %3477 = vmatprep.subr.mxu0 0.0
        %3478 = vmatpush1.msra.mxu0 0.0
        %3479 = vmatprep.subr.mxu0 0.0
        %3480 = vmatpush1.msra.mxu0 0.0
        %3481 = vmatprep.subr.mxu0 0.0
        %3482 = vmatpush1.msra.mxu0 0.0
        %3483 = vmatprep.subr.mxu0 0.0
        %3484 = vmatpush1.msra.mxu0 0.0
        %3485 = vmatprep.subr.mxu0 0.0
        %3486 = vmatpush1.msra.mxu0 0.0
        %3487 = vmatprep.subr.mxu0 0.0
        %3488 = vmatpush1.msra.mxu0 0.0
        %3489 = vmatprep.subr.mxu0 0.0
        %3490 = vmatpush1.msra.mxu0 0.0
        %3491 = vmatprep.subr.mxu0 0.0
        %3492 = vmatpush1.msra.mxu0 0.0
        %3493 = vmatprep.subr.mxu0 0.0
        %3494 = vmatpush1.msra.mxu0 0.0
        %3495 = vmatprep.subr.mxu0 0.0
        %3496 = vmatpush1.msra.mxu0 0.0
        %3497 = vmatprep.subr.mxu0 0.0
        %3498 = vmatpush1.msra.mxu0 0.0
        %3499 = vmatprep.subr.mxu0 0.0
        %3500 = vmatpush1.msra.mxu0 0.0
        %3501 = vmatprep.subr.mxu0 %v3396
        %3502 = vmatpush1.msra.mxu0 %v3394
        %3503 = vmatprep.subr.mxu0 %v3390
        %3504 = vmatpush1.msra.mxu0 %v3388
        %3505 = vmatprep.subr.mxu0 0.0
        %3506 = vmatpush2.msra.mxu0 0.0
        %3507 = vmatprep.subr.mxu0 0.0
        %3508 = vmatpush2.msra.mxu0 0.0
        %3509 = vmatprep.subr.mxu0 0.0
        %3510 = vmatpush2.msra.mxu0 0.0
        %3511 = vmatprep.subr.mxu0 0.0
        %3512 = vmatpush2.msra.mxu0 0.0
        %3513 = vmatprep.subr.mxu0 0.0
        %3514 = vmatpush2.msra.mxu0 0.0
        %3515 = vmatprep.subr.mxu0 0.0
        %3516 = vmatpush2.msra.mxu0 0.0
        %3517 = vmatprep.subr.mxu0 0.0
        %3518 = vmatpush2.msra.mxu0 0.0
        %3519 = vmatprep.subr.mxu0 0.0
        %3520 = vmatpush2.msra.mxu0 0.0
        %3521 = vmatprep.subr.mxu0 0.0
        %3522 = vmatpush2.msra.mxu0 0.0
        %3523 = vmatprep.subr.mxu0 0.0
        %3524 = vmatpush2.msra.mxu0 0.0
        %3525 = vmatprep.subr.mxu0 0.0
        %3526 = vmatpush2.msra.mxu0 0.0
        %3527 = vmatprep.subr.mxu0 0.0
        %3528 = vmatpush2.msra.mxu0 0.0
        %3529 = vmatprep.subr.mxu0 0.0
        %3530 = vmatpush2.msra.mxu0 0.0
        %3531 = vmatprep.subr.mxu0 0.0
        %3532 = vmatpush2.msra.mxu0 0.0
        %3533 = vmatprep.subr.mxu0 0.0
        %3534 = vmatpush2.msra.mxu0 0.0
        %3535 = vmatprep.subr.mxu0 0.0
        %3536 = vmatpush2.msra.mxu0 0.0
        %3537 = vmatprep.mubr.f32.mxu0 0.0
        %3538 = vmatmul.mubr.f32.gmra.mxu0 %v427
        %v3539 = vpop.f32.mrf.mxu0
        %v3540 = vadd.f32 0.0, %v3539
        %v3541 = vpop.f32.mrf.mxu0
        %v3542 = vadd.f32 0.0, %v3541
        %3543 = vmatprep.mubr.f32.mxu0 0.0
        %3544 = vmatmul.mubr.f32.gmra.mxu0 %v430
        %v3545 = vpop.f32.mrf.mxu0
        %v3546 = vadd.f32 0.0, %v3545
        %v3547 = vpop.f32.mrf.mxu0
        %v3548 = vadd.f32 0.0, %v3547
        %3549 = vmatprep.mubr.f32.mxu0 0.0
        %3550 = vmatmul.mubr.f32.gmra.mxu0 %v433
        %v3551 = vpop.f32.mrf.mxu0
        %v3552 = vadd.f32 0.0, %v3551
        %v3553 = vpop.f32.mrf.mxu0
        %v3554 = vadd.f32 0.0, %v3553
        %3555 = vmatprep.mubr.f32.mxu0 0.0
        %3556 = vmatmul.mubr.f32.gmra.mxu0 %v436
        %v3557 = vpop.f32.mrf.mxu0
        %v3558 = vadd.f32 0.0, %v3557
        %v3559 = vpop.f32.mrf.mxu0
        %v3560 = vadd.f32 0.0, %v3559
        %3561 = vmatprep.mubr.f32.mxu0 0.0
        %3562 = vmatmul.mubr.f32.gmra.mxu0 %v439
        %v3563 = vpop.f32.mrf.mxu0
        %v3564 = vadd.f32 0.0, %v3563
        %v3565 = vpop.f32.mrf.mxu0
        %v3566 = vadd.f32 0.0, %v3565
        %3567 = vmatprep.mubr.f32.mxu0 0.0
        %3568 = vmatmul.mubr.f32.gmra.mxu0 %v442
        %v3569 = vpop.f32.mrf.mxu0
        %v3570 = vadd.f32 0.0, %v3569
        %v3571 = vpop.f32.mrf.mxu0
        %v3572 = vadd.f32 0.0, %v3571
        %3573 = vmatprep.mubr.f32.mxu0 0.0
        %3574 = vmatmul.mubr.f32.gmra.mxu0 %v445
        %v3575 = vpop.f32.mrf.mxu0
        %v3576 = vadd.f32 0.0, %v3575
        %v3577 = vpop.f32.mrf.mxu0
        %v3578 = vadd.f32 0.0, %v3577
        %3579 = vmatprep.mubr.f32.mxu0 0.0
        %3580 = vmatmul.mubr.f32.gmra.mxu0 %v448
        %v3581 = vpop.f32.mrf.mxu0
        %v3582 = vadd.f32 0.0, %v3581
        %v3583 = vpop.f32.mrf.mxu0
        %v3584 = vadd.f32 0.0, %v3583
        %3585 = vmatprep.mubr.f32.mxu0 0.0
        %3586 = vmatmul.mubr.f32.gmra.mxu0 %v451
        %v3587 = vpop.f32.mrf.mxu0
        %v3588 = vadd.f32 0.0, %v3587
        %v3589 = vpop.f32.mrf.mxu0
        %v3590 = vadd.f32 0.0, %v3589
        %3591 = vmatprep.mubr.f32.mxu0 0.0
        %3592 = vmatmul.mubr.f32.gmra.mxu0 %v454
        %v3593 = vpop.f32.mrf.mxu0
        %v3594 = vadd.f32 0.0, %v3593
        %v3595 = vpop.f32.mrf.mxu0
        %v3596 = vadd.f32 0.0, %v3595
        %3597 = vmatprep.mubr.f32.mxu0 0.0
        %3598 = vmatmul.mubr.f32.gmra.mxu0 %v457
        %v3599 = vpop.f32.mrf.mxu0
        %v3600 = vadd.f32 0.0, %v3599
        %v3601 = vpop.f32.mrf.mxu0
        %v3602 = vadd.f32 0.0, %v3601
        %3603 = vmatprep.mubr.f32.mxu0 0.0
        %3604 = vmatmul.mubr.f32.gmra.mxu0 %v460
        %v3605 = vpop.f32.mrf.mxu0
        %v3606 = vadd.f32 0.0, %v3605
        %v3607 = vpop.f32.mrf.mxu0
        %v3608 = vadd.f32 0.0, %v3607
        %3609 = vmatprep.mubr.f32.mxu0 0.0
        %3610 = vmatmul.mubr.f32.gmra.mxu0 %v463
        %v3611 = vpop.f32.mrf.mxu0
        %v3612 = vadd.f32 0.0, %v3611
        %v3613 = vpop.f32.mrf.mxu0
        %v3614 = vadd.f32 0.0, %v3613
        %3615 = vmatprep.mubr.f32.mxu0 0.0
        %3616 = vmatmul.mubr.f32.gmra.mxu0 %v466
        %v3617 = vpop.f32.mrf.mxu0
        %v3618 = vadd.f32 0.0, %v3617
        %v3619 = vpop.f32.mrf.mxu0
        %v3620 = vadd.f32 0.0, %v3619
        %3621 = vmatprep.mubr.f32.mxu0 0.0
        %3622 = vmatmul.mubr.f32.gmra.mxu0 %v469
        %v3623 = vpop.f32.mrf.mxu0
        %v3624 = vadd.f32 0.0, %v3623
        %v3625 = vpop.f32.mrf.mxu0
        %v3626 = vadd.f32 0.0, %v3625
        %3627 = vmatprep.mubr.f32.mxu0 0.0
        %3628 = vmatmul.mubr.f32.gmra.mxu0 %v472
        %v3629 = vpop.f32.mrf.mxu0
        %v3630 = vadd.f32 0.0, %v3629
        %v3631 = vpop.f32.mrf.mxu0
        %v3632 = vadd.f32 0.0, %v3631
        %3633 = vmatprep.mubr.f32.mxu0 0.0
        %3634 = vmatmul.mubr.f32.gmra.mxu0 %v475
        %v3635 = vpop.f32.mrf.mxu0
        %v3636 = vadd.f32 0.0, %v3635
        %v3637 = vpop.f32.mrf.mxu0
        %v3638 = vadd.f32 0.0, %v3637
        %3639 = vmatprep.mubr.f32.mxu0 0.0
        %3640 = vmatmul.mubr.f32.gmra.mxu0 %v478
        %v3641 = vpop.f32.mrf.mxu0
        %v3642 = vadd.f32 0.0, %v3641
        %v3643 = vpop.f32.mrf.mxu0
        %v3644 = vadd.f32 0.0, %v3643
        %3645 = vmatprep.mubr.f32.mxu0 0.0
        %3646 = vmatmul.mubr.f32.gmra.mxu0 %v481
        %v3647 = vpop.f32.mrf.mxu0
        %v3648 = vadd.f32 0.0, %v3647
        %v3649 = vpop.f32.mrf.mxu0
        %v3650 = vadd.f32 0.0, %v3649
        %3651 = vmatprep.mubr.f32.mxu0 0.0
        %3652 = vmatmul.mubr.f32.gmra.mxu0 %v484
        %v3653 = vpop.f32.mrf.mxu0
        %v3654 = vadd.f32 0.0, %v3653
        %v3655 = vpop.f32.mrf.mxu0
        %v3656 = vadd.f32 0.0, %v3655
        %3657 = vmatprep.mubr.f32.mxu0 0.0
        %3658 = vmatmul.mubr.f32.gmra.mxu0 %v487
        %v3659 = vpop.f32.mrf.mxu0
        %v3660 = vadd.f32 0.0, %v3659
        %v3661 = vpop.f32.mrf.mxu0
        %v3662 = vadd.f32 0.0, %v3661
        %3663 = vmatprep.mubr.f32.mxu0 0.0
        %3664 = vmatmul.mubr.f32.gmra.mxu0 %v490
        %v3665 = vpop.f32.mrf.mxu0
        %v3666 = vadd.f32 0.0, %v3665
        %v3667 = vpop.f32.mrf.mxu0
        %v3668 = vadd.f32 0.0, %v3667
        %3669 = vmatprep.mubr.f32.mxu0 0.0
        %3670 = vmatmul.mubr.f32.gmra.mxu0 %v493
        %v3671 = vpop.f32.mrf.mxu0
        %v3672 = vadd.f32 0.0, %v3671
        %v3673 = vpop.f32.mrf.mxu0
        %v3674 = vadd.f32 0.0, %v3673
        %3675 = vmatprep.mubr.f32.mxu0 0.0
        %3676 = vmatmul.mubr.f32.gmra.mxu0 %v496
        %v3677 = vpop.f32.mrf.mxu0
        %v3678 = vadd.f32 0.0, %v3677
        %v3679 = vpop.f32.mrf.mxu0
        %v3680 = vadd.f32 0.0, %v3679
        %3681 = vmatprep.mubr.f32.mxu0 0.0
        %3682 = vmatmul.mubr.f32.gmra.mxu0 %v499
        %v3683 = vpop.f32.mrf.mxu0
        %v3684 = vadd.f32 0.0, %v3683
        %v3685 = vpop.f32.mrf.mxu0
        %v3686 = vadd.f32 0.0, %v3685
        %3687 = vmatprep.mubr.f32.mxu0 0.0
        %3688 = vmatmul.mubr.f32.gmra.mxu0 %v502
        %v3689 = vpop.f32.mrf.mxu0
        %v3690 = vadd.f32 0.0, %v3689
        %v3691 = vpop.f32.mrf.mxu0
        %v3692 = vadd.f32 0.0, %v3691
        %3693 = vmatprep.mubr.f32.mxu0 0.0
        %3694 = vmatmul.mubr.f32.gmra.mxu0 %v505
        %v3695 = vpop.f32.mrf.mxu0
        %v3696 = vadd.f32 0.0, %v3695
        %v3697 = vpop.f32.mrf.mxu0
        %v3698 = vadd.f32 0.0, %v3697
        %3699 = vmatprep.mubr.f32.mxu0 0.0
        %3700 = vmatmul.mubr.f32.gmra.mxu0 %v508
        %v3701 = vpop.f32.mrf.mxu0
        %v3702 = vadd.f32 0.0, %v3701
        %v3703 = vpop.f32.mrf.mxu0
        %v3704 = vadd.f32 0.0, %v3703
        %3705 = vmatprep.mubr.f32.mxu0 0.0
        %3706 = vmatmul.mubr.f32.gmra.mxu0 %v511
        %v3707 = vpop.f32.mrf.mxu0
        %v3708 = vadd.f32 0.0, %v3707
        %v3709 = vpop.f32.mrf.mxu0
        %v3710 = vadd.f32 0.0, %v3709
        %3711 = vmatprep.mubr.f32.mxu0 0.0
        %3712 = vmatmul.mubr.f32.gmra.mxu0 %v514
        %v3713 = vpop.f32.mrf.mxu0
        %v3714 = vadd.f32 0.0, %v3713
        %v3715 = vpop.f32.mrf.mxu0
        %v3716 = vadd.f32 0.0, %v3715
        %3717 = vmatprep.mubr.f32.mxu0 0.0
        %3718 = vmatmul.mubr.f32.gmra.mxu0 %v517
        %v3719 = vpop.f32.mrf.mxu0
        %v3720 = vadd.f32 0.0, %v3719
        %v3721 = vpop.f32.mrf.mxu0
        %v3722 = vadd.f32 0.0, %v3721
        %3723 = vmatprep.mubr.f32.mxu0 0.0
        %3724 = vmatmul.mubr.f32.gmra.mxu0 %v520
        %v3725 = vpop.f32.mrf.mxu0
        %v3726 = vadd.f32 0.0, %v3725
        %v3727 = vpop.f32.mrf.mxu0
        %v3728 = vadd.f32 0.0, %v3727
        %3729 = vmatprep.mubr.f32.mxu0 0.0
        %3730 = vmatmul.mubr.f32.gmra.mxu0 %v523
        %v3731 = vpop.f32.mrf.mxu0
        %v3732 = vadd.f32 0.0, %v3731
        %v3733 = vpop.f32.mrf.mxu0
        %v3734 = vadd.f32 0.0, %v3733
        %3735 = vmatprep.mubr.f32.mxu0 0.0
        %3736 = vmatmul.mubr.f32.gmra.mxu0 %v526
        %v3737 = vpop.f32.mrf.mxu0
        %v3738 = vadd.f32 0.0, %v3737
        %v3739 = vpop.f32.mrf.mxu0
        %v3740 = vadd.f32 0.0, %v3739
        %3741 = vmatprep.mubr.f32.mxu0 0.0
        %3742 = vmatmul.mubr.f32.gmra.mxu0 %v529
        %v3743 = vpop.f32.mrf.mxu0
        %v3744 = vadd.f32 0.0, %v3743
        %v3745 = vpop.f32.mrf.mxu0
        %v3746 = vadd.f32 0.0, %v3745
        %3747 = vmatprep.mubr.f32.mxu0 0.0
        %3748 = vmatmul.mubr.f32.gmra.mxu0 %v532
        %v3749 = vpop.f32.mrf.mxu0
        %v3750 = vadd.f32 0.0, %v3749
        %v3751 = vpop.f32.mrf.mxu0
        %v3752 = vadd.f32 0.0, %v3751
        %3753 = vmatprep.mubr.f32.mxu0 0.0
        %3754 = vmatmul.mubr.f32.gmra.mxu0 %v535
        %v3755 = vpop.f32.mrf.mxu0
        %v3756 = vadd.f32 0.0, %v3755
        %v3757 = vpop.f32.mrf.mxu0
        %v3758 = vadd.f32 0.0, %v3757
        %3759 = vmatprep.mubr.f32.mxu0 0.0
        %3760 = vmatmul.mubr.f32.gmra.mxu0 %v538
        %v3761 = vpop.f32.mrf.mxu0
        %v3762 = vadd.f32 0.0, %v3761
        %v3763 = vpop.f32.mrf.mxu0
        %v3764 = vadd.f32 0.0, %v3763
        %3765 = vmatprep.mubr.f32.mxu0 0.0
        %3766 = vmatmul.mubr.f32.gmra.mxu0 %v541
        %v3767 = vpop.f32.mrf.mxu0
        %v3768 = vadd.f32 0.0, %v3767
        %v3769 = vpop.f32.mrf.mxu0
        %v3770 = vadd.f32 0.0, %v3769
        %3771 = vmatprep.mubr.f32.mxu0 0.0
        %3772 = vmatmul.mubr.f32.gmra.mxu0 %v544
        %v3773 = vpop.f32.mrf.mxu0
        %v3774 = vadd.f32 0.0, %v3773
        %v3775 = vpop.f32.mrf.mxu0
        %v3776 = vadd.f32 0.0, %v3775
        %3777 = vmatprep.mubr.f32.mxu0 0.0
        %3778 = vmatmul.mubr.f32.gmra.mxu0 %v547
        %v3779 = vpop.f32.mrf.mxu0
        %v3780 = vadd.f32 0.0, %v3779
        %v3781 = vpop.f32.mrf.mxu0
        %v3782 = vadd.f32 0.0, %v3781
        %3783 = vmatprep.mubr.f32.mxu0 0.0
        %3784 = vmatmul.mubr.f32.gmra.mxu0 %v550
        %v3785 = vpop.f32.mrf.mxu0
        %v3786 = vadd.f32 0.0, %v3785
        %v3787 = vpop.f32.mrf.mxu0
        %v3788 = vadd.f32 0.0, %v3787
        %3789 = vmatprep.mubr.f32.mxu0 0.0
        %3790 = vmatmul.mubr.f32.gmra.mxu0 %v553
        %v3791 = vpop.f32.mrf.mxu0
        %v3792 = vadd.f32 0.0, %v3791
        %v3793 = vpop.f32.mrf.mxu0
        %v3794 = vadd.f32 0.0, %v3793
        %3795 = vmatprep.mubr.f32.mxu0 0.0
        %3796 = vmatmul.mubr.f32.gmra.mxu0 %v556
        %v3797 = vpop.f32.mrf.mxu0
        %v3798 = vadd.f32 0.0, %v3797
        %v3799 = vpop.f32.mrf.mxu0
        %v3800 = vadd.f32 0.0, %v3799
        %3801 = vmatprep.mubr.f32.mxu0 0.0
        %3802 = vmatmul.mubr.f32.gmra.mxu0 %v559
        %v3803 = vpop.f32.mrf.mxu0
        %v3804 = vadd.f32 0.0, %v3803
        %v3805 = vpop.f32.mrf.mxu0
        %v3806 = vadd.f32 0.0, %v3805
        %3807 = vmatprep.mubr.f32.mxu0 0.0
        %3808 = vmatmul.mubr.f32.gmra.mxu0 %v562
        %v3809 = vpop.f32.mrf.mxu0
        %v3810 = vadd.f32 0.0, %v3809
        %v3811 = vpop.f32.mrf.mxu0
        %v3812 = vadd.f32 0.0, %v3811
        %3813 = vmatprep.mubr.f32.mxu0 0.0
        %3814 = vmatmul.mubr.f32.gmra.mxu0 %v565
        %v3815 = vpop.f32.mrf.mxu0
        %v3816 = vadd.f32 0.0, %v3815
        %v3817 = vpop.f32.mrf.mxu0
        %v3818 = vadd.f32 0.0, %v3817
        %3819 = vmatprep.mubr.f32.mxu0 0.0
        %3820 = vmatmul.mubr.f32.gmra.mxu0 %v568
        %v3821 = vpop.f32.mrf.mxu0
        %v3822 = vadd.f32 0.0, %v3821
        %v3823 = vpop.f32.mrf.mxu0
        %v3824 = vadd.f32 0.0, %v3823
        %3825 = vdwg.mxu0
        %3826 = vmatprep.subr.mxu0 0.0
        %3827 = vmatpush1.msra.mxu0 0.0
        %3828 = vmatprep.subr.mxu0 0.0
        %3829 = vmatpush1.msra.mxu0 0.0
        %3830 = vmatprep.subr.mxu0 0.0
        %3831 = vmatpush1.msra.mxu0 0.0
        %3832 = vmatprep.subr.mxu0 0.0
        %3833 = vmatpush1.msra.mxu0 0.0
        %3834 = vmatprep.subr.mxu0 0.0
        %3835 = vmatpush1.msra.mxu0 0.0
        %3836 = vmatprep.subr.mxu0 0.0
        %3837 = vmatpush1.msra.mxu0 0.0
        %3838 = vmatprep.subr.mxu0 0.0
        %3839 = vmatpush1.msra.mxu0 0.0
        %3840 = vmatprep.subr.mxu0 0.0
        %3841 = vmatpush1.msra.mxu0 0.0
        %3842 = vmatprep.subr.mxu0 0.0
        %3843 = vmatpush1.msra.mxu0 0.0
        %3844 = vmatprep.subr.mxu0 0.0
        %3845 = vmatpush1.msra.mxu0 0.0
        %3846 = vmatprep.subr.mxu0 0.0
        %3847 = vmatpush1.msra.mxu0 0.0
        %3848 = vmatprep.subr.mxu0 0.0
        %3849 = vmatpush1.msra.mxu0 0.0
        %3850 = vmatprep.subr.mxu0 0.0
        %3851 = vmatpush1.msra.mxu0 0.0
        %3852 = vmatprep.subr.mxu0 0.0
        %3853 = vmatpush1.msra.mxu0 0.0
        %3854 = vmatprep.subr.mxu0 0.0
        %3855 = vmatpush1.msra.mxu0 %v3470
        %3856 = vmatprep.subr.mxu0 0.0
        %3857 = vmatpush1.msra.mxu0 %v3465
        %3858 = vmatprep.subr.mxu0 0.0
        %3859 = vmatpush2.msra.mxu0 0.0
        %3860 = vmatprep.subr.mxu0 0.0
        %3861 = vmatpush2.msra.mxu0 0.0
        %3862 = vmatprep.subr.mxu0 0.0
        %3863 = vmatpush2.msra.mxu0 0.0
        %3864 = vmatprep.subr.mxu0 0.0
        %3865 = vmatpush2.msra.mxu0 0.0
        %3866 = vmatprep.subr.mxu0 0.0
        %3867 = vmatpush2.msra.mxu0 0.0
        %3868 = vmatprep.subr.mxu0 0.0
        %3869 = vmatpush2.msra.mxu0 0.0
        %3870 = vmatprep.subr.mxu0 0.0
        %3871 = vmatpush2.msra.mxu0 0.0
        %3872 = vmatprep.subr.mxu0 0.0
        %3873 = vmatpush2.msra.mxu0 0.0
        %3874 = vmatprep.subr.mxu0 0.0
        %3875 = vmatpush2.msra.mxu0 0.0
        %3876 = vmatprep.subr.mxu0 0.0
        %3877 = vmatpush2.msra.mxu0 0.0
        %3878 = vmatprep.subr.mxu0 0.0
        %3879 = vmatpush2.msra.mxu0 0.0
        %3880 = vmatprep.subr.mxu0 0.0
        %3881 = vmatpush2.msra.mxu0 0.0
        %3882 = vmatprep.subr.mxu0 0.0
        %3883 = vmatpush2.msra.mxu0 0.0
        %3884 = vmatprep.subr.mxu0 0.0
        %3885 = vmatpush2.msra.mxu0 0.0
        %3886 = vmatprep.subr.mxu0 0.0
        %3887 = vmatpush2.msra.mxu0 0.0
        %3888 = vmatprep.subr.mxu0 0.0
        %3889 = vmatpush2.msra.mxu0 0.0
        %3890 = vmatprep.mubr.f32.mxu0 0.0
        %3891 = vmatmul.mubr.f32.gmra.mxu0 %v427
        %v3892 = vpop.f32.mrf.mxu0
        %v3893 = vadd.f32 0.0, %v3892
        %v3894 = vpop.f32.mrf.mxu0
        %3895 = vmatprep.mubr.f32.mxu0 0.0
        %3896 = vmatmul.mubr.f32.gmra.mxu0 %v430
        %v3897 = vpop.f32.mrf.mxu0
        %v3898 = vadd.f32 0.0, %v3897
        %v3899 = vpop.f32.mrf.mxu0
        %3900 = vmatprep.mubr.f32.mxu0 0.0
        %3901 = vmatmul.mubr.f32.gmra.mxu0 %v433
        %v3902 = vpop.f32.mrf.mxu0
        %v3903 = vadd.f32 0.0, %v3902
        %v3904 = vpop.f32.mrf.mxu0
        %3905 = vmatprep.mubr.f32.mxu0 0.0
        %3906 = vmatmul.mubr.f32.gmra.mxu0 %v436
        %v3907 = vpop.f32.mrf.mxu0
        %v3908 = vadd.f32 0.0, %v3907
        %v3909 = vpop.f32.mrf.mxu0
        %3910 = vmatprep.mubr.f32.mxu0 0.0
        %3911 = vmatmul.mubr.f32.gmra.mxu0 %v439
        %v3912 = vpop.f32.mrf.mxu0
        %v3913 = vadd.f32 0.0, %v3912
        %v3914 = vpop.f32.mrf.mxu0
        %3915 = vmatprep.mubr.f32.mxu0 0.0
        %3916 = vmatmul.mubr.f32.gmra.mxu0 %v442
        %v3917 = vpop.f32.mrf.mxu0
        %v3918 = vadd.f32 0.0, %v3917
        %v3919 = vpop.f32.mrf.mxu0
        %3920 = vmatprep.mubr.f32.mxu0 0.0
        %3921 = vmatmul.mubr.f32.gmra.mxu0 %v445
        %v3922 = vpop.f32.mrf.mxu0
        %v3923 = vadd.f32 0.0, %v3922
        %v3924 = vpop.f32.mrf.mxu0
        %3925 = vmatprep.mubr.f32.mxu0 0.0
        %3926 = vmatmul.mubr.f32.gmra.mxu0 %v448
        %v3927 = vpop.f32.mrf.mxu0
        %v3928 = vadd.f32 0.0, %v3927
        %v3929 = vpop.f32.mrf.mxu0
        %3930 = vmatprep.mubr.f32.mxu0 0.0
        %3931 = vmatmul.mubr.f32.gmra.mxu0 %v451
        %v3932 = vpop.f32.mrf.mxu0
        %v3933 = vadd.f32 0.0, %v3932
        %v3934 = vpop.f32.mrf.mxu0
        %3935 = vmatprep.mubr.f32.mxu0 0.0
        %3936 = vmatmul.mubr.f32.gmra.mxu0 %v454
        %v3937 = vpop.f32.mrf.mxu0
        %v3938 = vadd.f32 0.0, %v3937
        %v3939 = vpop.f32.mrf.mxu0
        %3940 = vmatprep.mubr.f32.mxu0 0.0
        %3941 = vmatmul.mubr.f32.gmra.mxu0 %v457
        %v3942 = vpop.f32.mrf.mxu0
        %v3943 = vadd.f32 0.0, %v3942
        %v3944 = vpop.f32.mrf.mxu0
        %3945 = vmatprep.mubr.f32.mxu0 0.0
        %3946 = vmatmul.mubr.f32.gmra.mxu0 %v460
        %v3947 = vpop.f32.mrf.mxu0
        %v3948 = vadd.f32 0.0, %v3947
        %v3949 = vpop.f32.mrf.mxu0
        %3950 = vmatprep.mubr.f32.mxu0 0.0
        %3951 = vmatmul.mubr.f32.gmra.mxu0 %v463
        %v3952 = vpop.f32.mrf.mxu0
        %v3953 = vadd.f32 0.0, %v3952
        %v3954 = vpop.f32.mrf.mxu0
        %3955 = vmatprep.mubr.f32.mxu0 0.0
        %3956 = vmatmul.mubr.f32.gmra.mxu0 %v466
        %v3957 = vpop.f32.mrf.mxu0
        %v3958 = vadd.f32 0.0, %v3957
        %v3959 = vpop.f32.mrf.mxu0
        %3960 = vmatprep.mubr.f32.mxu0 0.0
        %3961 = vmatmul.mubr.f32.gmra.mxu0 %v469
        %v3962 = vpop.f32.mrf.mxu0
        %v3963 = vadd.f32 0.0, %v3962
        %v3964 = vpop.f32.mrf.mxu0
        %3965 = vmatprep.mubr.f32.mxu0 0.0
        %3966 = vmatmul.mubr.f32.gmra.mxu0 %v472
        %v3967 = vpop.f32.mrf.mxu0
        %v3968 = vadd.f32 0.0, %v3967
        %v3969 = vpop.f32.mrf.mxu0
        %3970 = vmatprep.mubr.f32.mxu0 0.0
        %3971 = vmatmul.mubr.f32.gmra.mxu0 %v475
        %v3972 = vpop.f32.mrf.mxu0
        %v3973 = vadd.f32 0.0, %v3972
        %v3974 = vpop.f32.mrf.mxu0
        %3975 = vmatprep.mubr.f32.mxu0 0.0
        %3976 = vmatmul.mubr.f32.gmra.mxu0 %v478
        %v3977 = vpop.f32.mrf.mxu0
        %v3978 = vadd.f32 0.0, %v3977
        %v3979 = vpop.f32.mrf.mxu0
        %3980 = vmatprep.mubr.f32.mxu0 0.0
        %3981 = vmatmul.mubr.f32.gmra.mxu0 %v481
        %v3982 = vpop.f32.mrf.mxu0
        %v3983 = vadd.f32 0.0, %v3982
        %v3984 = vpop.f32.mrf.mxu0
        %3985 = vmatprep.mubr.f32.mxu0 0.0
        %3986 = vmatmul.mubr.f32.gmra.mxu0 %v484
        %v3987 = vpop.f32.mrf.mxu0
        %v3988 = vadd.f32 0.0, %v3987
        %v3989 = vpop.f32.mrf.mxu0
        %3990 = vmatprep.mubr.f32.mxu0 0.0
        %3991 = vmatmul.mubr.f32.gmra.mxu0 %v487
        %v3992 = vpop.f32.mrf.mxu0
        %v3993 = vadd.f32 0.0, %v3992
        %v3994 = vpop.f32.mrf.mxu0
        %3995 = vmatprep.mubr.f32.mxu0 0.0
        %3996 = vmatmul.mubr.f32.gmra.mxu0 %v490
        %v3997 = vpop.f32.mrf.mxu0
        %v3998 = vadd.f32 0.0, %v3997
        %v3999 = vpop.f32.mrf.mxu0
        %4000 = vmatprep.mubr.f32.mxu0 0.0
        %4001 = vmatmul.mubr.f32.gmra.mxu0 %v493
        %v4002 = vpop.f32.mrf.mxu0
        %v4003 = vadd.f32 0.0, %v4002
        %v4004 = vpop.f32.mrf.mxu0
        %4005 = vmatprep.mubr.f32.mxu0 0.0
        %4006 = vmatmul.mubr.f32.gmra.mxu0 %v496
        %v4007 = vpop.f32.mrf.mxu0
        %v4008 = vadd.f32 0.0, %v4007
        %v4009 = vpop.f32.mrf.mxu0
        %4010 = vmatprep.mubr.f32.mxu0 0.0
        %4011 = vmatmul.mubr.f32.gmra.mxu0 %v499
        %v4012 = vpop.f32.mrf.mxu0
        %v4013 = vadd.f32 0.0, %v4012
        %v4014 = vpop.f32.mrf.mxu0
        %4015 = vmatprep.mubr.f32.mxu0 0.0
        %4016 = vmatmul.mubr.f32.gmra.mxu0 %v502
        %v4017 = vpop.f32.mrf.mxu0
        %v4018 = vadd.f32 0.0, %v4017
        %v4019 = vpop.f32.mrf.mxu0
        %4020 = vmatprep.mubr.f32.mxu0 0.0
        %4021 = vmatmul.mubr.f32.gmra.mxu0 %v505
        %v4022 = vpop.f32.mrf.mxu0
        %v4023 = vadd.f32 0.0, %v4022
        %v4024 = vpop.f32.mrf.mxu0
        %4025 = vmatprep.mubr.f32.mxu0 0.0
        %4026 = vmatmul.mubr.f32.gmra.mxu0 %v508
        %v4027 = vpop.f32.mrf.mxu0
        %v4028 = vadd.f32 0.0, %v4027
        %v4029 = vpop.f32.mrf.mxu0
        %4030 = vmatprep.mubr.f32.mxu0 0.0
        %4031 = vmatmul.mubr.f32.gmra.mxu0 %v511
        %v4032 = vpop.f32.mrf.mxu0
        %v4033 = vadd.f32 0.0, %v4032
        %v4034 = vpop.f32.mrf.mxu0
        %4035 = vmatprep.mubr.f32.mxu0 0.0
        %4036 = vmatmul.mubr.f32.gmra.mxu0 %v514
        %v4037 = vpop.f32.mrf.mxu0
        %v4038 = vadd.f32 0.0, %v4037
        %v4039 = vpop.f32.mrf.mxu0
        %4040 = vmatprep.mubr.f32.mxu0 0.0
        %4041 = vmatmul.mubr.f32.gmra.mxu0 %v517
        %v4042 = vpop.f32.mrf.mxu0
        %v4043 = vadd.f32 0.0, %v4042
        %v4044 = vpop.f32.mrf.mxu0
        %4045 = vmatprep.mubr.f32.mxu0 0.0
        %4046 = vmatmul.mubr.f32.gmra.mxu0 %v520
        %v4047 = vpop.f32.mrf.mxu0
        %v4048 = vadd.f32 0.0, %v4047
        %v4049 = vpop.f32.mrf.mxu0
        %4050 = vmatprep.mubr.f32.mxu0 0.0
        %4051 = vmatmul.mubr.f32.gmra.mxu0 %v523
        %v4052 = vpop.f32.mrf.mxu0
        %v4053 = vadd.f32 0.0, %v4052
        %v4054 = vpop.f32.mrf.mxu0
        %4055 = vmatprep.mubr.f32.mxu0 0.0
        %4056 = vmatmul.mubr.f32.gmra.mxu0 %v526
        %v4057 = vpop.f32.mrf.mxu0
        %v4058 = vadd.f32 0.0, %v4057
        %v4059 = vpop.f32.mrf.mxu0
        %4060 = vmatprep.mubr.f32.mxu0 0.0
        %4061 = vmatmul.mubr.f32.gmra.mxu0 %v529
        %v4062 = vpop.f32.mrf.mxu0
        %v4063 = vadd.f32 0.0, %v4062
        %v4064 = vpop.f32.mrf.mxu0
        %4065 = vmatprep.mubr.f32.mxu0 0.0
        %4066 = vmatmul.mubr.f32.gmra.mxu0 %v532
        %v4067 = vpop.f32.mrf.mxu0
        %v4068 = vadd.f32 0.0, %v4067
        %v4069 = vpop.f32.mrf.mxu0
        %4070 = vmatprep.mubr.f32.mxu0 0.0
        %4071 = vmatmul.mubr.f32.gmra.mxu0 %v535
        %v4072 = vpop.f32.mrf.mxu0
        %v4073 = vadd.f32 0.0, %v4072
        %v4074 = vpop.f32.mrf.mxu0
        %4075 = vmatprep.mubr.f32.mxu0 0.0
        %4076 = vmatmul.mubr.f32.gmra.mxu0 %v538
        %v4077 = vpop.f32.mrf.mxu0
        %v4078 = vadd.f32 0.0, %v4077
        %v4079 = vpop.f32.mrf.mxu0
        %4080 = vmatprep.mubr.f32.mxu0 0.0
        %4081 = vmatmul.mubr.f32.gmra.mxu0 %v541
        %v4082 = vpop.f32.mrf.mxu0
        %v4083 = vadd.f32 0.0, %v4082
        %v4084 = vpop.f32.mrf.mxu0
        %4085 = vmatprep.mubr.f32.mxu0 0.0
        %4086 = vmatmul.mubr.f32.gmra.mxu0 %v544
        %v4087 = vpop.f32.mrf.mxu0
        %v4088 = vadd.f32 0.0, %v4087
        %v4089 = vpop.f32.mrf.mxu0
        %4090 = vmatprep.mubr.f32.mxu0 0.0
        %4091 = vmatmul.mubr.f32.gmra.mxu0 %v547
        %v4092 = vpop.f32.mrf.mxu0
        %v4093 = vadd.f32 0.0, %v4092
        %v4094 = vpop.f32.mrf.mxu0
        %4095 = vmatprep.mubr.f32.mxu0 0.0
        %4096 = vmatmul.mubr.f32.gmra.mxu0 %v550
        %v4097 = vpop.f32.mrf.mxu0
        %v4098 = vadd.f32 0.0, %v4097
        %v4099 = vpop.f32.mrf.mxu0
        %4100 = vmatprep.mubr.f32.mxu0 0.0
        %4101 = vmatmul.mubr.f32.gmra.mxu0 %v553
        %v4102 = vpop.f32.mrf.mxu0
        %v4103 = vadd.f32 0.0, %v4102
        %v4104 = vpop.f32.mrf.mxu0
        %4105 = vmatprep.mubr.f32.mxu0 0.0
        %4106 = vmatmul.mubr.f32.gmra.mxu0 %v556
        %v4107 = vpop.f32.mrf.mxu0
        %v4108 = vadd.f32 0.0, %v4107
        %v4109 = vpop.f32.mrf.mxu0
        %4110 = vmatprep.mubr.f32.mxu0 0.0
        %4111 = vmatmul.mubr.f32.gmra.mxu0 %v559
        %v4112 = vpop.f32.mrf.mxu0
        %v4113 = vadd.f32 0.0, %v4112
        %v4114 = vpop.f32.mrf.mxu0
        %4115 = vmatprep.mubr.f32.mxu0 0.0
        %4116 = vmatmul.mubr.f32.gmra.mxu0 %v562
        %v4117 = vpop.f32.mrf.mxu0
        %v4118 = vadd.f32 0.0, %v4117
        %v4119 = vpop.f32.mrf.mxu0
        %4120 = vmatprep.mubr.f32.mxu0 0.0
        %4121 = vmatmul.mubr.f32.gmra.mxu0 %v565
        %v4122 = vpop.f32.mrf.mxu0
        %v4123 = vadd.f32 0.0, %v4122
        %v4124 = vpop.f32.mrf.mxu0
        %4125 = vmatprep.mubr.f32.mxu0 0.0
        %4126 = vmatmul.mubr.f32.gmra.mxu0 %v568
        %v4127 = vpop.f32.mrf.mxu0
        %v4128 = vadd.f32 0.0, %v4127
        %v4129 = vpop.f32.mrf.mxu0
        %4130 = vdwg.mxu0
        %s4131 = scalar_lea.vmem %s204, 3456 [#allocation7]
        %4132 = vst [vmem:[%s4131] sm:$0xff] %v3540
        %4133 = vst [vmem:[%s4131 + $0x8] sm:$0xff] %v3542
        %4134 = vst [vmem:[%s4131 + $0x10] sm:$0xff] %v3893
        %4135 = vst [vmem:[%s4131 + $0x18] sm:$0xff] %v3546
        %4136 = vst [vmem:[%s4131 + $0x20] sm:$0xff] %v3548
        %4137 = vst [vmem:[%s4131 + $0x28] sm:$0xff] %v3898
        %4138 = vst [vmem:[%s4131 + $0x30] sm:$0xff] %v3552
        %4139 = vst [vmem:[%s4131 + $0x38] sm:$0xff] %v3554
        %4140 = vst [vmem:[%s4131 + $0x40] sm:$0xff] %v3903
        %4141 = vst [vmem:[%s4131 + $0x48] sm:$0xff] %v3558
        %4142 = vst [vmem:[%s4131 + $0x50] sm:$0xff] %v3560
        %4143 = vst [vmem:[%s4131 + $0x58] sm:$0xff] %v3908
        %4144 = vst [vmem:[%s4131 + $0x60] sm:$0xff] %v3564
        %4145 = vst [vmem:[%s4131 + $0x68] sm:$0xff] %v3566
        %4146 = vst [vmem:[%s4131 + $0x70] sm:$0xff] %v3913
        %4147 = vst [vmem:[%s4131 + $0x78] sm:$0xff] %v3570
        %4148 = vst [vmem:[%s4131 + $0x80] sm:$0xff] %v3572
        %4149 = vst [vmem:[%s4131 + $0x88] sm:$0xff] %v3918
        %4150 = vst [vmem:[%s4131 + $0x90] sm:$0xff] %v3576
        %4151 = vst [vmem:[%s4131 + $0x98] sm:$0xff] %v3578
        %4152 = vst [vmem:[%s4131 + $0xa0] sm:$0xff] %v3923
        %4153 = vst [vmem:[%s4131 + $0xa8] sm:$0xff] %v3582
        %4154 = vst [vmem:[%s4131 + $0xb0] sm:$0xff] %v3584
        %4155 = vst [vmem:[%s4131 + $0xb8] sm:$0xff] %v3928
        %4156 = vst [vmem:[%s4131 + $0xc0] sm:$0xff] %v3588
        %4157 = vst [vmem:[%s4131 + $0xc8] sm:$0xff] %v3590
        %4158 = vst [vmem:[%s4131 + $0xd0] sm:$0xff] %v3933
        %4159 = vst [vmem:[%s4131 + $0xd8] sm:$0xff] %v3594
        %4160 = vst [vmem:[%s4131 + $0xe0] sm:$0xff] %v3596
        %4161 = vst [vmem:[%s4131 + $0xe8] sm:$0xff] %v3938
        %4162 = vst [vmem:[%s4131 + $0xf0] sm:$0xff] %v3600
        %4163 = vst [vmem:[%s4131 + $0xf8] sm:$0xff] %v3602
        %4164 = vst [vmem:[%s4131 + $0x100] sm:$0xff] %v3943
        %4165 = vst [vmem:[%s4131 + $0x108] sm:$0xff] %v3606
        %4166 = vst [vmem:[%s4131 + $0x110] sm:$0xff] %v3608
        %4167 = vst [vmem:[%s4131 + $0x118] sm:$0xff] %v3948
        %4168 = vst [vmem:[%s4131 + $0x120] sm:$0xff] %v3612
        %4169 = vst [vmem:[%s4131 + $0x128] sm:$0xff] %v3614
        %4170 = vst [vmem:[%s4131 + $0x130] sm:$0xff] %v3953
        %4171 = vst [vmem:[%s4131 + $0x138] sm:$0xff] %v3618
        %4172 = vst [vmem:[%s4131 + $0x140] sm:$0xff] %v3620
        %4173 = vst [vmem:[%s4131 + $0x148] sm:$0xff] %v3958
        %4174 = vst [vmem:[%s4131 + $0x150] sm:$0xff] %v3624
        %4175 = vst [vmem:[%s4131 + $0x158] sm:$0xff] %v3626
        %4176 = vst [vmem:[%s4131 + $0x160] sm:$0xff] %v3963
        %4177 = vst [vmem:[%s4131 + $0x168] sm:$0xff] %v3630
        %4178 = vst [vmem:[%s4131 + $0x170] sm:$0xff] %v3632
        %4179 = vst [vmem:[%s4131 + $0x178] sm:$0xff] %v3968
        %4180 = vst [vmem:[%s4131 + $0x180] sm:$0xff] %v3636
        %4181 = vst [vmem:[%s4131 + $0x188] sm:$0xff] %v3638
        %4182 = vst [vmem:[%s4131 + $0x190] sm:$0xff] %v3973
        %4183 = vst [vmem:[%s4131 + $0x198] sm:$0xff] %v3642
        %4184 = vst [vmem:[%s4131 + $0x1a0] sm:$0xff] %v3644
        %4185 = vst [vmem:[%s4131 + $0x1a8] sm:$0xff] %v3978
        %4186 = vst [vmem:[%s4131 + $0x1b0] sm:$0xff] %v3648
        %4187 = vst [vmem:[%s4131 + $0x1b8] sm:$0xff] %v3650
        %4188 = vst [vmem:[%s4131 + $0x1c0] sm:$0xff] %v3983
        %4189 = vst [vmem:[%s4131 + $0x1c8] sm:$0xff] %v3654
        %4190 = vst [vmem:[%s4131 + $0x1d0] sm:$0xff] %v3656
        %4191 = vst [vmem:[%s4131 + $0x1d8] sm:$0xff] %v3988
        %4192 = vst [vmem:[%s4131 + $0x1e0] sm:$0xff] %v3660
        %4193 = vst [vmem:[%s4131 + $0x1e8] sm:$0xff] %v3662
        %4194 = vst [vmem:[%s4131 + $0x1f0] sm:$0xff] %v3993
        %4195 = vst [vmem:[%s4131 + $0x1f8] sm:$0xff] %v3666
        %4196 = vst [vmem:[%s4131 + $0x200] sm:$0xff] %v3668
        %4197 = vst [vmem:[%s4131 + $0x208] sm:$0xff] %v3998
        %4198 = vst [vmem:[%s4131 + $0x210] sm:$0xff] %v3672
        %4199 = vst [vmem:[%s4131 + $0x218] sm:$0xff] %v3674
        %4200 = vst [vmem:[%s4131 + $0x220] sm:$0xff] %v4003
        %4201 = vst [vmem:[%s4131 + $0x228] sm:$0xff] %v3678
        %4202 = vst [vmem:[%s4131 + $0x230] sm:$0xff] %v3680
        %4203 = vst [vmem:[%s4131 + $0x238] sm:$0xff] %v4008
        %4204 = vst [vmem:[%s4131 + $0x240] sm:$0xff] %v3684
        %4205 = vst [vmem:[%s4131 + $0x248] sm:$0xff] %v3686
        %4206 = vst [vmem:[%s4131 + $0x250] sm:$0xff] %v4013
        %4207 = vst [vmem:[%s4131 + $0x258] sm:$0xff] %v3690
        %4208 = vst [vmem:[%s4131 + $0x260] sm:$0xff] %v3692
        %4209 = vst [vmem:[%s4131 + $0x268] sm:$0xff] %v4018
        %4210 = vst [vmem:[%s4131 + $0x270] sm:$0xff] %v3696
        %4211 = vst [vmem:[%s4131 + $0x278] sm:$0xff] %v3698
        %4212 = vst [vmem:[%s4131 + $0x280] sm:$0xff] %v4023
        %4213 = vst [vmem:[%s4131 + $0x288] sm:$0xff] %v3702
        %4214 = vst [vmem:[%s4131 + $0x290] sm:$0xff] %v3704
        %4215 = vst [vmem:[%s4131 + $0x298] sm:$0xff] %v4028
        %4216 = vst [vmem:[%s4131 + $0x2a0] sm:$0xff] %v3708
        %4217 = vst [vmem:[%s4131 + $0x2a8] sm:$0xff] %v3710
        %4218 = vst [vmem:[%s4131 + $0x2b0] sm:$0xff] %v4033
        %4219 = vst [vmem:[%s4131 + $0x2b8] sm:$0xff] %v3714
        %4220 = vst [vmem:[%s4131 + $0x2c0] sm:$0xff] %v3716
        %4221 = vst [vmem:[%s4131 + $0x2c8] sm:$0xff] %v4038
        %4222 = vst [vmem:[%s4131 + $0x2d0] sm:$0xff] %v3720
        %4223 = vst [vmem:[%s4131 + $0x2d8] sm:$0xff] %v3722
        %4224 = vst [vmem:[%s4131 + $0x2e0] sm:$0xff] %v4043
        %4225 = vst [vmem:[%s4131 + $0x2e8] sm:$0xff] %v3726
        %4226 = vst [vmem:[%s4131 + $0x2f0] sm:$0xff] %v3728
        %4227 = vst [vmem:[%s4131 + $0x2f8] sm:$0xff] %v4048
        %4228 = vst [vmem:[%s4131 + $0x300] sm:$0xff] %v3732
        %4229 = vst [vmem:[%s4131 + $0x308] sm:$0xff] %v3734
        %4230 = vst [vmem:[%s4131 + $0x310] sm:$0xff] %v4053
        %4231 = vst [vmem:[%s4131 + $0x318] sm:$0xff] %v3738
        %4232 = vst [vmem:[%s4131 + $0x320] sm:$0xff] %v3740
        %4233 = vst [vmem:[%s4131 + $0x328] sm:$0xff] %v4058
        %4234 = vst [vmem:[%s4131 + $0x330] sm:$0xff] %v3744
        %4235 = vst [vmem:[%s4131 + $0x338] sm:$0xff] %v3746
        %4236 = vst [vmem:[%s4131 + $0x340] sm:$0xff] %v4063
        %4237 = vst [vmem:[%s4131 + $0x348] sm:$0xff] %v3750
        %4238 = vst [vmem:[%s4131 + $0x350] sm:$0xff] %v3752
        %4239 = vst [vmem:[%s4131 + $0x358] sm:$0xff] %v4068
        %4240 = vst [vmem:[%s4131 + $0x360] sm:$0xff] %v3756
        %4241 = vst [vmem:[%s4131 + $0x368] sm:$0xff] %v3758
        %4242 = vst [vmem:[%s4131 + $0x370] sm:$0xff] %v4073
        %4243 = vst [vmem:[%s4131 + $0x378] sm:$0xff] %v3762
        %4244 = vst [vmem:[%s4131 + $0x380] sm:$0xff] %v3764
        %4245 = vst [vmem:[%s4131 + $0x388] sm:$0xff] %v4078
        %4246 = vst [vmem:[%s4131 + $0x390] sm:$0xff] %v3768
        %4247 = vst [vmem:[%s4131 + $0x398] sm:$0xff] %v3770
        %4248 = vst [vmem:[%s4131 + $0x3a0] sm:$0xff] %v4083
        %4249 = vst [vmem:[%s4131 + $0x3a8] sm:$0xff] %v3774
        %4250 = vst [vmem:[%s4131 + $0x3b0] sm:$0xff] %v3776
        %4251 = vst [vmem:[%s4131 + $0x3b8] sm:$0xff] %v4088
        %4252 = vst [vmem:[%s4131 + $0x3c0] sm:$0xff] %v3780
        %4253 = vst [vmem:[%s4131 + $0x3c8] sm:$0xff] %v3782
        %4254 = vst [vmem:[%s4131 + $0x3d0] sm:$0xff] %v4093
        %4255 = vst [vmem:[%s4131 + $0x3d8] sm:$0xff] %v3786
        %4256 = vst [vmem:[%s4131 + $0x3e0] sm:$0xff] %v3788
        %4257 = vst [vmem:[%s4131 + $0x3e8] sm:$0xff] %v4098
        %4258 = vst [vmem:[%s4131 + $0x3f0] sm:$0xff] %v3792
        %4259 = vst [vmem:[%s4131 + $0x3f8] sm:$0xff] %v3794
        %4260 = vst [vmem:[%s4131 + $0x400] sm:$0xff] %v4103
        %4261 = vst [vmem:[%s4131 + $0x408] sm:$0xff] %v3798
        %4262 = vst [vmem:[%s4131 + $0x410] sm:$0xff] %v3800
        %4263 = vst [vmem:[%s4131 + $0x418] sm:$0xff] %v4108
        %4264 = vst [vmem:[%s4131 + $0x420] sm:$0xff] %v3804
        %4265 = vst [vmem:[%s4131 + $0x428] sm:$0xff] %v3806
        %4266 = vst [vmem:[%s4131 + $0x430] sm:$0xff] %v4113
        %4267 = vst [vmem:[%s4131 + $0x438] sm:$0xff] %v3810
        %4268 = vst [vmem:[%s4131 + $0x440] sm:$0xff] %v3812
        %4269 = vst [vmem:[%s4131 + $0x448] sm:$0xff] %v4118
        %4270 = vst [vmem:[%s4131 + $0x450] sm:$0xff] %v3816
        %4271 = vst [vmem:[%s4131 + $0x458] sm:$0xff] %v3818
        %4272 = vst [vmem:[%s4131 + $0x460] sm:$0xff] %v4123
        %4273 = vst [vmem:[%s4131 + $0x468] sm:$0xff] %v3822
        %4274 = vst [vmem:[%s4131 + $0x470] sm:$0xff] %v3824
        %4275 = vst [vmem:[%s4131 + $0x478] sm:$0xff] %v4128
        %s4276 = sand.u32 %s97, 1
        %s4277 = scalar_lea.sflag [#allocation4], %s4276
        %s4278 = sand.u32 %s97, 1
        %s4279 = smul.addr %s4278, 4608
        %s4280 = scalar_lea.vmem [#allocation7], %s4279
        // Predicated region
        $region41: #{tpu_custom_call.1} parent=31 // pred_check
          %p4281 = pneg %p107
        $region42: #{tpu_custom_call.1} parent=31 // pred_check_branch
          %4283 = sbr.rel (%p4281) target = $region44
        $region43: #{tpu_custom_call.1} parent=31 // pred_region
          %s4284 = smul.u32 4, %s21
          %s4286 = ssub.s32 73728, 73728
          %4287 = vsyncadd %s4277, %s4286
          %s4288 = smul.addr %s4284, 144
          %s4289 = smul.addr %s4288, 128
          %s4290 = scalar_lea.hbm %s3, %s4289
          %s4291 = sshll.u32 %s4280, 4
          %s4292 = int_to_ptr.vmem [resolvable:$true] %s4291
          %4297 = dma.vmem_to_hbm [thread:$0]  %s4292, 73728, %s4290, %s4277, 384, 384, 24
        $region44: #{tpu_custom_call.1} parent=31 // pred_fallthru
          _
      $region32: #{tpu_custom_call.1} parent=5 // pred_fallthru
        _
      %p4298 = scmp.le.s32.totalorder 2, %s16
      // Predicated region
      $region45: #{tpu_custom_call.1} parent=5 // pred_check
        %p4299 = pneg %p4298
      $region46: #{tpu_custom_call.1} parent=5 // pred_check_branch
        %4301 = sbr.rel (%p4299) target = $region48
      $region47: #{tpu_custom_call.1} parent=5 // pred_region
        %s4302 = ssub.s32 %s16, 2
        // Predicated region
        $region49: #{tpu_custom_call.1} parent=47 // pred_check
          %p4303 = pneg %p113
        $region50: #{tpu_custom_call.1} parent=47 // pred_check_branch
          %4305 = sbr.rel (%p4303) target = $region52
        $region51: #{tpu_custom_call.1} parent=47 // pred_region
          %s4306 = sand.u32 %s98, 1
          %s4307 = scalar_lea.sflag [#allocation4], %s4306
          %s4308 = sand.u32 %s98, 1
          %s4309 = smul.addr %s4308, 4608
          %s4310 = scalar_lea.vmem [#allocation7], %s4309
          %4311 = dma.done %s4307, 73728
        $region52: #{tpu_custom_call.1} parent=47 // pred_fallthru
          _
      $region48: #{tpu_custom_call.1} parent=5 // pred_fallthru
        _
    $region6: #{tpu_custom_call.1} parent=1 // loop_footer
      %s20 = sadd.s32 1, %s16
    $region7: #{tpu_custom_call.1} parent=1 // loop_footer_branch
      %15 = sbr.rel target = $region3
    $region8: #{tpu_custom_call.1} parent=1 // loop_exit
      _
    %4312 = vsyncpa [#allocation3], 1
    %s4313 = scalar_lea.sflag [#allocation3], 1
    %4314 = vsyncpa %s4313, 1
    %4315 = vsyncpa [#allocation6], 1
    %4316 = vsyncpa [#allocation4], 1
    %s4317 = scalar_lea.sflag [#allocation4], 1
    %4318 = vsyncpa %s4317, 1

</llo_original>
